<compile_context>
chip_gen: v7x
topology: tpu7x:2x2x1
jax: 0.10.0
libtpu: 0.0.40
codegen_flags: <defaults>
</compile_context>

<pallas_src>
import math

import jax
import jax.numpy as jnp
from jax import lax
from jax.experimental import pallas as pl
from jax.experimental.pallas import tpu as pltpu

LEAKY_SLOPE = 0.02


# ------------------------------ Pallas kernel ------------------------------ #
def _make_kernel(w_wide, qe, p2, p3, p4):
    """Fused 5-layer kernel for the given static wide-flat row sizes."""
    offs = tuple(i * w_wide + j for i in range(3) for j in range(3))  # 3x3 tap offsets

    def kernel(xeo_ref, w1_ref, w2_ref, w3_ref, w4_ref, w5_ref,
               b1_ref, b2_ref, b3_ref, b4_ref, b5_ref, out_ref):
        B = xeo_ref.shape[0]

        def act(acc, b_ref):
            # f32 epilogue: bias + LeakyReLU(0.02).  (1/sigma is folded into W.)
            acc = acc + b_ref[...]
            return jnp.where(acc > 0, acc, LEAKY_SLOPE * acc)

        def conv_mm(taps, w_ref, b_ref, rows):
            # (B, rows, K) x (K, C_out) as one MXU matmul with M = B*rows.
            k = taps.shape[-1]
            y = act(jnp.dot(taps.reshape(B * rows, k), w_ref[...],
                            preferred_element_type=jnp.float32), b_ref)
            return y.reshape(B, rows, w_ref.shape[-1])

        # ---- layer 1 (C_in = 1, stride 2): merged even/odd parity planes ----
        y1 = conv_mm(xeo_ref[...], w1_ref, b1_ref, 2 * qe)   # (B, 2*QE, C1) f32
        y1 = y1.astype(jnp.bfloat16)

        # ---- layer 2 (stride 2): a1[2p + c] == (even if c even else odd)[p + c//2]
        #      even plane = y1[:, :QE], odd plane = y1[:, QE:]; K = 9*C1 ----
        def l2_slice(c):
            base = (c // 2) if c % 2 == 0 else (qe + c // 2)
            return y1[:, base:base + p2, :]
        taps2 = jnp.concatenate([l2_slice(c) for c in offs], axis=-1)  # (B,P2,9*C1)
        a2 = conv_mm(taps2, w2_ref, b2_ref, p2).astype(jnp.bfloat16)

        # ---- layers 3-5 (stride 1): one tap-stacked big-K matmul per layer ----
        def stride1(a_in, w_ref, b_ref, rows):
            taps = jnp.concatenate([a_in[:, c:c + rows, :] for c in offs],
                                   axis=-1)                    # (B, rows, 9*C_in)
            return conv_mm(taps, w_ref, b_ref, rows)

        a3 = stride1(a2, w3_ref, b3_ref, p3).astype(jnp.bfloat16)   # (B, P3, C3)
        a4 = stride1(a3, w4_ref, b4_ref, p4).astype(jnp.bfloat16)   # (B, P4, C4)
        a5 = stride1(a4, w5_ref, b5_ref, 1)                         # (B, 1, C5) f32

        out_ref[...] = a5

    return kernel


# -------------------------------- JAX glue --------------------------------- #
def l2normalize(v, eps=1e-12):
    return v / (jnp.linalg.norm(v) + eps)


def _sn_sigma(w, u, power_iterations=1):
    """sigma exactly as in the PyTorch SpectralNorm (one power iteration)."""
    height = w.shape[0]
    w_mat = w.reshape(height, -1)
    v = None
    for _ in range(power_iterations):
        v = l2normalize(w_mat.T @ u)
        u = l2normalize(w_mat @ v)
    return jnp.dot(u, w_mat @ v)


def _prep_weight(w, u):
    """(C_out, C_in, 3, 3) -> (9*C_in, C_out) bf16, tap-major (k = 3*i + j),
    with SpectralNorm's 1/sigma folded in (in f32, before the single bf16 cast)."""
    c_out, c_in = w.shape[0], w.shape[1]
    w = w / _sn_sigma(w, u)
    return jnp.transpose(w, (2, 3, 1, 0)).reshape(9 * c_in, c_out).astype(jnp.bfloat16)


def discriminator_x_forward(x, params):
    """x: (N, 1, H, W) NCHW -> (N, 128, 1, 1) NCHW."""
    N, c_in0, H, W0 = x.shape
    assert c_in0 == 1

    # conv geometry: 3x3 VALID convs, strides 2,2,1,1,1
    oh1, ow1 = (H - 3) // 2 + 1, (W0 - 3) // 2 + 1
    oh2, ow2 = (oh1 - 3) // 2 + 1, (ow1 - 3) // 2 + 1
    oh3, ow3 = oh2 - 2, ow2 - 2
    oh4, ow4 = oh3 - 2, ow3 - 2
    oh5, ow5 = oh4 - 2, ow4 - 2
    # TODO(synk): kernel is specialised to inputs whose spatial dims reduce to 1x1
    # after the five convs (the canonical 32x32 discriminator input).
    assert oh5 == 1 and ow5 == 1, (oh5, ow5)

    # wide-flat layout: one constant row stride W_wide for every layer
    w_wide = max(ow1, 2 * ow2 + 1)
    w_wide += w_wide % 2                       # even, so row parity == column parity
    wh = w_wide // 2
    c_max = 2 * w_wide + 2                     # largest 3x3 tap offset

    rup = lambda v, m: -(-v // m) * m
    # bf16 activations: 16-row granularity (one packed sublane tile)
    p4 = rup(max(1 + c_max, (oh4 - 1) * w_wide + ow4), 16)
    p3 = rup(max(p4 + c_max, (oh3 - 1) * w_wide + ow3), 16)
    p2 = rup(max(p3 + c_max, (oh2 - 1) * w_wide + ow2), 16)
    qe = rup(p2 + c_max // 2 + 1, math.lcm(wh, 8))   # rows per parity plane
    ae = qe // wh

    # ---- layer-1 tap matrices (C_in = 1): built in glue from the raw image ----
    pad_r = max(0, 2 * ae + 2 - H)
    pad_c = max(0, 4 * wh + 4 - W0)
    img = jnp.pad(x[:, 0], ((0, 0), (0, pad_r), (0, pad_c)))   # (N, H+pr, W+pc)

    def layer1_taps(col_phase):
        cols = []
        for i in range(3):
            for j in range(3):
                v = img[:, i:i + 2 * ae:2,
                        col_phase + j:col_phase + j + 4 * wh:4]  # (N, AE, Wh)
                cols.append(v.reshape(N, qe))
        return jnp.stack(cols, axis=-1)                           # (N, QE, 9)

    # merged even (phase 0) / odd (phase 2) planes along the row axis
    xeo = jnp.concatenate([layer1_taps(0), layer1_taps(2)],
                          axis=1).astype(jnp.bfloat16)            # (N, 2*QE, 9)

    # ---- weights / biases with spectral-norm 1/sigma folded in (f32) ----
    (w1, b1, u1, _), (w2, b2, u2, _), (w3, b3, u3, _), (w4, b4, u4, _), (w5, b5, u5, _) = (
        params["c1"], params["c2"], params["c3"], params["c4"], params["c5"])

    c1o, c2o, c3o, c4o, c5o = (w.shape[0] for w in (w1, w2, w3, w4, w5))

    w1m = _prep_weight(w1, u1)   # (9,    C1)
    w2m = _prep_weight(w2, u2)   # (288,  C2)
    w3m = _prep_weight(w3, u3)   # (576,  C3)
    w4m = _prep_weight(w4, u4)   # (1152, C4)
    w5m = _prep_weight(w5, u5)   # (1152, C5)

    b1r, b2r, b3r, b4r, b5r = (b.reshape(1, -1).astype(jnp.float32)
                               for b in (b1, b2, b3, b4, b5))

    # ---- batch several images per grid step, keep >= 2 grid steps (v7x 2 TCs) ----
    B = max(1, min(8, -(-N // 2)))
    n_steps = -(-N // B)
    n_pad = n_steps * B
    if n_pad != N:
        xeo = jnp.pad(xeo, ((0, n_pad - N), (0, 0), (0, 0)))

    flops_per_img = 2 * (2 * qe * 9 * c1o + p2 * 9 * c1o * c2o + p3 * 9 * c2o * c3o
                         + p4 * 9 * c3o * c4o + 9 * c4o * c5o)
    bytes_weights = 2 * (9 * c1o + 9 * c1o * c2o + 9 * c2o * c3o
                         + 9 * c3o * c4o + 9 * c4o * c5o)
    bytes_io = n_pad * (2 * qe * 9 * 2 + c5o * 4)
    cost = pl.CostEstimate(flops=flops_per_img * n_pad, transcendentals=0,
                           bytes_accessed=bytes_weights + bytes_io)

    kernel = _make_kernel(w_wide, qe, p2, p3, p4)
    const2 = lambda s: pl.BlockSpec(s, lambda n: (0, 0))

    out = pl.pallas_call(
        kernel,
        out_shape=jax.ShapeDtypeStruct((n_pad, 1, c5o), jnp.float32),
        grid=(n_steps,),
        in_specs=[
            pl.BlockSpec((B, 2 * qe, 9), lambda n: (n, 0, 0)),   # merged layer-1 taps
            const2((9, c1o)),                                    # w1
            const2((9 * c1o, c2o)),                              # w2 (tap-stacked)
            const2((9 * c2o, c3o)),                              # w3
            const2((9 * c3o, c4o)),                              # w4
            const2((9 * c4o, c5o)),                              # w5
            const2((1, c1o)), const2((1, c2o)), const2((1, c3o)),
            const2((1, c4o)), const2((1, c5o)),
        ],
        out_specs=pl.BlockSpec((B, 1, c5o), lambda n: (n, 0, 0)),
        compiler_params=pltpu.CompilerParams(dimension_semantics=("parallel",)),
        cost_estimate=cost,
    )(xeo, w1m, w2m, w3m, w4m, w5m, b1r, b2r, b3r, b4r, b5r)

    out = out[:N]
    # TODO(synk): nn.Dropout2d(0.2) is identity here (eval mode).
    return jnp.transpose(out, (0, 2, 1))[:, :, :, None]   # (N, 128, 1, 1) NCHW


# ---------------------------- parameter creation ---------------------------- #
def make_params(key, zd=128, ch=1):
    specs = {
        "c1": (zd // 4, ch),
        "c2": (zd // 2, zd // 4),
        "c3": (zd, zd // 2),
        "c4": (zd, zd),
        "c5": (zd, zd),
    }
    params = {}
    for name, (c_out, c_in) in specs.items():
        key, kw_, kb_, ku_, kv_ = jax.random.split(key, 5)
        fan_in = c_in * 9
        bound = 1.0 / jnp.sqrt(fan_in)
        w = jax.random.uniform(kw_, (c_out, c_in, 3, 3), jnp.float32, -bound, bound)
        b = jax.random.uniform(kb_, (c_out,), jnp.float32, -bound, bound)
        u = l2normalize(jax.random.normal(ku_, (c_out,), jnp.float32))
        v = l2normalize(jax.random.normal(kv_, (fan_in,), jnp.float32))
        params[name] = (w, b, u, v)
    return params


# -------------------------------- reference --------------------------------- #
def _ref_forward(x, params):
    """Pure-JAX f32 reference (lax.conv) for correctness checking."""
    def conv(x, w, b, u, _v, stride):
        w_sn = w / _sn_sigma(w, u)
        y = lax.conv_general_dilated(
            x, w_sn, window_strides=(stride, stride), padding="VALID",
            dimension_numbers=("NCHW", "OIHW", "NCHW"))
        y = y + b.reshape(1, -1, 1, 1)
        return jnp.where(y > 0, y, LEAKY_SLOPE * y)

    x = conv(x, *params["c1"], stride=2)
    x = conv(x, *params["c2"], stride=2)
    x = conv(x, *params["c3"], stride=1)
    x = conv(x, *params["c4"], stride=1)
    x = conv(x, *params["c5"], stride=1)
    return x


if __name__ == "__main__":
    key = jax.random.PRNGKey(0)
    key, kx = jax.random.split(key)

    zd, ch = 128, 1
    # 32x32 input -> 15 -> 7 -> 5 -> 3 -> 1 spatial; output (2, 128, 1, 1).
    x = jax.random.normal(kx, (2, ch, 32, 32), jnp.float32)
    params = make_params(key, zd=zd, ch=ch)

    fwd = jax.jit(discriminator_x_forward)
    out = jax.block_until_ready(fwd(x, params))

    ref = jax.block_until_ready(_ref_forward(x, params))
    assert out.shape == (2, zd, 1, 1), out.shape
    # bf16 MXU operands with f32 accumulation vs. a pure-f32 reference -> looser tol.
    assert jnp.allclose(out, ref, atol=5e-2, rtol=5e-2), float(jnp.max(jnp.abs(out - ref)))

    print("KERNEL_OK")
</pallas_src>

<mosaic_0001>
module attributes {stable_mosaic.version = 11 : i64} {
  func.func @kernel(%arg0: i32, %arg1: memref<1x336x9xbf16, #tpu.memory_space<vmem>>, %arg2: memref<9x32xbf16, #tpu.memory_space<vmem>>, %arg3: memref<288x64xbf16, #tpu.memory_space<vmem>>, %arg4: memref<576x128xbf16, #tpu.memory_space<vmem>>, %arg5: memref<1152x128xbf16, #tpu.memory_space<vmem>>, %arg6: memref<1152x128xbf16, #tpu.memory_space<vmem>>, %arg7: memref<1x32xf32, #tpu.memory_space<vmem>>, %arg8: memref<1x64xf32, #tpu.memory_space<vmem>>, %arg9: memref<1x128xf32, #tpu.memory_space<vmem>>, %arg10: memref<1x128xf32, #tpu.memory_space<vmem>>, %arg11: memref<1x128xf32, #tpu.memory_space<vmem>>, %arg12: memref<1x1x128xf32, #tpu.memory_space<vmem>>) attributes {dimension_semantics = [#tpu.dimension_semantics<parallel>], iteration_bounds = array<i64: 2>, scalar_prefetch = 0 : i64, scratch_operands = 0 : i64, tpu.core_type = #tpu.core_type<tc>, window_params = [{transform_indices = @transform_0, window_bounds = array<i64: 1, 336, 9>}, {pipeline_mode = #tpu.pipeline_mode<synchronous>, transform_indices = @transform_1, window_bounds = array<i64: 9, 32>}, {pipeline_mode = #tpu.pipeline_mode<synchronous>, transform_indices = @transform_2, window_bounds = array<i64: 288, 64>}, {pipeline_mode = #tpu.pipeline_mode<synchronous>, transform_indices = @transform_3, window_bounds = array<i64: 576, 128>}, {pipeline_mode = #tpu.pipeline_mode<synchronous>, transform_indices = @transform_4, window_bounds = array<i64: 1152, 128>}, {pipeline_mode = #tpu.pipeline_mode<synchronous>, transform_indices = @transform_5, window_bounds = array<i64: 1152, 128>}, {pipeline_mode = #tpu.pipeline_mode<synchronous>, transform_indices = @transform_6, window_bounds = array<i64: 1, 32>}, {pipeline_mode = #tpu.pipeline_mode<synchronous>, transform_indices = @transform_7, window_bounds = array<i64: 1, 64>}, {pipeline_mode = #tpu.pipeline_mode<synchronous>, transform_indices = @transform_8, window_bounds = array<i64: 1, 128>}, {pipeline_mode = #tpu.pipeline_mode<synchronous>, transform_indices = @transform_9, window_bounds = array<i64: 1, 128>}, {pipeline_mode = #tpu.pipeline_mode<synchronous>, transform_indices = @transform_10, window_bounds = array<i64: 1, 128>}, {transform_indices = @transform_11, window_bounds = array<i64: 1, 1, 128>}]} {
    %c0 = arith.constant 0 : index
    %c0_0 = arith.constant 0 : index
    %c0_1 = arith.constant 0 : index
    %0 = vector.load %arg1[%c0, %c0_0, %c0_1] : memref<1x336x9xbf16, #tpu.memory_space<vmem>>, vector<1x336x9xbf16>
    %1 = vector.shape_cast %0 : vector<1x336x9xbf16> to vector<336x9xbf16>
    %c0_2 = arith.constant 0 : index
    %c0_3 = arith.constant 0 : index
    %2 = vector.load %arg2[%c0_2, %c0_3] : memref<9x32xbf16, #tpu.memory_space<vmem>>, vector<9x32xbf16>
    %cst = arith.constant dense<0.000000e+00> : vector<336x32xf32>
    %3 = tpu.matmul %1, %2, %cst {dimension_numbers = #tpu.dot_dimension_numbers<[1], [0], [0], [1], [0, 0, 1, 1], [], []>} : vector<336x9xbf16>, vector<9x32xbf16>, vector<336x32xf32> -> vector<336x32xf32>
    %c0_4 = arith.constant 0 : index
    %c0_5 = arith.constant 0 : index
    %4 = vector.load %arg7[%c0_4, %c0_5] : memref<1x32xf32, #tpu.memory_space<vmem>>, vector<1x32xf32>
    %5 = vector.broadcast %4 : vector<1x32xf32> to vector<336x32xf32>
    %6 = arith.addf %3, %5 : vector<336x32xf32>
    %cst_6 = arith.constant 0.000000e+00 : f32
    %7 = vector.broadcast %cst_6 : f32 to vector<336x32xf32>
    %8 = arith.cmpf ogt, %6, %7 : vector<336x32xf32>
    %cst_7 = arith.constant 2.000000e-02 : f32
    %9 = vector.broadcast %cst_7 : f32 to vector<336x32xf32>
    %10 = arith.mulf %9, %6 : vector<336x32xf32>
    %11 = arith.select %8, %6, %10 : vector<336x32xi1>, vector<336x32xf32>
    %12 = vector.shape_cast %11 : vector<336x32xf32> to vector<1x336x32xf32>
    %13 = arith.truncf %12 : vector<1x336x32xf32> to vector<1x336x32xbf16>
    %14 = vector.extract_strided_slice %13 {offsets = [0, 0, 0], sizes = [1, 144, 32], strides = [1, 1, 1]} : vector<1x336x32xbf16> to vector<1x144x32xbf16>
    %15 = vector.extract_strided_slice %13 {offsets = [0, 168, 0], sizes = [1, 144, 32], strides = [1, 1, 1]} : vector<1x336x32xbf16> to vector<1x144x32xbf16>
    %16 = vector.extract_strided_slice %13 {offsets = [0, 1, 0], sizes = [1, 144, 32], strides = [1, 1, 1]} : vector<1x336x32xbf16> to vector<1x144x32xbf16>
    %17 = vector.extract_strided_slice %13 {offsets = [0, 8, 0], sizes = [1, 144, 32], strides = [1, 1, 1]} : vector<1x336x32xbf16> to vector<1x144x32xbf16>
    %18 = vector.extract_strided_slice %13 {offsets = [0, 176, 0], sizes = [1, 144, 32], strides = [1, 1, 1]} : vector<1x336x32xbf16> to vector<1x144x32xbf16>
    %19 = vector.extract_strided_slice %13 {offsets = [0, 9, 0], sizes = [1, 144, 32], strides = [1, 1, 1]} : vector<1x336x32xbf16> to vector<1x144x32xbf16>
    %20 = vector.extract_strided_slice %13 {offsets = [0, 16, 0], sizes = [1, 144, 32], strides = [1, 1, 1]} : vector<1x336x32xbf16> to vector<1x144x32xbf16>
    %21 = vector.extract_strided_slice %13 {offsets = [0, 184, 0], sizes = [1, 144, 32], strides = [1, 1, 1]} : vector<1x336x32xbf16> to vector<1x144x32xbf16>
    %22 = vector.extract_strided_slice %13 {offsets = [0, 17, 0], sizes = [1, 144, 32], strides = [1, 1, 1]} : vector<1x336x32xbf16> to vector<1x144x32xbf16>
    %23 = tpu.concatenate %14, %15, %16, %17, %18, %19, %20, %21, %22 in 2 : vector<1x144x32xbf16>, vector<1x144x32xbf16>, vector<1x144x32xbf16>, vector<1x144x32xbf16>, vector<1x144x32xbf16>, vector<1x144x32xbf16>, vector<1x144x32xbf16>, vector<1x144x32xbf16>, vector<1x144x32xbf16> -> vector<1x144x288xbf16>
    %24 = vector.shape_cast %23 : vector<1x144x288xbf16> to vector<144x288xbf16>
    %c0_8 = arith.constant 0 : index
    %c0_9 = arith.constant 0 : index
    %25 = vector.load %arg3[%c0_8, %c0_9] : memref<288x64xbf16, #tpu.memory_space<vmem>>, vector<288x64xbf16>
    %cst_10 = arith.constant dense<0.000000e+00> : vector<144x64xf32>
    %26 = tpu.matmul %24, %25, %cst_10 {dimension_numbers = #tpu.dot_dimension_numbers<[1], [0], [0], [1], [0, 0, 1, 1], [], []>} : vector<144x288xbf16>, vector<288x64xbf16>, vector<144x64xf32> -> vector<144x64xf32>
    %c0_11 = arith.constant 0 : index
    %c0_12 = arith.constant 0 : index
    %27 = vector.load %arg8[%c0_11, %c0_12] : memref<1x64xf32, #tpu.memory_space<vmem>>, vector<1x64xf32>
    %28 = vector.broadcast %27 : vector<1x64xf32> to vector<144x64xf32>
    %29 = arith.addf %26, %28 : vector<144x64xf32>
    %cst_13 = arith.constant 0.000000e+00 : f32
    %30 = vector.broadcast %cst_13 : f32 to vector<144x64xf32>
    %31 = arith.cmpf ogt, %29, %30 : vector<144x64xf32>
    %cst_14 = arith.constant 2.000000e-02 : f32
    %32 = vector.broadcast %cst_14 : f32 to vector<144x64xf32>
    %33 = arith.mulf %32, %29 : vector<144x64xf32>
    %34 = arith.select %31, %29, %33 : vector<144x64xi1>, vector<144x64xf32>
    %35 = vector.shape_cast %34 : vector<144x64xf32> to vector<1x144x64xf32>
    %36 = arith.truncf %35 : vector<1x144x64xf32> to vector<1x144x64xbf16>
    %37 = vector.extract_strided_slice %36 {offsets = [0, 0, 0], sizes = [1, 96, 64], strides = [1, 1, 1]} : vector<1x144x64xbf16> to vector<1x96x64xbf16>
    %38 = vector.extract_strided_slice %36 {offsets = [0, 1, 0], sizes = [1, 96, 64], strides = [1, 1, 1]} : vector<1x144x64xbf16> to vector<1x96x64xbf16>
    %39 = vector.extract_strided_slice %36 {offsets = [0, 2, 0], sizes = [1, 96, 64], strides = [1, 1, 1]} : vector<1x144x64xbf16> to vector<1x96x64xbf16>
    %40 = vector.extract_strided_slice %36 {offsets = [0, 16, 0], sizes = [1, 96, 64], strides = [1, 1, 1]} : vector<1x144x64xbf16> to vector<1x96x64xbf16>
    %41 = vector.extract_strided_slice %36 {offsets = [0, 17, 0], sizes = [1, 96, 64], strides = [1, 1, 1]} : vector<1x144x64xbf16> to vector<1x96x64xbf16>
    %42 = vector.extract_strided_slice %36 {offsets = [0, 18, 0], sizes = [1, 96, 64], strides = [1, 1, 1]} : vector<1x144x64xbf16> to vector<1x96x64xbf16>
    %43 = vector.extract_strided_slice %36 {offsets = [0, 32, 0], sizes = [1, 96, 64], strides = [1, 1, 1]} : vector<1x144x64xbf16> to vector<1x96x64xbf16>
    %44 = vector.extract_strided_slice %36 {offsets = [0, 33, 0], sizes = [1, 96, 64], strides = [1, 1, 1]} : vector<1x144x64xbf16> to vector<1x96x64xbf16>
    %45 = vector.extract_strided_slice %36 {offsets = [0, 34, 0], sizes = [1, 96, 64], strides = [1, 1, 1]} : vector<1x144x64xbf16> to vector<1x96x64xbf16>
    %46 = tpu.concatenate %37, %38, %39, %40, %41, %42, %43, %44, %45 in 2 : vector<1x96x64xbf16>, vector<1x96x64xbf16>, vector<1x96x64xbf16>, vector<1x96x64xbf16>, vector<1x96x64xbf16>, vector<1x96x64xbf16>, vector<1x96x64xbf16>, vector<1x96x64xbf16>, vector<1x96x64xbf16> -> vector<1x96x576xbf16>
    %47 = vector.shape_cast %46 : vector<1x96x576xbf16> to vector<96x576xbf16>
    %c0_15 = arith.constant 0 : index
    %c0_16 = arith.constant 0 : index
    %48 = vector.load %arg4[%c0_15, %c0_16] : memref<576x128xbf16, #tpu.memory_space<vmem>>, vector<576x128xbf16>
    %cst_17 = arith.constant dense<0.000000e+00> : vector<96x128xf32>
    %49 = tpu.matmul %47, %48, %cst_17 {dimension_numbers = #tpu.dot_dimension_numbers<[1], [0], [0], [1], [0, 0, 1, 1], [], []>} : vector<96x576xbf16>, vector<576x128xbf16>, vector<96x128xf32> -> vector<96x128xf32>
    %c0_18 = arith.constant 0 : index
    %c0_19 = arith.constant 0 : index
    %50 = vector.load %arg9[%c0_18, %c0_19] : memref<1x128xf32, #tpu.memory_space<vmem>>, vector<1x128xf32>
    %51 = vector.broadcast %50 : vector<1x128xf32> to vector<96x128xf32>
    %52 = arith.addf %49, %51 : vector<96x128xf32>
    %cst_20 = arith.constant 0.000000e+00 : f32
    %53 = vector.broadcast %cst_20 : f32 to vector<96x128xf32>
    %54 = arith.cmpf ogt, %52, %53 : vector<96x128xf32>
    %cst_21 = arith.constant 2.000000e-02 : f32
    %55 = vector.broadcast %cst_21 : f32 to vector<96x128xf32>
    %56 = arith.mulf %55, %52 : vector<96x128xf32>
    %57 = arith.select %54, %52, %56 : vector<96x128xi1>, vector<96x128xf32>
    %58 = vector.shape_cast %57 : vector<96x128xf32> to vector<1x96x128xf32>
    %59 = arith.truncf %58 : vector<1x96x128xf32> to vector<1x96x128xbf16>
    %60 = vector.extract_strided_slice %59 {offsets = [0, 0, 0], sizes = [1, 48, 128], strides = [1, 1, 1]} : vector<1x96x128xbf16> to vector<1x48x128xbf16>
    %61 = vector.extract_strided_slice %59 {offsets = [0, 1, 0], sizes = [1, 48, 128], strides = [1, 1, 1]} : vector<1x96x128xbf16> to vector<1x48x128xbf16>
    %62 = vector.extract_strided_slice %59 {offsets = [0, 2, 0], sizes = [1, 48, 128], strides = [1, 1, 1]} : vector<1x96x128xbf16> to vector<1x48x128xbf16>
    %63 = vector.extract_strided_slice %59 {offsets = [0, 16, 0], sizes = [1, 48, 128], strides = [1, 1, 1]} : vector<1x96x128xbf16> to vector<1x48x128xbf16>
    %64 = vector.extract_strided_slice %59 {offsets = [0, 17, 0], sizes = [1, 48, 128], strides = [1, 1, 1]} : vector<1x96x128xbf16> to vector<1x48x128xbf16>
    %65 = vector.extract_strided_slice %59 {offsets = [0, 18, 0], sizes = [1, 48, 128], strides = [1, 1, 1]} : vector<1x96x128xbf16> to vector<1x48x128xbf16>
    %66 = vector.extract_strided_slice %59 {offsets = [0, 32, 0], sizes = [1, 48, 128], strides = [1, 1, 1]} : vector<1x96x128xbf16> to vector<1x48x128xbf16>
    %67 = vector.extract_strided_slice %59 {offsets = [0, 33, 0], sizes = [1, 48, 128], strides = [1, 1, 1]} : vector<1x96x128xbf16> to vector<1x48x128xbf16>
    %68 = vector.extract_strided_slice %59 {offsets = [0, 34, 0], sizes = [1, 48, 128], strides = [1, 1, 1]} : vector<1x96x128xbf16> to vector<1x48x128xbf16>
    %69 = tpu.concatenate %60, %61, %62, %63, %64, %65, %66, %67, %68 in 2 : vector<1x48x128xbf16>, vector<1x48x128xbf16>, vector<1x48x128xbf16>, vector<1x48x128xbf16>, vector<1x48x128xbf16>, vector<1x48x128xbf16>, vector<1x48x128xbf16>, vector<1x48x128xbf16>, vector<1x48x128xbf16> -> vector<1x48x1152xbf16>
    %70 = vector.shape_cast %69 : vector<1x48x1152xbf16> to vector<48x1152xbf16>
    %c0_22 = arith.constant 0 : index
    %c0_23 = arith.constant 0 : index
    %71 = vector.load %arg5[%c0_22, %c0_23] : memref<1152x128xbf16, #tpu.memory_space<vmem>>, vector<1152x128xbf16>
    %cst_24 = arith.constant dense<0.000000e+00> : vector<48x128xf32>
    %72 = tpu.matmul %70, %71, %cst_24 {dimension_numbers = #tpu.dot_dimension_numbers<[1], [0], [0], [1], [0, 0, 1, 1], [], []>} : vector<48x1152xbf16>, vector<1152x128xbf16>, vector<48x128xf32> -> vector<48x128xf32>
    %c0_25 = arith.constant 0 : index
    %c0_26 = arith.constant 0 : index
    %73 = vector.load %arg10[%c0_25, %c0_26] : memref<1x128xf32, #tpu.memory_space<vmem>>, vector<1x128xf32>
    %74 = vector.broadcast %73 : vector<1x128xf32> to vector<48x128xf32>
    %75 = arith.addf %72, %74 : vector<48x128xf32>
    %cst_27 = arith.constant 0.000000e+00 : f32
    %76 = vector.broadcast %cst_27 : f32 to vector<48x128xf32>
    %77 = arith.cmpf ogt, %75, %76 : vector<48x128xf32>
    %cst_28 = arith.constant 2.000000e-02 : f32
    %78 = vector.broadcast %cst_28 : f32 to vector<48x128xf32>
    %79 = arith.mulf %78, %75 : vector<48x128xf32>
    %80 = arith.select %77, %75, %79 : vector<48x128xi1>, vector<48x128xf32>
    %81 = vector.shape_cast %80 : vector<48x128xf32> to vector<1x48x128xf32>
    %82 = arith.truncf %81 : vector<1x48x128xf32> to vector<1x48x128xbf16>
    %83 = vector.extract_strided_slice %82 {offsets = [0, 0, 0], sizes = [1, 1, 128], strides = [1, 1, 1]} : vector<1x48x128xbf16> to vector<1x1x128xbf16>
    %84 = vector.extract_strided_slice %82 {offsets = [0, 1, 0], sizes = [1, 1, 128], strides = [1, 1, 1]} : vector<1x48x128xbf16> to vector<1x1x128xbf16>
    %85 = vector.extract_strided_slice %82 {offsets = [0, 2, 0], sizes = [1, 1, 128], strides = [1, 1, 1]} : vector<1x48x128xbf16> to vector<1x1x128xbf16>
    %86 = vector.extract_strided_slice %82 {offsets = [0, 16, 0], sizes = [1, 1, 128], strides = [1, 1, 1]} : vector<1x48x128xbf16> to vector<1x1x128xbf16>
    %87 = vector.extract_strided_slice %82 {offsets = [0, 17, 0], sizes = [1, 1, 128], strides = [1, 1, 1]} : vector<1x48x128xbf16> to vector<1x1x128xbf16>
    %88 = vector.extract_strided_slice %82 {offsets = [0, 18, 0], sizes = [1, 1, 128], strides = [1, 1, 1]} : vector<1x48x128xbf16> to vector<1x1x128xbf16>
    %89 = vector.extract_strided_slice %82 {offsets = [0, 32, 0], sizes = [1, 1, 128], strides = [1, 1, 1]} : vector<1x48x128xbf16> to vector<1x1x128xbf16>
    %90 = vector.extract_strided_slice %82 {offsets = [0, 33, 0], sizes = [1, 1, 128], strides = [1, 1, 1]} : vector<1x48x128xbf16> to vector<1x1x128xbf16>
    %91 = vector.extract_strided_slice %82 {offsets = [0, 34, 0], sizes = [1, 1, 128], strides = [1, 1, 1]} : vector<1x48x128xbf16> to vector<1x1x128xbf16>
    %92 = tpu.concatenate %83, %84, %85, %86, %87, %88, %89, %90, %91 in 2 : vector<1x1x128xbf16>, vector<1x1x128xbf16>, vector<1x1x128xbf16>, vector<1x1x128xbf16>, vector<1x1x128xbf16>, vector<1x1x128xbf16>, vector<1x1x128xbf16>, vector<1x1x128xbf16>, vector<1x1x128xbf16> -> vector<1x1x1152xbf16>
    %93 = vector.shape_cast %92 : vector<1x1x1152xbf16> to vector<1x1152xbf16>
    %c0_29 = arith.constant 0 : index
    %c0_30 = arith.constant 0 : index
    %94 = vector.load %arg6[%c0_29, %c0_30] : memref<1152x128xbf16, #tpu.memory_space<vmem>>, vector<1152x128xbf16>
    %cst_31 = arith.constant dense<0.000000e+00> : vector<1x128xf32>
    %95 = tpu.matmul %93, %94, %cst_31 {dimension_numbers = #tpu.dot_dimension_numbers<[1], [0], [0], [1], [0, 0, 1, 1], [], []>} : vector<1x1152xbf16>, vector<1152x128xbf16>, vector<1x128xf32> -> vector<1x128xf32>
    %c0_32 = arith.constant 0 : index
    %c0_33 = arith.constant 0 : index
    %96 = vector.load %arg11[%c0_32, %c0_33] : memref<1x128xf32, #tpu.memory_space<vmem>>, vector<1x128xf32>
    %97 = arith.addf %95, %96 : vector<1x128xf32>
    %cst_34 = arith.constant 0.000000e+00 : f32
    %98 = vector.broadcast %cst_34 : f32 to vector<1x128xf32>
    %99 = arith.cmpf ogt, %97, %98 : vector<1x128xf32>
    %cst_35 = arith.constant 2.000000e-02 : f32
    %100 = vector.broadcast %cst_35 : f32 to vector<1x128xf32>
    %101 = arith.mulf %100, %97 : vector<1x128xf32>
    %102 = arith.select %99, %97, %101 : vector<1x128xi1>, vector<1x128xf32>
    %103 = vector.shape_cast %102 : vector<1x128xf32> to vector<1x1x128xf32>
    %c0_36 = arith.constant 0 : index
    %c0_37 = arith.constant 0 : index
    %c0_38 = arith.constant 0 : index
    %104 = vector.load %arg12[%c0_36, %c0_37, %c0_38] : memref<1x1x128xf32, #tpu.memory_space<vmem>>, vector<1x1x128xf32>
    tpu.vector_store %arg12[%c0_36, %c0_37, %c0_38], %103 {strides = array<i32>} : memref<1x1x128xf32, #tpu.memory_space<vmem>>, vector<1x1x128xf32>,
    return
  }
  func.func @transform_0(%arg0: i32) -> (i32, i32, i32) {
    %c0_i32 = arith.constant 0 : i32
    %c0_i32_0 = arith.constant 0 : i32
    %c0_i32_1 = arith.constant 0 : i32
    return %arg0, %c0_i32, %c0_i32_0 : i32, i32, i32
  }
  func.func @transform_1(%arg0: i32) -> (i32, i32) {
    %c0_i32 = arith.constant 0 : i32
    %c0_i32_0 = arith.constant 0 : i32
    %c0_i32_1 = arith.constant 0 : i32
    return %c0_i32, %c0_i32_0 : i32, i32
  }
  func.func @transform_2(%arg0: i32) -> (i32, i32) {
    %c0_i32 = arith.constant 0 : i32
    %c0_i32_0 = arith.constant 0 : i32
    %c0_i32_1 = arith.constant 0 : i32
    return %c0_i32, %c0_i32_0 : i32, i32
  }
  func.func @transform_3(%arg0: i32) -> (i32, i32) {
    %c0_i32 = arith.constant 0 : i32
    %c0_i32_0 = arith.constant 0 : i32
    %c0_i32_1 = arith.constant 0 : i32
    return %c0_i32, %c0_i32_0 : i32, i32
  }
  func.func @transform_4(%arg0: i32) -> (i32, i32) {
    %c0_i32 = arith.constant 0 : i32
    %c0_i32_0 = arith.constant 0 : i32
    %c0_i32_1 = arith.constant 0 : i32
    return %c0_i32, %c0_i32_0 : i32, i32
  }
  func.func @transform_5(%arg0: i32) -> (i32, i32) {
    %c0_i32 = arith.constant 0 : i32
    %c0_i32_0 = arith.constant 0 : i32
    %c0_i32_1 = arith.constant 0 : i32
    return %c0_i32, %c0_i32_0 : i32, i32
  }
  func.func @transform_6(%arg0: i32) -> (i32, i32) {
    %c0_i32 = arith.constant 0 : i32
    %c0_i32_0 = arith.constant 0 : i32
    %c0_i32_1 = arith.constant 0 : i32
    return %c0_i32, %c0_i32_0 : i32, i32
  }
  func.func @transform_7(%arg0: i32) -> (i32, i32) {
    %c0_i32 = arith.constant 0 : i32
    %c0_i32_0 = arith.constant 0 : i32
    %c0_i32_1 = arith.constant 0 : i32
    return %c0_i32, %c0_i32_0 : i32, i32
  }
  func.func @transform_8(%arg0: i32) -> (i32, i32) {
    %c0_i32 = arith.constant 0 : i32
    %c0_i32_0 = arith.constant 0 : i32
    %c0_i32_1 = arith.constant 0 : i32
    return %c0_i32, %c0_i32_0 : i32, i32
  }
  func.func @transform_9(%arg0: i32) -> (i32, i32) {
    %c0_i32 = arith.constant 0 : i32
    %c0_i32_0 = arith.constant 0 : i32
    %c0_i32_1 = arith.constant 0 : i32
    return %c0_i32, %c0_i32_0 : i32, i32
  }
  func.func @transform_10(%arg0: i32) -> (i32, i32) {
    %c0_i32 = arith.constant 0 : i32
    %c0_i32_0 = arith.constant 0 : i32
    %c0_i32_1 = arith.constant 0 : i32
    return %c0_i32, %c0_i32_0 : i32, i32
  }
  func.func @transform_11(%arg0: i32) -> (i32, i32, i32) {
    %c0_i32 = arith.constant 0 : i32
    %c0_i32_0 = arith.constant 0 : i32
    %c0_i32_1 = arith.constant 0 : i32
    return %arg0, %c0_i32, %c0_i32_0 : i32, i32, i32
  }
}

</mosaic_0001>

<llo_original>
// kernel: discriminator_x_forward.1
$region0: #{discriminator_x_forward.1}
  #allocation0 [shape = 'u32[]', space=smem, size = 0x4, offset = 0x4, fixed_abs, tag = 'smem constant byte address 0x4 - core index']
  #allocation1 [shape = 'u32[144,128]{1,0:T(1,128)}', space=vmem, size = 0x12000, scoped, tag = 'internal scratch']
  %s0 = inlined_call_operand.vmem [shape: bf16[2,336,9], index: 0, kind: input, shape index: {}]
  %s1 = inlined_call_operand.vmem [shape: bf16[9,32], index: 1, kind: input, shape index: {}]
  %s2 = inlined_call_operand.vmem [shape: bf16[288,64], index: 2, kind: input, shape index: {}]
  %s3 = inlined_call_operand.vmem [shape: bf16[576,128], index: 3, kind: input, shape index: {}]
  %s4 = inlined_call_operand.vmem [shape: bf16[1152,128], index: 4, kind: input, shape index: {}]
  %s5 = inlined_call_operand.vmem [shape: bf16[1152,128], index: 5, kind: input, shape index: {}]
  %s6 = inlined_call_operand.vmem [shape: f32[1,32], index: 6, kind: input, shape index: {}]
  %s7 = inlined_call_operand.vmem [shape: f32[1,64], index: 7, kind: input, shape index: {}]
  %s8 = inlined_call_operand.vmem [shape: f32[1,128], index: 8, kind: input, shape index: {}]
  %s9 = inlined_call_operand.vmem [shape: f32[1,128], index: 9, kind: input, shape index: {}]
  %s10 = inlined_call_operand.vmem [shape: f32[1,128], index: 10, kind: input, shape index: {}]
  %s11 = inlined_call_operand.hbm [shape: f32[2,1,128], index: 11, kind: output, shape index: {}]
  %s12 = sld [smem:[#allocation0]]
  $region77: #{discriminator_x_forward.1} parent=0
    _
  %s14 = ssub.s32 1, %s12
  %s15 = scalar_select 0, %s14, %s12
  $region1: #{discriminator_x_forward.1} parent=0
    #allocation2 [shape = 'u8[1024]{0}', space=vmem, size = 0x400, scoped, tag = 'output window, operand 0']
    #allocation3 [shape = 's32[2]{0}', space=sflag, size = 0x8, scoped, tag = 'scoped memory for discriminator_x_forward.1']
    %16 = vsyncpa [#allocation3], 0
    %s17 = scalar_lea.sflag [#allocation3], 1
    %18 = vsyncpa %s17, 0
    loop: start=0, step=1, limit=4
    $region2: #{discriminator_x_forward.1} parent=1 // loop_pre_header
      _
    $region3: #{discriminator_x_forward.1} parent=1 // loop_header
      %s20 = sphi 0, %s24
      %p21 = scmp.ge.s32.totalorder %s20, 4
      %s30 = sphi 0, %s32
      %s33 = sphi 0, %s30
      %s34 = sphi 0, %s33
      %s50 = sphi 0, %s34
      %s54 = sphi 0, %s54
      %s56 = sphi 0, %s54
      %s57 = sphi 0, %s56
      %s71 = sphi 0, %s57
      %s75 = sphi 0, %s75
      %s77 = sphi 0, %s75
      %s78 = sphi 0, %s77
      %s92 = sphi 0, %s78
      %s96 = sphi 0, %s96
      %s98 = sphi 0, %s96
      %s99 = sphi 0, %s98
      %s113 = sphi 0, %s99
      %s117 = sphi 0, %s117
      %s119 = sphi 0, %s117
      %s120 = sphi 0, %s119
      %s134 = sphi 0, %s120
      %s138 = sphi 0, %s138
      %s140 = sphi 0, %s138
      %s141 = sphi 0, %s140
      %s155 = sphi 0, %s141
      %s159 = sphi 0, %s159
      %s161 = sphi 0, %s159
      %s162 = sphi 0, %s161
      %s176 = sphi 0, %s162
      %s180 = sphi 0, %s180
      %s182 = sphi 0, %s180
      %s183 = sphi 0, %s182
      %s197 = sphi 0, %s183
      %s201 = sphi 0, %s201
      %s203 = sphi 0, %s201
      %s204 = sphi 0, %s203
      %s218 = sphi 0, %s204
      %s222 = sphi 0, %s222
      %s224 = sphi 0, %s222
      %s225 = sphi 0, %s224
      %s239 = sphi 0, %s225
      %s243 = sphi 0, %s243
      %s245 = sphi 0, %s243
      %s246 = sphi 0, %s245
      %s260 = sphi 0, %s246
      %s266 = sphi 0, %s268
      %s269 = sphi 0, %s266
      %s270 = sphi 0, %s269
      %s286 = sphi 0, %s270
    $region4: #{discriminator_x_forward.1} parent=1 // loop_header_branch
      %23 = sbr.rel (%p21) target = $region8
    $region5: #{discriminator_x_forward.1} parent=1 // loop_body
      %s25 = ssub.s32 %s20, 1
      %s26 = ssub.s32 %s20, 2
      %s27 = sadd.s32 %s20, 1
      %s28 = ssub.s32 %s20, %s27
      %p29 = scmp.eq.s32.totalorder %s28, 0
      %s31 = sadd.s32 %s30, 1
      %s32 = scalar_select %p29, %s30, %s31
      %p35 = pneg %p29
      %p36 = scmp.eq.s32.totalorder %s20, 1
      %p37 = por %p35, %p36
      %p38 = scmp.ne.s32.totalorder %s30, %s33
      %p39 = scmp.eq.s32.totalorder %s20, 0
      %p40 = por %p38, %p39
      %p41 = scmp.ne.s32.totalorder %s30, %s33
      %p42 = scmp.eq.s32.totalorder %s25, 1
      %p43 = por %p41, %p42
      %p44 = scmp.ne.s32.totalorder %s33, %s34
      %p45 = scmp.eq.s32.totalorder %s25, 0
      %p46 = por %p44, %p45
      %p47 = scmp.ne.s32.totalorder %s33, %s34
      %p48 = scmp.eq.s32.totalorder %s26, 1
      %p49 = por %p47, %p48
      %p51 = scmp.ne.s32.totalorder %s34, %s50
      %p52 = scmp.eq.s32.totalorder %s26, 0
      %p53 = por %p51, %p52
      %s55 = sadd.s32 %s54, 1
      %p58 = scmp.eq.s32.totalorder %s20, 1
      %p59 = scmp.ne.s32.totalorder %s54, %s56
      %p60 = scmp.eq.s32.totalorder %s20, 0
      %p61 = por %p59, %p60
      %p62 = scmp.ne.s32.totalorder %s54, %s56
      %p63 = scmp.eq.s32.totalorder %s25, 1
      %p64 = por %p62, %p63
      %p65 = scmp.ne.s32.totalorder %s56, %s57
      %p66 = scmp.eq.s32.totalorder %s25, 0
      %p67 = por %p65, %p66
      %p68 = scmp.ne.s32.totalorder %s56, %s57
      %p69 = scmp.eq.s32.totalorder %s26, 1
      %p70 = por %p68, %p69
      %p72 = scmp.ne.s32.totalorder %s57, %s71
      %p73 = scmp.eq.s32.totalorder %s26, 0
      %p74 = por %p72, %p73
      %s76 = sadd.s32 %s75, 1
      %p79 = scmp.eq.s32.totalorder %s20, 1
      %p80 = scmp.ne.s32.totalorder %s75, %s77
      %p81 = scmp.eq.s32.totalorder %s20, 0
      %p82 = por %p80, %p81
      %p83 = scmp.ne.s32.totalorder %s75, %s77
      %p84 = scmp.eq.s32.totalorder %s25, 1
      %p85 = por %p83, %p84
      %p86 = scmp.ne.s32.totalorder %s77, %s78
      %p87 = scmp.eq.s32.totalorder %s25, 0
      %p88 = por %p86, %p87
      %p89 = scmp.ne.s32.totalorder %s77, %s78
      %p90 = scmp.eq.s32.totalorder %s26, 1
      %p91 = por %p89, %p90
      %p93 = scmp.ne.s32.totalorder %s78, %s92
      %p94 = scmp.eq.s32.totalorder %s26, 0
      %p95 = por %p93, %p94
      %s97 = sadd.s32 %s96, 1
      %p100 = scmp.eq.s32.totalorder %s20, 1
      %p101 = scmp.ne.s32.totalorder %s96, %s98
      %p102 = scmp.eq.s32.totalorder %s20, 0
      %p103 = por %p101, %p102
      %p104 = scmp.ne.s32.totalorder %s96, %s98
      %p105 = scmp.eq.s32.totalorder %s25, 1
      %p106 = por %p104, %p105
      %p107 = scmp.ne.s32.totalorder %s98, %s99
      %p108 = scmp.eq.s32.totalorder %s25, 0
      %p109 = por %p107, %p108
      %p110 = scmp.ne.s32.totalorder %s98, %s99
      %p111 = scmp.eq.s32.totalorder %s26, 1
      %p112 = por %p110, %p111
      %p114 = scmp.ne.s32.totalorder %s99, %s113
      %p115 = scmp.eq.s32.totalorder %s26, 0
      %p116 = por %p114, %p115
      %s118 = sadd.s32 %s117, 1
      %p121 = scmp.eq.s32.totalorder %s20, 1
      %p122 = scmp.ne.s32.totalorder %s117, %s119
      %p123 = scmp.eq.s32.totalorder %s20, 0
      %p124 = por %p122, %p123
      %p125 = scmp.ne.s32.totalorder %s117, %s119
      %p126 = scmp.eq.s32.totalorder %s25, 1
      %p127 = por %p125, %p126
      %p128 = scmp.ne.s32.totalorder %s119, %s120
      %p129 = scmp.eq.s32.totalorder %s25, 0
      %p130 = por %p128, %p129
      %p131 = scmp.ne.s32.totalorder %s119, %s120
      %p132 = scmp.eq.s32.totalorder %s26, 1
      %p133 = por %p131, %p132
      %p135 = scmp.ne.s32.totalorder %s120, %s134
      %p136 = scmp.eq.s32.totalorder %s26, 0
      %p137 = por %p135, %p136
      %s139 = sadd.s32 %s138, 1
      %p142 = scmp.eq.s32.totalorder %s20, 1
      %p143 = scmp.ne.s32.totalorder %s138, %s140
      %p144 = scmp.eq.s32.totalorder %s20, 0
      %p145 = por %p143, %p144
      %p146 = scmp.ne.s32.totalorder %s138, %s140
      %p147 = scmp.eq.s32.totalorder %s25, 1
      %p148 = por %p146, %p147
      %p149 = scmp.ne.s32.totalorder %s140, %s141
      %p150 = scmp.eq.s32.totalorder %s25, 0
      %p151 = por %p149, %p150
      %p152 = scmp.ne.s32.totalorder %s140, %s141
      %p153 = scmp.eq.s32.totalorder %s26, 1
      %p154 = por %p152, %p153
      %p156 = scmp.ne.s32.totalorder %s141, %s155
      %p157 = scmp.eq.s32.totalorder %s26, 0
      %p158 = por %p156, %p157
      %s160 = sadd.s32 %s159, 1
      %p163 = scmp.eq.s32.totalorder %s20, 1
      %p164 = scmp.ne.s32.totalorder %s159, %s161
      %p165 = scmp.eq.s32.totalorder %s20, 0
      %p166 = por %p164, %p165
      %p167 = scmp.ne.s32.totalorder %s159, %s161
      %p168 = scmp.eq.s32.totalorder %s25, 1
      %p169 = por %p167, %p168
      %p170 = scmp.ne.s32.totalorder %s161, %s162
      %p171 = scmp.eq.s32.totalorder %s25, 0
      %p172 = por %p170, %p171
      %p173 = scmp.ne.s32.totalorder %s161, %s162
      %p174 = scmp.eq.s32.totalorder %s26, 1
      %p175 = por %p173, %p174
      %p177 = scmp.ne.s32.totalorder %s162, %s176
      %p178 = scmp.eq.s32.totalorder %s26, 0
      %p179 = por %p177, %p178
      %s181 = sadd.s32 %s180, 1
      %p184 = scmp.eq.s32.totalorder %s20, 1
      %p185 = scmp.ne.s32.totalorder %s180, %s182
      %p186 = scmp.eq.s32.totalorder %s20, 0
      %p187 = por %p185, %p186
      %p188 = scmp.ne.s32.totalorder %s180, %s182
      %p189 = scmp.eq.s32.totalorder %s25, 1
      %p190 = por %p188, %p189
      %p191 = scmp.ne.s32.totalorder %s182, %s183
      %p192 = scmp.eq.s32.totalorder %s25, 0
      %p193 = por %p191, %p192
      %p194 = scmp.ne.s32.totalorder %s182, %s183
      %p195 = scmp.eq.s32.totalorder %s26, 1
      %p196 = por %p194, %p195
      %p198 = scmp.ne.s32.totalorder %s183, %s197
      %p199 = scmp.eq.s32.totalorder %s26, 0
      %p200 = por %p198, %p199
      %s202 = sadd.s32 %s201, 1
      %p205 = scmp.eq.s32.totalorder %s20, 1
      %p206 = scmp.ne.s32.totalorder %s201, %s203
      %p207 = scmp.eq.s32.totalorder %s20, 0
      %p208 = por %p206, %p207
      %p209 = scmp.ne.s32.totalorder %s201, %s203
      %p210 = scmp.eq.s32.totalorder %s25, 1
      %p211 = por %p209, %p210
      %p212 = scmp.ne.s32.totalorder %s203, %s204
      %p213 = scmp.eq.s32.totalorder %s25, 0
      %p214 = por %p212, %p213
      %p215 = scmp.ne.s32.totalorder %s203, %s204
      %p216 = scmp.eq.s32.totalorder %s26, 1
      %p217 = por %p215, %p216
      %p219 = scmp.ne.s32.totalorder %s204, %s218
      %p220 = scmp.eq.s32.totalorder %s26, 0
      %p221 = por %p219, %p220
      %s223 = sadd.s32 %s222, 1
      %p226 = scmp.eq.s32.totalorder %s20, 1
      %p227 = scmp.ne.s32.totalorder %s222, %s224
      %p228 = scmp.eq.s32.totalorder %s20, 0
      %p229 = por %p227, %p228
      %p230 = scmp.ne.s32.totalorder %s222, %s224
      %p231 = scmp.eq.s32.totalorder %s25, 1
      %p232 = por %p230, %p231
      %p233 = scmp.ne.s32.totalorder %s224, %s225
      %p234 = scmp.eq.s32.totalorder %s25, 0
      %p235 = por %p233, %p234
      %p236 = scmp.ne.s32.totalorder %s224, %s225
      %p237 = scmp.eq.s32.totalorder %s26, 1
      %p238 = por %p236, %p237
      %p240 = scmp.ne.s32.totalorder %s225, %s239
      %p241 = scmp.eq.s32.totalorder %s26, 0
      %p242 = por %p240, %p241
      %s244 = sadd.s32 %s243, 1
      %p247 = scmp.eq.s32.totalorder %s20, 1
      %p248 = scmp.ne.s32.totalorder %s243, %s245
      %p249 = scmp.eq.s32.totalorder %s20, 0
      %p250 = por %p248, %p249
      %p251 = scmp.ne.s32.totalorder %s243, %s245
      %p252 = scmp.eq.s32.totalorder %s25, 1
      %p253 = por %p251, %p252
      %p254 = scmp.ne.s32.totalorder %s245, %s246
      %p255 = scmp.eq.s32.totalorder %s25, 0
      %p256 = por %p254, %p255
      %p257 = scmp.ne.s32.totalorder %s245, %s246
      %p258 = scmp.eq.s32.totalorder %s26, 1
      %p259 = por %p257, %p258
      %p261 = scmp.ne.s32.totalorder %s246, %s260
      %p262 = scmp.eq.s32.totalorder %s26, 0
      %p263 = por %p261, %p262
      %s264 = ssub.s32 %s20, %s27
      %p265 = scmp.eq.s32.totalorder %s264, 0
      %s267 = sadd.s32 %s266, 1
      %s268 = scalar_select %p265, %s266, %s267
      %p271 = pneg %p265
      %p272 = scmp.eq.s32.totalorder %s20, 1
      %p273 = por %p271, %p272
      %p274 = scmp.ne.s32.totalorder %s266, %s269
      %p275 = scmp.eq.s32.totalorder %s20, 0
      %p276 = por %p274, %p275
      %p277 = scmp.ne.s32.totalorder %s266, %s269
      %p278 = scmp.eq.s32.totalorder %s25, 1
      %p279 = por %p277, %p278
      %p280 = scmp.ne.s32.totalorder %s269, %s270
      %p281 = scmp.eq.s32.totalorder %s25, 0
      %p282 = por %p280, %p281
      %p283 = scmp.ne.s32.totalorder %s269, %s270
      %p284 = scmp.eq.s32.totalorder %s26, 1
      %p285 = por %p283, %p284
      %p287 = scmp.ne.s32.totalorder %s270, %s286
      %p288 = scmp.eq.s32.totalorder %s26, 0
      %p289 = por %p287, %p288
      %p290 = scmp.le.s32.totalorder 1, %s20
      %p291 = scmp.lt.s32.totalorder %s20, 3
      %p292 = pnand %p290, %p291
      %p293 = pneg %p292
      // Predicated region
      $region9: #{discriminator_x_forward.1} parent=5 // pred_check
        _
      $region10: #{discriminator_x_forward.1} parent=5 // pred_check_branch
        %295 = sbr.rel (%p292) target = $region12
      $region11: #{discriminator_x_forward.1} parent=5 // pred_region
        %s296 = ssub.s32 %s20, 1
        // Predicated region
        $region13: #{discriminator_x_forward.1} parent=11 // pred_check
          %p297 = pneg %p67
        $region14: #{discriminator_x_forward.1} parent=11 // pred_check_branch
          %299 = sbr.rel (%p297) target = $region16
        $region15: #{discriminator_x_forward.1} parent=11 // pred_region
          _
        $region16: #{discriminator_x_forward.1} parent=11 // pred_fallthru
          _
        // Predicated region
        $region17: #{discriminator_x_forward.1} parent=11 // pred_check
          %p300 = pneg %p88
        $region18: #{discriminator_x_forward.1} parent=11 // pred_check_branch
          %302 = sbr.rel (%p300) target = $region20
        $region19: #{discriminator_x_forward.1} parent=11 // pred_region
          _
        $region20: #{discriminator_x_forward.1} parent=11 // pred_fallthru
          _
        // Predicated region
        $region21: #{discriminator_x_forward.1} parent=11 // pred_check
          %p303 = pneg %p109
        $region22: #{discriminator_x_forward.1} parent=11 // pred_check_branch
          %305 = sbr.rel (%p303) target = $region24
        $region23: #{discriminator_x_forward.1} parent=11 // pred_region
          _
        $region24: #{discriminator_x_forward.1} parent=11 // pred_fallthru
          _
        // Predicated region
        $region25: #{discriminator_x_forward.1} parent=11 // pred_check
          %p306 = pneg %p130
        $region26: #{discriminator_x_forward.1} parent=11 // pred_check_branch
          %308 = sbr.rel (%p306) target = $region28
        $region27: #{discriminator_x_forward.1} parent=11 // pred_region
          _
        $region28: #{discriminator_x_forward.1} parent=11 // pred_fallthru
          _
        // Predicated region
        $region29: #{discriminator_x_forward.1} parent=11 // pred_check
          %p309 = pneg %p151
        $region30: #{discriminator_x_forward.1} parent=11 // pred_check_branch
          %311 = sbr.rel (%p309) target = $region32
        $region31: #{discriminator_x_forward.1} parent=11 // pred_region
          _
        $region32: #{discriminator_x_forward.1} parent=11 // pred_fallthru
          _
        // Predicated region
        $region33: #{discriminator_x_forward.1} parent=11 // pred_check
          %p312 = pneg %p172
        $region34: #{discriminator_x_forward.1} parent=11 // pred_check_branch
          %314 = sbr.rel (%p312) target = $region36
        $region35: #{discriminator_x_forward.1} parent=11 // pred_region
          _
        $region36: #{discriminator_x_forward.1} parent=11 // pred_fallthru
          _
        // Predicated region
        $region37: #{discriminator_x_forward.1} parent=11 // pred_check
          %p315 = pneg %p193
        $region38: #{discriminator_x_forward.1} parent=11 // pred_check_branch
          %317 = sbr.rel (%p315) target = $region40
        $region39: #{discriminator_x_forward.1} parent=11 // pred_region
          _
        $region40: #{discriminator_x_forward.1} parent=11 // pred_fallthru
          _
        // Predicated region
        $region41: #{discriminator_x_forward.1} parent=11 // pred_check
          %p318 = pneg %p214
        $region42: #{discriminator_x_forward.1} parent=11 // pred_check_branch
          %320 = sbr.rel (%p318) target = $region44
        $region43: #{discriminator_x_forward.1} parent=11 // pred_region
          _
        $region44: #{discriminator_x_forward.1} parent=11 // pred_fallthru
          _
        // Predicated region
        $region45: #{discriminator_x_forward.1} parent=11 // pred_check
          %p321 = pneg %p235
        $region46: #{discriminator_x_forward.1} parent=11 // pred_check_branch
          %323 = sbr.rel (%p321) target = $region48
        $region47: #{discriminator_x_forward.1} parent=11 // pred_region
          _
        $region48: #{discriminator_x_forward.1} parent=11 // pred_fallthru
          _
        // Predicated region
        $region49: #{discriminator_x_forward.1} parent=11 // pred_check
          %p324 = pneg %p256
        $region50: #{discriminator_x_forward.1} parent=11 // pred_check_branch
          %326 = sbr.rel (%p324) target = $region52
        $region51: #{discriminator_x_forward.1} parent=11 // pred_region
          _
        $region52: #{discriminator_x_forward.1} parent=11 // pred_fallthru
          _
      $region12: #{discriminator_x_forward.1} parent=5 // pred_fallthru
        _
      %p327 = scmp.lt.s32.totalorder %s20, 2
      // Predicated region
      $region53: #{discriminator_x_forward.1} parent=5 // pred_check
        %p328 = pneg %p327
      $region54: #{discriminator_x_forward.1} parent=5 // pred_check_branch
        %330 = sbr.rel (%p328) target = $region56
      $region55: #{discriminator_x_forward.1} parent=5 // pred_region
        // Predicated region
        $region57: #{discriminator_x_forward.1} parent=55 // pred_check
          %p331 = pneg %p40
        $region58: #{discriminator_x_forward.1} parent=55 // pred_check_branch
          %333 = sbr.rel (%p331) target = $region60
        $region59: #{discriminator_x_forward.1} parent=55 // pred_region
          %p334 = scmp.lt.s32.totalorder %s20, 1
          %s335 = scalar_select %p334, %s20, 1
          %s336 = smul.addr %s335, 42
          %s337 = smul.addr %s336, 4
          %s338 = scalar_lea.vmem %s0, %s337
        $region60: #{discriminator_x_forward.1} parent=55 // pred_fallthru
          _
      $region56: #{discriminator_x_forward.1} parent=5 // pred_fallthru
        _
      %p339 = scmp.le.s32.totalorder 1, %s20
      %p340 = scmp.lt.s32.totalorder %s20, 3
      %p341 = pnand %p339, %p340
      %p342 = pneg %p341
      // Predicated region
      $region61: #{discriminator_x_forward.1} parent=5 // pred_check
        _
      $region62: #{discriminator_x_forward.1} parent=5 // pred_check_branch
        %344 = sbr.rel (%p341) target = $region64
      $region63: #{discriminator_x_forward.1} parent=5 // pred_region
        %s345 = ssub.s32 %s20, 1
        %p346 = scmp.lt.s32.totalorder %s25, 1
        %s347 = scalar_select %p346, %s25, 1
        %s348 = smul.addr %s347, 42
        %s349 = smul.addr %s348, 4
        %s350 = scalar_lea.vmem %s0, %s349
        %p351 = pneg %p46
        %p352 = pneg %p43
        %p353 = pneg %p67
        %p354 = pneg %p64
        %p355 = pneg %p88
        %p356 = pneg %p85
        %p357 = pneg %p109
        %p358 = pneg %p106
        %p359 = pneg %p130
        %p360 = pneg %p127
        %p361 = pneg %p151
        %p362 = pneg %p148
        %p363 = pneg %p172
        %p364 = pneg %p169
        %p365 = pneg %p193
        %p366 = pneg %p190
        %p367 = pneg %p214
        %p368 = pneg %p211
        %p369 = pneg %p235
        %p370 = pneg %p232
        %p371 = pneg %p256
        %p372 = pneg %p253
        %p373 = pneg %p282
        %p374 = pneg %p279
        %s375 = sand.u32 %s269, 1
        %s376 = scalar_lea.sflag [#allocation3], %s375
        %s377 = sand.u32 %s269, 1
        %s378 = scalar_lea.vmem [#allocation2], %s377
        %p379 = scmp.lt.s32.totalorder %s25, 1
        %s380 = scalar_select %p379, %s25, 1
        %s381 = smul.addr %s380, 42
        %s382 = smul.addr %s381, 4
        %s383 = scalar_lea.vmem %s0, %s382
        %v385 = vld [vmem:[%s383] sm:$0xf]
        %v386 = vld [vmem:[%s383 + $0x4] sm:$0xf]
        %v387 = vld [vmem:[%s383 + $0x8] sm:$0xf]
        %v388 = vld [vmem:[%s383 + $0xc] sm:$0xf]
        %v389 = vld [vmem:[%s383 + $0x10] sm:$0xf]
        %v390 = vld [vmem:[%s383 + $0x14] sm:$0xf]
        %v391 = vld [vmem:[%s383 + $0x18] sm:$0xf]
        %v392 = vld [vmem:[%s383 + $0x1c] sm:$0xf]
        %v393 = vld [vmem:[%s383 + $0x20] sm:$0xf]
        %v394 = vld [vmem:[%s383 + $0x24] sm:$0xf]
        %v395 = vld [vmem:[%s383 + $0x28] sm:$0xf]
        %v396 = vld [vmem:[%s383 + $0x2c] sm:$0xf]
        %v397 = vld [vmem:[%s383 + $0x30] sm:$0xf]
        %v398 = vld [vmem:[%s383 + $0x34] sm:$0xf]
        %v399 = vld [vmem:[%s383 + $0x38] sm:$0xf]
        %v400 = vld [vmem:[%s383 + $0x3c] sm:$0xf]
        %v401 = vld [vmem:[%s383 + $0x40] sm:$0xf]
        %v402 = vld [vmem:[%s383 + $0x44] sm:$0xf]
        %v403 = vld [vmem:[%s383 + $0x48] sm:$0xf]
        %v404 = vld [vmem:[%s383 + $0x4c] sm:$0xf]
        %v405 = vld [vmem:[%s383 + $0x50] sm:$0xf]
        %v406 = vld [vmem:[%s383 + $0x54] sm:$0xf]
        %v407 = vld [vmem:[%s383 + $0x58] sm:$0xf]
        %v408 = vld [vmem:[%s383 + $0x5c] sm:$0xf]
        %v409 = vld [vmem:[%s383 + $0x60] sm:$0xf]
        %v410 = vld [vmem:[%s383 + $0x64] sm:$0xf]
        %v411 = vld [vmem:[%s383 + $0x68] sm:$0xf]
        %v412 = vld [vmem:[%s383 + $0x6c] sm:$0xf]
        %v413 = vld [vmem:[%s383 + $0x70] sm:$0xf]
        %v414 = vld [vmem:[%s383 + $0x74] sm:$0xf]
        %v415 = vld [vmem:[%s383 + $0x78] sm:$0xf]
        %v416 = vld [vmem:[%s383 + $0x7c] sm:$0xf]
        %v417 = vld [vmem:[%s383 + $0x80] sm:$0xf]
        %v418 = vld [vmem:[%s383 + $0x84] sm:$0xf]
        %v419 = vld [vmem:[%s383 + $0x88] sm:$0xf]
        %v420 = vld [vmem:[%s383 + $0x8c] sm:$0xf]
        %v421 = vld [vmem:[%s383 + $0x90] sm:$0xf]
        %v422 = vld [vmem:[%s383 + $0x94] sm:$0xf]
        %v423 = vld [vmem:[%s383 + $0x98] sm:$0xf]
        %v424 = vld [vmem:[%s383 + $0x9c] sm:$0xf]
        %v425 = vld [vmem:[%s383 + $0xa0] sm:$0xf]
        %v426 = vld [vmem:[%s383 + $0xa4] sm:$0xf]
        %v427 = vld [vmem:[%s1] sm:$0xf]
        %v428 = vld [vmem:[%s1 + $0x4] sm:$0x1]
        %v429 = vld [vmem:[%s6] sm:$0x1]
        %v431 = vlaneseq
        %v432 = vshrl.u32 %v431, 7
        %v433 = vsub.s32 0, %v432
        %v434 = vrot.slane %v429, %v433
        %v478 = vunpack.c.l.b16 %v385
        %v479 = vunpack.c.l.b16 %v386
        %v480 = vunpack.c.l.b16 %v387
        %v481 = vunpack.c.l.b16 %v388
        %v482 = vunpack.c.l.b16 %v389
        %v483 = vunpack.c.l.b16 %v390
        %v484 = vunpack.c.l.b16 %v391
        %v485 = vunpack.c.l.b16 %v392
        %v486 = vunpack.c.l.b16 %v393
        %v487 = vunpack.c.l.b16 %v394
        %v488 = vunpack.c.l.b16 %v395
        %v489 = vunpack.c.l.b16 %v396
        %v490 = vunpack.c.l.b16 %v397
        %v491 = vunpack.c.l.b16 %v398
        %v492 = vunpack.c.l.b16 %v399
        %v493 = vunpack.c.l.b16 %v400
        %v494 = vunpack.c.l.b16 %v401
        %v495 = vunpack.c.l.b16 %v402
        %v496 = vunpack.c.l.b16 %v403
        %v497 = vunpack.c.l.b16 %v404
        %v498 = vunpack.c.l.b16 %v405
        %v499 = vunpack.c.l.b16 %v406
        %v500 = vunpack.c.l.b16 %v407
        %v501 = vunpack.c.l.b16 %v408
        %v502 = vunpack.c.l.b16 %v409
        %v503 = vunpack.c.l.b16 %v410
        %v504 = vunpack.c.l.b16 %v411
        %v505 = vunpack.c.l.b16 %v412
        %v506 = vunpack.c.l.b16 %v413
        %v507 = vunpack.c.l.b16 %v414
        %v508 = vunpack.c.l.b16 %v415
        %v509 = vunpack.c.l.b16 %v416
        %v510 = vunpack.c.l.b16 %v417
        %v511 = vunpack.c.l.b16 %v418
        %v512 = vunpack.c.l.b16 %v419
        %v513 = vunpack.c.l.b16 %v420
        %v514 = vunpack.c.l.b16 %v421
        %v515 = vunpack.c.l.b16 %v422
        %v516 = vunpack.c.l.b16 %v423
        %v517 = vunpack.c.l.b16 %v424
        %v518 = vunpack.c.l.b16 %v425
        %v519 = vunpack.c.l.b16 %v426
        %v520 = vpack.c.b16 %v479, %v478
        %v521 = vpack.c.b16 %v481, %v480
        %v522 = vpack.c.b16 %v483, %v482
        %v523 = vpack.c.b16 %v485, %v484
        %v524 = vpack.c.b16 %v487, %v486
        %v525 = vpack.c.b16 %v489, %v488
        %v526 = vpack.c.b16 %v491, %v490
        %v527 = vpack.c.b16 %v493, %v492
        %v528 = vpack.c.b16 %v495, %v494
        %v529 = vpack.c.b16 %v497, %v496
        %v530 = vpack.c.b16 %v499, %v498
        %v531 = vpack.c.b16 %v501, %v500
        %v532 = vpack.c.b16 %v503, %v502
        %v533 = vpack.c.b16 %v505, %v504
        %v534 = vpack.c.b16 %v507, %v506
        %v535 = vpack.c.b16 %v509, %v508
        %v536 = vpack.c.b16 %v511, %v510
        %v537 = vpack.c.b16 %v513, %v512
        %v538 = vpack.c.b16 %v515, %v514
        %v539 = vpack.c.b16 %v517, %v516
        %v540 = vpack.c.b16 %v519, %v518
        %v543 = vunpack.c.l.b16 %v427
        %v544 = vunpack.c.l.b16 %v428
        %v545 = vpack.c.b16 %v544, %v543
        %vm546 = vcmask 72704
        %v548 = vsel %vm546, %v520, 0
        %v551 = vsel %vm546, %v521, 0
        %v554 = vsel %vm546, %v522, 0
        %v557 = vsel %vm546, %v523, 0
        %v560 = vsel %vm546, %v524, 0
        %v563 = vsel %vm546, %v525, 0
        %v566 = vsel %vm546, %v526, 0
        %v569 = vsel %vm546, %v527, 0
        %v572 = vsel %vm546, %v528, 0
        %v575 = vsel %vm546, %v529, 0
        %v578 = vsel %vm546, %v530, 0
        %v581 = vsel %vm546, %v531, 0
        %v584 = vsel %vm546, %v532, 0
        %v587 = vsel %vm546, %v533, 0
        %v590 = vsel %vm546, %v534, 0
        %v593 = vsel %vm546, %v535, 0
        %v596 = vsel %vm546, %v536, 0
        %v599 = vsel %vm546, %v537, 0
        %v602 = vsel %vm546, %v538, 0
        %v605 = vsel %vm546, %v539, 0
        %v608 = vsel %vm546, %v540, 0
        %vm610 = vcmask 1043456
        %vm611 = vcmask 1044480
        %v612 = vsel %vm610, 4294967295, 65535
        %v613 = vsel %vm611, %v612, 0
        %v615 = vand.u32 %v545, %v613
        %617 = vmatprep.subr.bf16.mxu0 0
        %618 = vmatpush1.bf16.msra.mxu0 %v615
        %619 = vmatprep.subr.bf16.mxu0 0
        %620 = vmatpush1.bf16.msra.mxu0 0
        %621 = vmatprep.subr.bf16.mxu0 0
        %622 = vmatpush1.bf16.msra.mxu0 0
        %623 = vmatprep.subr.bf16.mxu0 0
        %624 = vmatpush1.bf16.msra.mxu0 0
        %625 = vmatprep.subr.bf16.mxu0 0
        %626 = vmatpush1.bf16.msra.mxu0 0
        %627 = vmatprep.subr.bf16.mxu0 0
        %628 = vmatpush1.bf16.msra.mxu0 0
        %629 = vmatprep.subr.bf16.mxu0 0
        %630 = vmatpush1.bf16.msra.mxu0 0
        %631 = vmatprep.subr.bf16.mxu0 0
        %632 = vmatpush1.bf16.msra.mxu0 0
        %633 = vmatprep.subr.bf16.mxu0 0
        %634 = vmatpush1.bf16.msra.mxu0 0
        %635 = vmatprep.subr.bf16.mxu0 0
        %636 = vmatpush1.bf16.msra.mxu0 0
        %637 = vmatprep.subr.bf16.mxu0 0
        %638 = vmatpush1.bf16.msra.mxu0 0
        %639 = vmatprep.subr.bf16.mxu0 0
        %640 = vmatpush1.bf16.msra.mxu0 0
        %641 = vmatprep.subr.bf16.mxu0 0
        %642 = vmatpush1.bf16.msra.mxu0 0
        %643 = vmatprep.subr.bf16.mxu0 0
        %644 = vmatpush1.bf16.msra.mxu0 0
        %645 = vmatprep.subr.bf16.mxu0 0
        %646 = vmatpush1.bf16.msra.mxu0 0
        %647 = vmatprep.subr.bf16.mxu0 0
        %648 = vmatpush1.bf16.msra.mxu0 0
        %649 = vmatprep.mubr.bf16.mxu0 0
        %650 = vmatmul.mubr.bf16.gmra.mrb[0].mxu0 %v548
        %v651 = vpop.f32.mrb[0].mxu0
        %v652 = vadd.f32 %v434, %v651
        %v653 = vpop.f32.mrb[0].mxu0
        %v654 = vpop.f32.mrb[0].mxu0
        %v655 = vadd.f32 %v434, %v654
        %v656 = vpop.f32.mrb[0].mxu0
        %657 = vmatprep.mubr.bf16.mxu0 0
        %658 = vmatmul.mubr.bf16.gmra.mrb[0].mxu0 %v551
        %v659 = vpop.f32.mrb[0].mxu0
        %v660 = vadd.f32 %v434, %v659
        %v661 = vpop.f32.mrb[0].mxu0
        %v662 = vpop.f32.mrb[0].mxu0
        %v663 = vadd.f32 %v434, %v662
        %v664 = vpop.f32.mrb[0].mxu0
        %665 = vmatprep.mubr.bf16.mxu0 0
        %666 = vmatmul.mubr.bf16.gmra.mrb[0].mxu0 %v554
        %v667 = vpop.f32.mrb[0].mxu0
        %v668 = vadd.f32 %v434, %v667
        %v669 = vpop.f32.mrb[0].mxu0
        %v670 = vpop.f32.mrb[0].mxu0
        %v671 = vadd.f32 %v434, %v670
        %v672 = vpop.f32.mrb[0].mxu0
        %673 = vmatprep.mubr.bf16.mxu0 0
        %674 = vmatmul.mubr.bf16.gmra.mrb[0].mxu0 %v557
        %v675 = vpop.f32.mrb[0].mxu0
        %v676 = vadd.f32 %v434, %v675
        %v677 = vpop.f32.mrb[0].mxu0
        %v678 = vpop.f32.mrb[0].mxu0
        %v679 = vadd.f32 %v434, %v678
        %v680 = vpop.f32.mrb[0].mxu0
        %681 = vmatprep.mubr.bf16.mxu0 0
        %682 = vmatmul.mubr.bf16.gmra.mrb[0].mxu0 %v560
        %v683 = vpop.f32.mrb[0].mxu0
        %v684 = vadd.f32 %v434, %v683
        %v685 = vpop.f32.mrb[0].mxu0
        %v686 = vpop.f32.mrb[0].mxu0
        %v687 = vadd.f32 %v434, %v686
        %v688 = vpop.f32.mrb[0].mxu0
        %689 = vmatprep.mubr.bf16.mxu0 0
        %690 = vmatmul.mubr.bf16.gmra.mrb[0].mxu0 %v563
        %v691 = vpop.f32.mrb[0].mxu0
        %v692 = vadd.f32 %v434, %v691
        %v693 = vpop.f32.mrb[0].mxu0
        %v694 = vpop.f32.mrb[0].mxu0
        %v695 = vadd.f32 %v434, %v694
        %v696 = vpop.f32.mrb[0].mxu0
        %697 = vmatprep.mubr.bf16.mxu0 0
        %698 = vmatmul.mubr.bf16.gmra.mrb[0].mxu0 %v566
        %v699 = vpop.f32.mrb[0].mxu0
        %v700 = vadd.f32 %v434, %v699
        %v701 = vpop.f32.mrb[0].mxu0
        %v702 = vpop.f32.mrb[0].mxu0
        %v703 = vadd.f32 %v434, %v702
        %v704 = vpop.f32.mrb[0].mxu0
        %705 = vmatprep.mubr.bf16.mxu0 0
        %706 = vmatmul.mubr.bf16.gmra.mrb[0].mxu0 %v569
        %v707 = vpop.f32.mrb[0].mxu0
        %v708 = vadd.f32 %v434, %v707
        %v709 = vpop.f32.mrb[0].mxu0
        %v710 = vpop.f32.mrb[0].mxu0
        %v711 = vadd.f32 %v434, %v710
        %v712 = vpop.f32.mrb[0].mxu0
        %713 = vmatprep.mubr.bf16.mxu0 0
        %714 = vmatmul.mubr.bf16.gmra.mrb[0].mxu0 %v572
        %v715 = vpop.f32.mrb[0].mxu0
        %v716 = vadd.f32 %v434, %v715
        %v717 = vpop.f32.mrb[0].mxu0
        %v718 = vpop.f32.mrb[0].mxu0
        %v719 = vadd.f32 %v434, %v718
        %v720 = vpop.f32.mrb[0].mxu0
        %721 = vmatprep.mubr.bf16.mxu0 0
        %722 = vmatmul.mubr.bf16.gmra.mrb[0].mxu0 %v575
        %v723 = vpop.f32.mrb[0].mxu0
        %v724 = vadd.f32 %v434, %v723
        %v725 = vpop.f32.mrb[0].mxu0
        %v726 = vpop.f32.mrb[0].mxu0
        %v727 = vadd.f32 %v434, %v726
        %v728 = vpop.f32.mrb[0].mxu0
        %729 = vmatprep.mubr.bf16.mxu0 0
        %730 = vmatmul.mubr.bf16.gmra.mrb[0].mxu0 %v578
        %v731 = vpop.f32.mrb[0].mxu0
        %v732 = vadd.f32 %v434, %v731
        %v733 = vpop.f32.mrb[0].mxu0
        %v734 = vpop.f32.mrb[0].mxu0
        %v735 = vadd.f32 %v434, %v734
        %v736 = vpop.f32.mrb[0].mxu0
        %737 = vmatprep.mubr.bf16.mxu0 0
        %738 = vmatmul.mubr.bf16.gmra.mrb[0].mxu0 %v581
        %v739 = vpop.f32.mrb[0].mxu0
        %v740 = vadd.f32 %v434, %v739
        %v741 = vpop.f32.mrb[0].mxu0
        %v742 = vpop.f32.mrb[0].mxu0
        %v743 = vadd.f32 %v434, %v742
        %v744 = vpop.f32.mrb[0].mxu0
        %745 = vmatprep.mubr.bf16.mxu0 0
        %746 = vmatmul.mubr.bf16.gmra.mrb[0].mxu0 %v584
        %v747 = vpop.f32.mrb[0].mxu0
        %v748 = vadd.f32 %v434, %v747
        %v749 = vpop.f32.mrb[0].mxu0
        %v750 = vpop.f32.mrb[0].mxu0
        %v751 = vadd.f32 %v434, %v750
        %v752 = vpop.f32.mrb[0].mxu0
        %753 = vmatprep.mubr.bf16.mxu0 0
        %754 = vmatmul.mubr.bf16.gmra.mrb[0].mxu0 %v587
        %v755 = vpop.f32.mrb[0].mxu0
        %v756 = vadd.f32 %v434, %v755
        %v757 = vpop.f32.mrb[0].mxu0
        %v758 = vpop.f32.mrb[0].mxu0
        %v759 = vadd.f32 %v434, %v758
        %v760 = vpop.f32.mrb[0].mxu0
        %761 = vmatprep.mubr.bf16.mxu0 0
        %762 = vmatmul.mubr.bf16.gmra.mrb[0].mxu0 %v590
        %v763 = vpop.f32.mrb[0].mxu0
        %v764 = vadd.f32 %v434, %v763
        %v765 = vpop.f32.mrb[0].mxu0
        %v766 = vpop.f32.mrb[0].mxu0
        %v767 = vadd.f32 %v434, %v766
        %v768 = vpop.f32.mrb[0].mxu0
        %769 = vmatprep.mubr.bf16.mxu0 0
        %770 = vmatmul.mubr.bf16.gmra.mrb[0].mxu0 %v593
        %v771 = vpop.f32.mrb[0].mxu0
        %v772 = vadd.f32 %v434, %v771
        %v773 = vpop.f32.mrb[0].mxu0
        %v774 = vpop.f32.mrb[0].mxu0
        %v775 = vadd.f32 %v434, %v774
        %v776 = vpop.f32.mrb[0].mxu0
        %777 = vmatprep.mubr.bf16.mxu0 0
        %778 = vmatmul.mubr.bf16.gmra.mrb[0].mxu0 %v596
        %v779 = vpop.f32.mrb[0].mxu0
        %v780 = vadd.f32 %v434, %v779
        %v781 = vpop.f32.mrb[0].mxu0
        %v782 = vpop.f32.mrb[0].mxu0
        %v783 = vadd.f32 %v434, %v782
        %v784 = vpop.f32.mrb[0].mxu0
        %785 = vmatprep.mubr.bf16.mxu0 0
        %786 = vmatmul.mubr.bf16.gmra.mrb[0].mxu0 %v599
        %v787 = vpop.f32.mrb[0].mxu0
        %v788 = vadd.f32 %v434, %v787
        %v789 = vpop.f32.mrb[0].mxu0
        %v790 = vpop.f32.mrb[0].mxu0
        %v791 = vadd.f32 %v434, %v790
        %v792 = vpop.f32.mrb[0].mxu0
        %793 = vmatprep.mubr.bf16.mxu0 0
        %794 = vmatmul.mubr.bf16.gmra.mrb[0].mxu0 %v602
        %v795 = vpop.f32.mrb[0].mxu0
        %v796 = vadd.f32 %v434, %v795
        %v797 = vpop.f32.mrb[0].mxu0
        %v798 = vpop.f32.mrb[0].mxu0
        %v799 = vadd.f32 %v434, %v798
        %v800 = vpop.f32.mrb[0].mxu0
        %801 = vmatprep.mubr.bf16.mxu0 0
        %802 = vmatmul.mubr.bf16.gmra.mrb[0].mxu0 %v605
        %v803 = vpop.f32.mrb[0].mxu0
        %v804 = vadd.f32 %v434, %v803
        %v805 = vpop.f32.mrb[0].mxu0
        %v806 = vpop.f32.mrb[0].mxu0
        %v807 = vadd.f32 %v434, %v806
        %v808 = vpop.f32.mrb[0].mxu0
        %809 = vmatprep.mubr.bf16.mxu0 0
        %810 = vmatmul.mubr.bf16.gmra.mrb[0].mxu0 %v608
        %v811 = vpop.f32.mrb[0].mxu0
        %v812 = vadd.f32 %v434, %v811
        %v813 = vpop.f32.mrb[0].mxu0
        %v814 = vpop.f32.mrb[0].mxu0
        %v815 = vadd.f32 %v434, %v814
        %v816 = vpop.f32.mrb[0].mxu0
        %817 = vdwg.mxu0
        %vm818 = vcmp.gt.f32.partialorder %v652, 0.0
        %vm819 = vcmp.gt.f32.partialorder %v655, 0.0
        %vm820 = vcmp.gt.f32.partialorder %v660, 0.0
        %vm821 = vcmp.gt.f32.partialorder %v663, 0.0
        %vm822 = vcmp.gt.f32.partialorder %v668, 0.0
        %vm823 = vcmp.gt.f32.partialorder %v671, 0.0
        %vm824 = vcmp.gt.f32.partialorder %v676, 0.0
        %vm825 = vcmp.gt.f32.partialorder %v679, 0.0
        %vm826 = vcmp.gt.f32.partialorder %v684, 0.0
        %vm827 = vcmp.gt.f32.partialorder %v687, 0.0
        %vm828 = vcmp.gt.f32.partialorder %v692, 0.0
        %vm829 = vcmp.gt.f32.partialorder %v695, 0.0
        %vm830 = vcmp.gt.f32.partialorder %v700, 0.0
        %vm831 = vcmp.gt.f32.partialorder %v703, 0.0
        %vm832 = vcmp.gt.f32.partialorder %v708, 0.0
        %vm833 = vcmp.gt.f32.partialorder %v711, 0.0
        %vm834 = vcmp.gt.f32.partialorder %v716, 0.0
        %vm835 = vcmp.gt.f32.partialorder %v719, 0.0
        %vm836 = vcmp.gt.f32.partialorder %v724, 0.0
        %vm837 = vcmp.gt.f32.partialorder %v727, 0.0
        %vm838 = vcmp.gt.f32.partialorder %v732, 0.0
        %vm839 = vcmp.gt.f32.partialorder %v735, 0.0
        %vm840 = vcmp.gt.f32.partialorder %v740, 0.0
        %vm841 = vcmp.gt.f32.partialorder %v743, 0.0
        %vm842 = vcmp.gt.f32.partialorder %v748, 0.0
        %vm843 = vcmp.gt.f32.partialorder %v751, 0.0
        %vm844 = vcmp.gt.f32.partialorder %v756, 0.0
        %vm845 = vcmp.gt.f32.partialorder %v759, 0.0
        %vm846 = vcmp.gt.f32.partialorder %v764, 0.0
        %vm847 = vcmp.gt.f32.partialorder %v767, 0.0
        %vm848 = vcmp.gt.f32.partialorder %v772, 0.0
        %vm849 = vcmp.gt.f32.partialorder %v775, 0.0
        %vm850 = vcmp.gt.f32.partialorder %v780, 0.0
        %vm851 = vcmp.gt.f32.partialorder %v783, 0.0
        %vm852 = vcmp.gt.f32.partialorder %v788, 0.0
        %vm853 = vcmp.gt.f32.partialorder %v791, 0.0
        %vm854 = vcmp.gt.f32.partialorder %v796, 0.0
        %vm855 = vcmp.gt.f32.partialorder %v799, 0.0
        %vm856 = vcmp.gt.f32.partialorder %v804, 0.0
        %vm857 = vcmp.gt.f32.partialorder %v807, 0.0
        %vm858 = vcmp.gt.f32.partialorder %v812, 0.0
        %vm859 = vcmp.gt.f32.partialorder %v815, 0.0
        %v860 = vmul.f32 %v652, 0.02
        %v861 = vmul.f32 %v655, 0.02
        %v862 = vmul.f32 %v660, 0.02
        %v863 = vmul.f32 %v663, 0.02
        %v864 = vmul.f32 %v668, 0.02
        %v865 = vmul.f32 %v671, 0.02
        %v866 = vmul.f32 %v676, 0.02
        %v867 = vmul.f32 %v679, 0.02
        %v868 = vmul.f32 %v684, 0.02
        %v869 = vmul.f32 %v687, 0.02
        %v870 = vmul.f32 %v692, 0.02
        %v871 = vmul.f32 %v695, 0.02
        %v872 = vmul.f32 %v700, 0.02
        %v873 = vmul.f32 %v703, 0.02
        %v874 = vmul.f32 %v708, 0.02
        %v875 = vmul.f32 %v711, 0.02
        %v876 = vmul.f32 %v716, 0.02
        %v877 = vmul.f32 %v719, 0.02
        %v878 = vmul.f32 %v724, 0.02
        %v879 = vmul.f32 %v727, 0.02
        %v880 = vmul.f32 %v732, 0.02
        %v881 = vmul.f32 %v735, 0.02
        %v882 = vmul.f32 %v740, 0.02
        %v883 = vmul.f32 %v743, 0.02
        %v884 = vmul.f32 %v748, 0.02
        %v885 = vmul.f32 %v751, 0.02
        %v886 = vmul.f32 %v756, 0.02
        %v887 = vmul.f32 %v759, 0.02
        %v888 = vmul.f32 %v764, 0.02
        %v889 = vmul.f32 %v767, 0.02
        %v890 = vmul.f32 %v772, 0.02
        %v891 = vmul.f32 %v775, 0.02
        %v892 = vmul.f32 %v780, 0.02
        %v893 = vmul.f32 %v783, 0.02
        %v894 = vmul.f32 %v788, 0.02
        %v895 = vmul.f32 %v791, 0.02
        %v896 = vmul.f32 %v796, 0.02
        %v897 = vmul.f32 %v799, 0.02
        %v898 = vmul.f32 %v804, 0.02
        %v899 = vmul.f32 %v807, 0.02
        %v900 = vmul.f32 %v812, 0.02
        %v901 = vmul.f32 %v815, 0.02
        %v902 = vsel %vm818, %v652, %v860
        %v903 = vsel %vm819, %v655, %v861
        %v904 = vsel %vm820, %v660, %v862
        %v905 = vsel %vm821, %v663, %v863
        %v906 = vsel %vm822, %v668, %v864
        %v907 = vsel %vm823, %v671, %v865
        %v908 = vsel %vm824, %v676, %v866
        %v909 = vsel %vm825, %v679, %v867
        %v910 = vsel %vm826, %v684, %v868
        %v911 = vsel %vm827, %v687, %v869
        %v912 = vsel %vm828, %v692, %v870
        %v913 = vsel %vm829, %v695, %v871
        %v914 = vsel %vm830, %v700, %v872
        %v915 = vsel %vm831, %v703, %v873
        %v916 = vsel %vm832, %v708, %v874
        %v917 = vsel %vm833, %v711, %v875
        %v918 = vsel %vm834, %v716, %v876
        %v919 = vsel %vm835, %v719, %v877
        %v920 = vsel %vm836, %v724, %v878
        %v921 = vsel %vm837, %v727, %v879
        %v922 = vsel %vm838, %v732, %v880
        %v923 = vsel %vm839, %v735, %v881
        %v924 = vsel %vm840, %v740, %v882
        %v925 = vsel %vm841, %v743, %v883
        %v926 = vsel %vm842, %v748, %v884
        %v927 = vsel %vm843, %v751, %v885
        %v928 = vsel %vm844, %v756, %v886
        %v929 = vsel %vm845, %v759, %v887
        %v930 = vsel %vm846, %v764, %v888
        %v931 = vsel %vm847, %v767, %v889
        %v932 = vsel %vm848, %v772, %v890
        %v933 = vsel %vm849, %v775, %v891
        %v934 = vsel %vm850, %v780, %v892
        %v935 = vsel %vm851, %v783, %v893
        %v936 = vsel %vm852, %v788, %v894
        %v937 = vsel %vm853, %v791, %v895
        %v938 = vsel %vm854, %v796, %v896
        %v939 = vsel %vm855, %v799, %v897
        %v940 = vsel %vm856, %v804, %v898
        %v941 = vsel %vm857, %v807, %v899
        %v942 = vsel %vm858, %v812, %v900
        %v943 = vsel %vm859, %v815, %v901
        %v944 = vpack.c.bf16 %v903, %v902
        %v945 = vpack.c.bf16 %v905, %v904
        %v946 = vpack.c.bf16 %v907, %v906
        %v947 = vpack.c.bf16 %v909, %v908
        %v948 = vpack.c.bf16 %v911, %v910
        %v949 = vpack.c.bf16 %v913, %v912
        %v950 = vpack.c.bf16 %v915, %v914
        %v951 = vpack.c.bf16 %v917, %v916
        %v952 = vpack.c.bf16 %v919, %v918
        %v953 = vpack.c.bf16 %v921, %v920
        %v954 = vpack.c.bf16 %v923, %v922
        %v955 = vpack.c.bf16 %v925, %v924
        %v956 = vpack.c.bf16 %v927, %v926
        %v957 = vpack.c.bf16 %v929, %v928
        %v958 = vpack.c.bf16 %v931, %v930
        %v959 = vpack.c.bf16 %v933, %v932
        %v960 = vpack.c.bf16 %v935, %v934
        %v961 = vpack.c.bf16 %v937, %v936
        %v962 = vpack.c.bf16 %v939, %v938
        %v963 = vpack.c.bf16 %v941, %v940
        %v964 = vpack.c.bf16 %v943, %v942
        %vm975 = vcmask 1043456
        %v976 = vrot.slane %v954, 4
        %v977 = vrot.slane %v955, 4
        %v978 = vsel %vm975, %v976, %v977
        %v979 = vrot.slane %v956, 4
        %v980 = vsel %vm975, %v977, %v979
        %v981 = vrot.slane %v957, 4
        %v982 = vsel %vm975, %v979, %v981
        %v983 = vrot.slane %v958, 4
        %v984 = vsel %vm975, %v981, %v983
        %v985 = vrot.slane %v959, 4
        %v986 = vsel %vm975, %v983, %v985
        %v987 = vrot.slane %v960, 4
        %v988 = vsel %vm975, %v985, %v987
        %v989 = vrot.slane %v961, 4
        %v990 = vsel %vm975, %v987, %v989
        %v991 = vrot.slane %v962, 4
        %v992 = vsel %vm975, %v989, %v991
        %v993 = vrot.slane %v963, 4
        %v994 = vsel %vm975, %v991, %v993
        %995 = vrot.lane.b32.xlu0 %v978, 32
        %v996 = vpop.permute.xlu0 %995
        %997 = vrot.lane.b32.xlu0 %v980, 32
        %v998 = vpop.permute.xlu0 %997
        %999 = vrot.lane.b32.xlu0 %v982, 32
        %v1000 = vpop.permute.xlu0 %999
        %1001 = vrot.lane.b32.xlu0 %v984, 32
        %v1002 = vpop.permute.xlu0 %1001
        %1003 = vrot.lane.b32.xlu0 %v986, 32
        %v1004 = vpop.permute.xlu0 %1003
        %1005 = vrot.lane.b32.xlu0 %v988, 32
        %v1006 = vpop.permute.xlu0 %1005
        %1007 = vrot.lane.b32.xlu0 %v990, 32
        %v1008 = vpop.permute.xlu0 %1007
        %1009 = vrot.lane.b32.xlu0 %v992, 32
        %v1010 = vpop.permute.xlu0 %1009
        %1011 = vrot.lane.b32.xlu0 %v994, 32
        %v1012 = vpop.permute.xlu0 %1011
        %vm1013 = vsmask.f32 7424
        %v1015 = vshrl.u32 %v944, 16
        %v1017 = vshll.u32 %v944, 16
        %v1019 = vrot.slane %v1017, 1
        %v1020 = vor.u32 %v1015, %v1019
        %v1022 = vshll.u32 %v945, 16
        %v1024 = vrot.slane %v1022, 1
        %v1025 = vsel %vm1013, %v1020, %v1024
        %v1026 = vshrl.u32 %v945, 16
        %v1028 = vor.u32 %v1026, %v1024
        %v1030 = vshll.u32 %v946, 16
        %v1032 = vrot.slane %v1030, 1
        %v1033 = vsel %vm1013, %v1028, %v1032
        %v1034 = vshrl.u32 %v946, 16
        %v1036 = vor.u32 %v1034, %v1032
        %v1038 = vshll.u32 %v947, 16
        %v1040 = vrot.slane %v1038, 1
        %v1041 = vsel %vm1013, %v1036, %v1040
        %v1042 = vshrl.u32 %v947, 16
        %v1044 = vor.u32 %v1042, %v1040
        %v1046 = vshll.u32 %v948, 16
        %v1048 = vrot.slane %v1046, 1
        %v1049 = vsel %vm1013, %v1044, %v1048
        %v1050 = vshrl.u32 %v948, 16
        %v1052 = vor.u32 %v1050, %v1048
        %v1054 = vshll.u32 %v949, 16
        %v1056 = vrot.slane %v1054, 1
        %v1057 = vsel %vm1013, %v1052, %v1056
        %v1058 = vshrl.u32 %v949, 16
        %v1060 = vor.u32 %v1058, %v1056
        %v1062 = vshll.u32 %v950, 16
        %v1064 = vrot.slane %v1062, 1
        %v1065 = vsel %vm1013, %v1060, %v1064
        %v1066 = vshrl.u32 %v950, 16
        %v1068 = vor.u32 %v1066, %v1064
        %v1070 = vshll.u32 %v951, 16
        %v1072 = vrot.slane %v1070, 1
        %v1073 = vsel %vm1013, %v1068, %v1072
        %v1074 = vshrl.u32 %v951, 16
        %v1076 = vor.u32 %v1074, %v1072
        %v1078 = vshll.u32 %v952, 16
        %v1080 = vrot.slane %v1078, 1
        %v1081 = vsel %vm1013, %v1076, %v1080
        %v1082 = vshrl.u32 %v952, 16
        %v1084 = vor.u32 %v1082, %v1080
        %v1086 = vshll.u32 %v953, 16
        %v1088 = vrot.slane %v1086, 1
        %v1089 = vsel %vm1013, %v1084, %v1088
        %1090 = vrot.lane.b32.xlu0 %v1025, 64
        %v1091 = vpop.permute.xlu0 %1090
        %1092 = vrot.lane.b32.xlu0 %v1033, 64
        %v1093 = vpop.permute.xlu0 %1092
        %1094 = vrot.lane.b32.xlu0 %v1041, 64
        %v1095 = vpop.permute.xlu0 %1094
        %1096 = vrot.lane.b32.xlu0 %v1049, 64
        %v1097 = vpop.permute.xlu0 %1096
        %1098 = vrot.lane.b32.xlu0 %v1057, 64
        %v1099 = vpop.permute.xlu0 %1098
        %1100 = vrot.lane.b32.xlu0 %v1065, 64
        %v1101 = vpop.permute.xlu0 %1100
        %1102 = vrot.lane.b32.xlu0 %v1073, 64
        %v1103 = vpop.permute.xlu0 %1102
        %1104 = vrot.lane.b32.xlu0 %v1081, 64
        %v1105 = vpop.permute.xlu0 %1104
        %1106 = vrot.lane.b32.xlu0 %v1089, 64
        %v1107 = vpop.permute.xlu0 %1106
        %v1118 = vrot.slane %v944, 4
        %v1119 = vrot.slane %v945, 4
        %v1120 = vsel %vm975, %v1118, %v1119
        %v1121 = vrot.slane %v946, 4
        %v1122 = vsel %vm975, %v1119, %v1121
        %v1123 = vrot.slane %v947, 4
        %v1124 = vsel %vm975, %v1121, %v1123
        %v1125 = vrot.slane %v948, 4
        %v1126 = vsel %vm975, %v1123, %v1125
        %v1127 = vrot.slane %v949, 4
        %v1128 = vsel %vm975, %v1125, %v1127
        %v1129 = vrot.slane %v950, 4
        %v1130 = vsel %vm975, %v1127, %v1129
        %v1131 = vrot.slane %v951, 4
        %v1132 = vsel %vm975, %v1129, %v1131
        %v1133 = vrot.slane %v952, 4
        %v1134 = vsel %vm975, %v1131, %v1133
        %v1135 = vrot.slane %v953, 4
        %v1136 = vsel %vm975, %v1133, %v1135
        %1137 = vrot.lane.b32.xlu0 %v1120, 96
        %v1138 = vpop.permute.xlu0 %1137
        %1139 = vrot.lane.b32.xlu0 %v1122, 96
        %v1140 = vpop.permute.xlu0 %1139
        %1141 = vrot.lane.b32.xlu0 %v1124, 96
        %v1142 = vpop.permute.xlu0 %1141
        %1143 = vrot.lane.b32.xlu0 %v1126, 96
        %v1144 = vpop.permute.xlu0 %1143
        %1145 = vrot.lane.b32.xlu0 %v1128, 96
        %v1146 = vpop.permute.xlu0 %1145
        %1147 = vrot.lane.b32.xlu0 %v1130, 96
        %v1148 = vpop.permute.xlu0 %1147
        %1149 = vrot.lane.b32.xlu0 %v1132, 96
        %v1150 = vpop.permute.xlu0 %1149
        %1151 = vrot.lane.b32.xlu0 %v1134, 96
        %v1152 = vpop.permute.xlu0 %1151
        %1153 = vrot.lane.b32.xlu0 %v1136, 96
        %v1154 = vpop.permute.xlu0 %1153
        %vm1155 = vsmask.f32 3328
        %v1156 = vrot.slane %v1015, 4
        %v1157 = vrot.slane %v1017, 5
        %v1158 = vor.u32 %v1156, %v1157
        %v1159 = vrot.slane %v1026, 4
        %v1160 = vrot.slane %v1022, 5
        %v1161 = vor.u32 %v1159, %v1160
        %v1162 = vsel %vm1155, %v1158, %v1161
        %v1163 = vrot.slane %v1034, 4
        %v1164 = vrot.slane %v1030, 5
        %v1165 = vor.u32 %v1163, %v1164
        %v1166 = vsel %vm1155, %v1161, %v1165
        %v1167 = vrot.slane %v1042, 4
        %v1168 = vrot.slane %v1038, 5
        %v1169 = vor.u32 %v1167, %v1168
        %v1170 = vsel %vm1155, %v1165, %v1169
        %v1171 = vrot.slane %v1050, 4
        %v1172 = vrot.slane %v1046, 5
        %v1173 = vor.u32 %v1171, %v1172
        %v1174 = vsel %vm1155, %v1169, %v1173
        %v1175 = vrot.slane %v1058, 4
        %v1176 = vrot.slane %v1054, 5
        %v1177 = vor.u32 %v1175, %v1176
        %v1178 = vsel %vm1155, %v1173, %v1177
        %v1179 = vrot.slane %v1066, 4
        %v1180 = vrot.slane %v1062, 5
        %v1181 = vor.u32 %v1179, %v1180
        %v1182 = vsel %vm1155, %v1177, %v1181
        %v1183 = vrot.slane %v1074, 4
        %v1184 = vrot.slane %v1070, 5
        %v1185 = vor.u32 %v1183, %v1184
        %v1186 = vsel %vm1155, %v1181, %v1185
        %v1187 = vrot.slane %v1082, 4
        %v1188 = vrot.slane %v1078, 5
        %v1189 = vor.u32 %v1187, %v1188
        %v1190 = vsel %vm1155, %v1185, %v1189
        %v1191 = vshrl.u32 %v953, 16
        %v1193 = vrot.slane %v1191, 4
        %v1194 = vrot.slane %v1086, 5
        %v1195 = vor.u32 %v1193, %v1194
        %v1196 = vsel %vm1155, %v1189, %v1195
        %1197 = vrot.lane.b32.xlu0 %v1162, 32
        %v1198 = vpop.permute.xlu0 %1197
        %1199 = vrot.lane.b32.xlu0 %v1166, 32
        %v1200 = vpop.permute.xlu0 %1199
        %1201 = vrot.lane.b32.xlu0 %v1170, 32
        %v1202 = vpop.permute.xlu0 %1201
        %1203 = vrot.lane.b32.xlu0 %v1174, 32
        %v1204 = vpop.permute.xlu0 %1203
        %1205 = vrot.lane.b32.xlu0 %v1178, 32
        %v1206 = vpop.permute.xlu0 %1205
        %1207 = vrot.lane.b32.xlu0 %v1182, 32
        %v1208 = vpop.permute.xlu0 %1207
        %1209 = vrot.lane.b32.xlu0 %v1186, 32
        %v1210 = vpop.permute.xlu0 %1209
        %1211 = vrot.lane.b32.xlu0 %v1190, 32
        %v1212 = vpop.permute.xlu0 %1211
        %1213 = vrot.lane.b32.xlu0 %v1196, 32
        %v1214 = vpop.permute.xlu0 %1213
        %1215 = vrot.lane.b32.xlu0 %v945, 64
        %v1216 = vpop.permute.xlu0 %1215
        %1217 = vrot.lane.b32.xlu0 %v946, 64
        %v1218 = vpop.permute.xlu0 %1217
        %1219 = vrot.lane.b32.xlu0 %v947, 64
        %v1220 = vpop.permute.xlu0 %1219
        %1221 = vrot.lane.b32.xlu0 %v948, 64
        %v1222 = vpop.permute.xlu0 %1221
        %1223 = vrot.lane.b32.xlu0 %v949, 64
        %v1224 = vpop.permute.xlu0 %1223
        %1225 = vrot.lane.b32.xlu0 %v950, 64
        %v1226 = vpop.permute.xlu0 %1225
        %1227 = vrot.lane.b32.xlu0 %v951, 64
        %v1228 = vpop.permute.xlu0 %1227
        %1229 = vrot.lane.b32.xlu0 %v952, 64
        %v1230 = vpop.permute.xlu0 %1229
        %1231 = vrot.lane.b32.xlu0 %v953, 64
        %v1232 = vpop.permute.xlu0 %1231
        %v1234 = vrot.slane %v964, 4
        %v1235 = vsel %vm975, %v993, %v1234
        %1236 = vrot.lane.b32.xlu0 %v980, 96
        %v1237 = vpop.permute.xlu0 %1236
        %1238 = vrot.lane.b32.xlu0 %v982, 96
        %v1239 = vpop.permute.xlu0 %1238
        %1240 = vrot.lane.b32.xlu0 %v984, 96
        %v1241 = vpop.permute.xlu0 %1240
        %1242 = vrot.lane.b32.xlu0 %v986, 96
        %v1243 = vpop.permute.xlu0 %1242
        %1244 = vrot.lane.b32.xlu0 %v988, 96
        %v1245 = vpop.permute.xlu0 %1244
        %1246 = vrot.lane.b32.xlu0 %v990, 96
        %v1247 = vpop.permute.xlu0 %1246
        %1248 = vrot.lane.b32.xlu0 %v992, 96
        %v1249 = vpop.permute.xlu0 %1248
        %1250 = vrot.lane.b32.xlu0 %v994, 96
        %v1251 = vpop.permute.xlu0 %1250
        %1252 = vrot.lane.b32.xlu0 %v1235, 96
        %v1253 = vpop.permute.xlu0 %1252
        %v1254 = vor.u32 %v1191, %v1088
        %v1256 = vshll.u32 %v954, 16
        %v1258 = vrot.slane %v1256, 1
        %v1259 = vsel %vm1013, %v1254, %v1258
        %vm1260 = vcmask 261120
        %v1262 = vsel %vm1260, %v944, %v996
        %v1264 = vsel %vm1260, %v945, %v998
        %v1266 = vsel %vm1260, %v946, %v1000
        %v1268 = vsel %vm1260, %v947, %v1002
        %v1270 = vsel %vm1260, %v948, %v1004
        %v1272 = vsel %vm1260, %v949, %v1006
        %v1274 = vsel %vm1260, %v950, %v1008
        %v1276 = vsel %vm1260, %v951, %v1010
        %v1278 = vsel %vm1260, %v952, %v1012
        %vm1279 = vcmask 523264
        %v1281 = vsel %vm1279, %v1262, %v1091
        %v1283 = vsel %vm1279, %v1264, %v1093
        %v1285 = vsel %vm1279, %v1266, %v1095
        %v1287 = vsel %vm1279, %v1268, %v1097
        %v1289 = vsel %vm1279, %v1270, %v1099
        %v1291 = vsel %vm1279, %v1272, %v1101
        %v1293 = vsel %vm1279, %v1274, %v1103
        %v1295 = vsel %vm1279, %v1276, %v1105
        %v1297 = vsel %vm1279, %v1278, %v1107
        %vm1298 = vcmask 785408
        %v1300 = vsel %vm1298, %v1281, %v1138
        %v1303 = vsel %vm1298, %v1283, %v1140
        %v1306 = vsel %vm1298, %v1285, %v1142
        %v1309 = vsel %vm1298, %v1287, %v1144
        %v1312 = vsel %vm1298, %v1289, %v1146
        %v1315 = vsel %vm1298, %v1291, %v1148
        %v1318 = vsel %vm1298, %v1293, %v1150
        %v1321 = vsel %vm1298, %v1295, %v1152
        %v1324 = vsel %vm1298, %v1297, %v1154
        %v1328 = vsel %vm1260, %v955, %v1198
        %v1331 = vsel %vm1260, %v956, %v1200
        %v1334 = vsel %vm1260, %v957, %v1202
        %v1337 = vsel %vm1260, %v958, %v1204
        %v1340 = vsel %vm1260, %v959, %v1206
        %v1343 = vsel %vm1260, %v960, %v1208
        %v1346 = vsel %vm1260, %v961, %v1210
        %v1349 = vsel %vm1260, %v962, %v1212
        %v1352 = vsel %vm1260, %v963, %v1214
        %v1354 = vsel %vm1279, %v1328, %v1216
        %v1356 = vsel %vm1279, %v1331, %v1218
        %v1358 = vsel %vm1279, %v1334, %v1220
        %v1360 = vsel %vm1279, %v1337, %v1222
        %v1362 = vsel %vm1279, %v1340, %v1224
        %v1364 = vsel %vm1279, %v1343, %v1226
        %v1366 = vsel %vm1279, %v1346, %v1228
        %v1368 = vsel %vm1279, %v1349, %v1230
        %v1370 = vsel %vm1279, %v1352, %v1232
        %v1372 = vsel %vm1298, %v1354, %v1237
        %v1375 = vsel %vm1298, %v1356, %v1239
        %v1378 = vsel %vm1298, %v1358, %v1241
        %v1381 = vsel %vm1298, %v1360, %v1243
        %v1384 = vsel %vm1298, %v1362, %v1245
        %v1387 = vsel %vm1298, %v1364, %v1247
        %v1390 = vsel %vm1298, %v1366, %v1249
        %v1393 = vsel %vm1298, %v1368, %v1251
        %v1396 = vsel %vm1298, %v1370, %v1253
        %v1398 = vld [vmem:[%s2] sm:$0xf]
        %v1399 = vld [vmem:[%s2 + $0x4] sm:$0xf]
        %v1400 = vld [vmem:[%s2 + $0x8] sm:$0xf]
        %v1401 = vld [vmem:[%s2 + $0xc] sm:$0xf]
        %v1402 = vld [vmem:[%s2 + $0x10] sm:$0xf]
        %v1403 = vld [vmem:[%s2 + $0x14] sm:$0xf]
        %v1404 = vld [vmem:[%s2 + $0x18] sm:$0xf]
        %v1405 = vld [vmem:[%s2 + $0x1c] sm:$0xf]
        %v1406 = vld [vmem:[%s2 + $0x20] sm:$0xf]
        %v1407 = vld [vmem:[%s2 + $0x24] sm:$0xf]
        %v1408 = vld [vmem:[%s2 + $0x28] sm:$0xf]
        %v1409 = vld [vmem:[%s2 + $0x2c] sm:$0xf]
        %v1410 = vld [vmem:[%s2 + $0x30] sm:$0xf]
        %v1411 = vld [vmem:[%s2 + $0x34] sm:$0xf]
        %v1412 = vld [vmem:[%s2 + $0x38] sm:$0xf]
        %v1413 = vld [vmem:[%s2 + $0x3c] sm:$0xf]
        %v1414 = vld [vmem:[%s2 + $0x40] sm:$0xf]
        %v1415 = vld [vmem:[%s2 + $0x44] sm:$0xf]
        %v1416 = vld [vmem:[%s2 + $0x48] sm:$0xf]
        %v1417 = vld [vmem:[%s2 + $0x4c] sm:$0xf]
        %v1418 = vld [vmem:[%s2 + $0x50] sm:$0xf]
        %v1419 = vld [vmem:[%s2 + $0x54] sm:$0xf]
        %v1420 = vld [vmem:[%s2 + $0x58] sm:$0xf]
        %v1421 = vld [vmem:[%s2 + $0x5c] sm:$0xf]
        %v1422 = vld [vmem:[%s2 + $0x60] sm:$0xf]
        %v1423 = vld [vmem:[%s2 + $0x64] sm:$0xf]
        %v1424 = vld [vmem:[%s2 + $0x68] sm:$0xf]
        %v1425 = vld [vmem:[%s2 + $0x6c] sm:$0xf]
        %v1426 = vld [vmem:[%s2 + $0x70] sm:$0xf]
        %v1427 = vld [vmem:[%s2 + $0x74] sm:$0xf]
        %v1428 = vld [vmem:[%s2 + $0x78] sm:$0xf]
        %v1429 = vld [vmem:[%s2 + $0x7c] sm:$0xf]
        %v1430 = vld [vmem:[%s2 + $0x80] sm:$0xf]
        %v1431 = vld [vmem:[%s2 + $0x84] sm:$0xf]
        %v1432 = vld [vmem:[%s2 + $0x88] sm:$0xf]
        %v1433 = vld [vmem:[%s2 + $0x8c] sm:$0xf]
        %v1434 = vld [vmem:[%s7] sm:$0x1]
        %v1436 = vlaneseq
        %v1437 = vshrl.u32 %v1436, 7
        %v1438 = vsub.s32 0, %v1437
        %v1439 = vrot.slane %v1434, %v1438
        %v1477 = vunpack.c.l.b16 %v1398
        %v1478 = vunpack.c.l.b16 %v1399
        %v1479 = vunpack.c.l.b16 %v1400
        %v1480 = vunpack.c.l.b16 %v1401
        %v1481 = vunpack.c.l.b16 %v1402
        %v1482 = vunpack.c.l.b16 %v1403
        %v1483 = vunpack.c.l.b16 %v1404
        %v1484 = vunpack.c.l.b16 %v1405
        %v1485 = vunpack.c.l.b16 %v1406
        %v1486 = vunpack.c.l.b16 %v1407
        %v1487 = vunpack.c.l.b16 %v1408
        %v1488 = vunpack.c.l.b16 %v1409
        %v1489 = vunpack.c.l.b16 %v1410
        %v1490 = vunpack.c.l.b16 %v1411
        %v1491 = vunpack.c.l.b16 %v1412
        %v1492 = vunpack.c.l.b16 %v1413
        %v1493 = vunpack.c.l.b16 %v1414
        %v1494 = vunpack.c.l.b16 %v1415
        %v1495 = vunpack.c.l.b16 %v1416
        %v1496 = vunpack.c.l.b16 %v1417
        %v1497 = vunpack.c.l.b16 %v1418
        %v1498 = vunpack.c.l.b16 %v1419
        %v1499 = vunpack.c.l.b16 %v1420
        %v1500 = vunpack.c.l.b16 %v1421
        %v1501 = vunpack.c.l.b16 %v1422
        %v1502 = vunpack.c.l.b16 %v1423
        %v1503 = vunpack.c.l.b16 %v1424
        %v1504 = vunpack.c.l.b16 %v1425
        %v1505 = vunpack.c.l.b16 %v1426
        %v1506 = vunpack.c.l.b16 %v1427
        %v1507 = vunpack.c.l.b16 %v1428
        %v1508 = vunpack.c.l.b16 %v1429
        %v1509 = vunpack.c.l.b16 %v1430
        %v1510 = vunpack.c.l.b16 %v1431
        %v1511 = vunpack.c.l.b16 %v1432
        %v1512 = vunpack.c.l.b16 %v1433
        %v1513 = vpack.c.b16 %v1478, %v1477
        %v1514 = vpack.c.b16 %v1480, %v1479
        %v1515 = vpack.c.b16 %v1482, %v1481
        %v1516 = vpack.c.b16 %v1484, %v1483
        %v1517 = vpack.c.b16 %v1486, %v1485
        %v1518 = vpack.c.b16 %v1488, %v1487
        %v1519 = vpack.c.b16 %v1490, %v1489
        %v1520 = vpack.c.b16 %v1492, %v1491
        %v1521 = vpack.c.b16 %v1494, %v1493
        %v1522 = vpack.c.b16 %v1496, %v1495
        %v1523 = vpack.c.b16 %v1498, %v1497
        %v1524 = vpack.c.b16 %v1500, %v1499
        %v1525 = vpack.c.b16 %v1502, %v1501
        %v1526 = vpack.c.b16 %v1504, %v1503
        %v1527 = vpack.c.b16 %v1506, %v1505
        %v1528 = vpack.c.b16 %v1508, %v1507
        %v1529 = vpack.c.b16 %v1510, %v1509
        %v1530 = vpack.c.b16 %v1512, %v1511
        %v1550 = vsel %vm1260, %v1033, 0
        %v1553 = vsel %vm1260, %v1041, 0
        %v1556 = vsel %vm1260, %v1049, 0
        %v1559 = vsel %vm1260, %v1057, 0
        %v1562 = vsel %vm1260, %v1065, 0
        %v1565 = vsel %vm1260, %v1073, 0
        %v1568 = vsel %vm1260, %v1081, 0
        %v1571 = vsel %vm1260, %v1089, 0
        %v1574 = vsel %vm1260, %v1259, 0
        %1576 = vmatprep.subr.bf16.mxu0 0
        %1577 = vmatpush1.bf16.msra.mxu0 %v1513
        %1578 = vmatprep.subr.bf16.mxu0 0
        %1579 = vmatpush1.bf16.msra.mxu0 %v1514
        %1580 = vmatprep.subr.bf16.mxu0 0
        %1581 = vmatpush1.bf16.msra.mxu0 %v1515
        %1582 = vmatprep.subr.bf16.mxu0 0
        %1583 = vmatpush1.bf16.msra.mxu0 %v1516
        %1584 = vmatprep.subr.bf16.mxu0 0
        %1585 = vmatpush1.bf16.msra.mxu0 %v1517
        %1586 = vmatprep.subr.bf16.mxu0 0
        %1587 = vmatpush1.bf16.msra.mxu0 %v1518
        %1588 = vmatprep.subr.bf16.mxu0 0
        %1589 = vmatpush1.bf16.msra.mxu0 %v1519
        %1590 = vmatprep.subr.bf16.mxu0 0
        %1591 = vmatpush1.bf16.msra.mxu0 %v1520
        %1592 = vmatprep.subr.bf16.mxu0 0
        %1593 = vmatpush1.bf16.msra.mxu0 %v1521
        %1594 = vmatprep.subr.bf16.mxu0 0
        %1595 = vmatpush1.bf16.msra.mxu0 %v1522
        %1596 = vmatprep.subr.bf16.mxu0 0
        %1597 = vmatpush1.bf16.msra.mxu0 %v1523
        %1598 = vmatprep.subr.bf16.mxu0 0
        %1599 = vmatpush1.bf16.msra.mxu0 %v1524
        %1600 = vmatprep.subr.bf16.mxu0 0
        %1601 = vmatpush1.bf16.msra.mxu0 %v1525
        %1602 = vmatprep.subr.bf16.mxu0 0
        %1603 = vmatpush1.bf16.msra.mxu0 %v1526
        %1604 = vmatprep.subr.bf16.mxu0 0
        %1605 = vmatpush1.bf16.msra.mxu0 %v1527
        %1606 = vmatprep.subr.bf16.mxu0 0
        %1607 = vmatpush1.bf16.msra.mxu0 %v1528
        %1608 = vmatprep.mubr.bf16.mxu0 %v1372
        %1609 = vmatmul.mubr.bf16.gmra.mrb[0].mxu0 %v1300
        %v1610 = vpop.f32.mrb[0].mxu0
        %v1611 = vadd.f32 %v1439, %v1610
        %v1612 = vpop.f32.mrb[0].mxu0
        %v1613 = vpop.f32.mrb[0].mxu0
        %v1614 = vadd.f32 %v1439, %v1613
        %v1615 = vpop.f32.mrb[0].mxu0
        %1616 = vmatprep.mubr.bf16.mxu0 %v1375
        %1617 = vmatmul.mubr.bf16.gmra.mrb[0].mxu0 %v1303
        %v1618 = vpop.f32.mrb[0].mxu0
        %v1619 = vadd.f32 %v1439, %v1618
        %v1620 = vpop.f32.mrb[0].mxu0
        %v1621 = vpop.f32.mrb[0].mxu0
        %v1622 = vadd.f32 %v1439, %v1621
        %v1623 = vpop.f32.mrb[0].mxu0
        %1624 = vmatprep.mubr.bf16.mxu0 %v1378
        %1625 = vmatmul.mubr.bf16.gmra.mrb[0].mxu0 %v1306
        %v1626 = vpop.f32.mrb[0].mxu0
        %v1627 = vadd.f32 %v1439, %v1626
        %v1628 = vpop.f32.mrb[0].mxu0
        %v1629 = vpop.f32.mrb[0].mxu0
        %v1630 = vadd.f32 %v1439, %v1629
        %v1631 = vpop.f32.mrb[0].mxu0
        %1632 = vmatprep.mubr.bf16.mxu0 %v1381
        %1633 = vmatmul.mubr.bf16.gmra.mrb[0].mxu0 %v1309
        %v1634 = vpop.f32.mrb[0].mxu0
        %v1635 = vadd.f32 %v1439, %v1634
        %v1636 = vpop.f32.mrb[0].mxu0
        %v1637 = vpop.f32.mrb[0].mxu0
        %v1638 = vadd.f32 %v1439, %v1637
        %v1639 = vpop.f32.mrb[0].mxu0
        %1640 = vmatprep.mubr.bf16.mxu0 %v1384
        %1641 = vmatmul.mubr.bf16.gmra.mrb[0].mxu0 %v1312
        %v1642 = vpop.f32.mrb[0].mxu0
        %v1643 = vadd.f32 %v1439, %v1642
        %v1644 = vpop.f32.mrb[0].mxu0
        %v1645 = vpop.f32.mrb[0].mxu0
        %v1646 = vadd.f32 %v1439, %v1645
        %v1647 = vpop.f32.mrb[0].mxu0
        %1648 = vmatprep.mubr.bf16.mxu0 %v1387
        %1649 = vmatmul.mubr.bf16.gmra.mrb[0].mxu0 %v1315
        %v1650 = vpop.f32.mrb[0].mxu0
        %v1651 = vadd.f32 %v1439, %v1650
        %v1652 = vpop.f32.mrb[0].mxu0
        %v1653 = vpop.f32.mrb[0].mxu0
        %v1654 = vadd.f32 %v1439, %v1653
        %v1655 = vpop.f32.mrb[0].mxu0
        %1656 = vmatprep.mubr.bf16.mxu0 %v1390
        %1657 = vmatmul.mubr.bf16.gmra.mrb[0].mxu0 %v1318
        %v1658 = vpop.f32.mrb[0].mxu0
        %v1659 = vadd.f32 %v1439, %v1658
        %v1660 = vpop.f32.mrb[0].mxu0
        %v1661 = vpop.f32.mrb[0].mxu0
        %v1662 = vadd.f32 %v1439, %v1661
        %v1663 = vpop.f32.mrb[0].mxu0
        %1664 = vmatprep.mubr.bf16.mxu0 %v1393
        %1665 = vmatmul.mubr.bf16.gmra.mrb[0].mxu0 %v1321
        %v1666 = vpop.f32.mrb[0].mxu0
        %v1667 = vadd.f32 %v1439, %v1666
        %v1668 = vpop.f32.mrb[0].mxu0
        %v1669 = vpop.f32.mrb[0].mxu0
        %v1670 = vadd.f32 %v1439, %v1669
        %v1671 = vpop.f32.mrb[0].mxu0
        %1672 = vmatprep.mubr.bf16.mxu0 %v1396
        %1673 = vmatmul.mubr.bf16.gmra.mrb[0].mxu0 %v1324
        %v1674 = vpop.f32.mrb[0].mxu0
        %v1675 = vadd.f32 %v1439, %v1674
        %v1676 = vpop.f32.mrb[0].mxu0
        %v1677 = vpop.f32.mrb[0].mxu0
        %v1678 = vadd.f32 %v1439, %v1677
        %v1679 = vpop.f32.mrb[0].mxu0
        %1680 = vdwg.mxu0
        %1681 = vmatprep.subr.bf16.mxu0 0
        %1682 = vmatpush1.bf16.msra.mxu0 %v1529
        %1683 = vmatprep.subr.bf16.mxu0 0
        %1684 = vmatpush1.bf16.msra.mxu0 %v1530
        %1685 = vmatprep.subr.bf16.mxu0 0
        %1686 = vmatpush1.bf16.msra.mxu0 0
        %1687 = vmatprep.subr.bf16.mxu0 0
        %1688 = vmatpush1.bf16.msra.mxu0 0
        %1689 = vmatprep.subr.bf16.mxu0 0
        %1690 = vmatpush1.bf16.msra.mxu0 0
        %1691 = vmatprep.subr.bf16.mxu0 0
        %1692 = vmatpush1.bf16.msra.mxu0 0
        %1693 = vmatprep.subr.bf16.mxu0 0
        %1694 = vmatpush1.bf16.msra.mxu0 0
        %1695 = vmatprep.subr.bf16.mxu0 0
        %1696 = vmatpush1.bf16.msra.mxu0 0
        %1697 = vmatprep.subr.bf16.mxu0 0
        %1698 = vmatpush1.bf16.msra.mxu0 0
        %1699 = vmatprep.subr.bf16.mxu0 0
        %1700 = vmatpush1.bf16.msra.mxu0 0
        %1701 = vmatprep.subr.bf16.mxu0 0
        %1702 = vmatpush1.bf16.msra.mxu0 0
        %1703 = vmatprep.subr.bf16.mxu0 0
        %1704 = vmatpush1.bf16.msra.mxu0 0
        %1705 = vmatprep.subr.bf16.mxu0 0
        %1706 = vmatpush1.bf16.msra.mxu0 0
        %1707 = vmatprep.subr.bf16.mxu0 0
        %1708 = vmatpush1.bf16.msra.mxu0 0
        %1709 = vmatprep.subr.bf16.mxu0 0
        %1710 = vmatpush1.bf16.msra.mxu0 0
        %1711 = vmatprep.subr.bf16.mxu0 0
        %1712 = vmatpush1.bf16.msra.mxu0 0
        %1713 = vmatprep.mubr.bf16.mxu0 0
        %1714 = vmatmul.mubr.bf16.gmra.mrb[0].mxu0 %v1550
        %v1715 = vpop.f32.mrb[0].mxu0
        %v1716 = vadd.f32 %v1611, %v1715
        %v1717 = vpop.f32.mrb[0].mxu0
        %v1718 = vpop.f32.mrb[0].mxu0
        %v1719 = vadd.f32 %v1614, %v1718
        %v1720 = vpop.f32.mrb[0].mxu0
        %1721 = vmatprep.mubr.bf16.mxu0 0
        %1722 = vmatmul.mubr.bf16.gmra.mrb[0].mxu0 %v1553
        %v1723 = vpop.f32.mrb[0].mxu0
        %v1724 = vadd.f32 %v1619, %v1723
        %v1725 = vpop.f32.mrb[0].mxu0
        %v1726 = vpop.f32.mrb[0].mxu0
        %v1727 = vadd.f32 %v1622, %v1726
        %v1728 = vpop.f32.mrb[0].mxu0
        %1729 = vmatprep.mubr.bf16.mxu0 0
        %1730 = vmatmul.mubr.bf16.gmra.mrb[0].mxu0 %v1556
        %v1731 = vpop.f32.mrb[0].mxu0
        %v1732 = vadd.f32 %v1627, %v1731
        %v1733 = vpop.f32.mrb[0].mxu0
        %v1734 = vpop.f32.mrb[0].mxu0
        %v1735 = vadd.f32 %v1630, %v1734
        %v1736 = vpop.f32.mrb[0].mxu0
        %1737 = vmatprep.mubr.bf16.mxu0 0
        %1738 = vmatmul.mubr.bf16.gmra.mrb[0].mxu0 %v1559
        %v1739 = vpop.f32.mrb[0].mxu0
        %v1740 = vadd.f32 %v1635, %v1739
        %v1741 = vpop.f32.mrb[0].mxu0
        %v1742 = vpop.f32.mrb[0].mxu0
        %v1743 = vadd.f32 %v1638, %v1742
        %v1744 = vpop.f32.mrb[0].mxu0
        %1745 = vmatprep.mubr.bf16.mxu0 0
        %1746 = vmatmul.mubr.bf16.gmra.mrb[0].mxu0 %v1562
        %v1747 = vpop.f32.mrb[0].mxu0
        %v1748 = vadd.f32 %v1643, %v1747
        %v1749 = vpop.f32.mrb[0].mxu0
        %v1750 = vpop.f32.mrb[0].mxu0
        %v1751 = vadd.f32 %v1646, %v1750
        %v1752 = vpop.f32.mrb[0].mxu0
        %1753 = vmatprep.mubr.bf16.mxu0 0
        %1754 = vmatmul.mubr.bf16.gmra.mrb[0].mxu0 %v1565
        %v1755 = vpop.f32.mrb[0].mxu0
        %v1756 = vadd.f32 %v1651, %v1755
        %v1757 = vpop.f32.mrb[0].mxu0
        %v1758 = vpop.f32.mrb[0].mxu0
        %v1759 = vadd.f32 %v1654, %v1758
        %v1760 = vpop.f32.mrb[0].mxu0
        %1761 = vmatprep.mubr.bf16.mxu0 0
        %1762 = vmatmul.mubr.bf16.gmra.mrb[0].mxu0 %v1568
        %v1763 = vpop.f32.mrb[0].mxu0
        %v1764 = vadd.f32 %v1659, %v1763
        %v1765 = vpop.f32.mrb[0].mxu0
        %v1766 = vpop.f32.mrb[0].mxu0
        %v1767 = vadd.f32 %v1662, %v1766
        %v1768 = vpop.f32.mrb[0].mxu0
        %1769 = vmatprep.mubr.bf16.mxu0 0
        %1770 = vmatmul.mubr.bf16.gmra.mrb[0].mxu0 %v1571
        %v1771 = vpop.f32.mrb[0].mxu0
        %v1772 = vadd.f32 %v1667, %v1771
        %v1773 = vpop.f32.mrb[0].mxu0
        %v1774 = vpop.f32.mrb[0].mxu0
        %v1775 = vadd.f32 %v1670, %v1774
        %v1776 = vpop.f32.mrb[0].mxu0
        %1777 = vmatprep.mubr.bf16.mxu0 0
        %1778 = vmatmul.mubr.bf16.gmra.mrb[0].mxu0 %v1574
        %v1779 = vpop.f32.mrb[0].mxu0
        %v1780 = vadd.f32 %v1675, %v1779
        %v1781 = vpop.f32.mrb[0].mxu0
        %v1782 = vpop.f32.mrb[0].mxu0
        %v1783 = vadd.f32 %v1678, %v1782
        %v1784 = vpop.f32.mrb[0].mxu0
        %1785 = vdwg.mxu0
        %vm1786 = vcmp.gt.f32.partialorder %v1716, 0.0
        %vm1787 = vcmp.gt.f32.partialorder %v1719, 0.0
        %vm1788 = vcmp.gt.f32.partialorder %v1724, 0.0
        %vm1789 = vcmp.gt.f32.partialorder %v1727, 0.0
        %vm1790 = vcmp.gt.f32.partialorder %v1732, 0.0
        %vm1791 = vcmp.gt.f32.partialorder %v1735, 0.0
        %vm1792 = vcmp.gt.f32.partialorder %v1740, 0.0
        %vm1793 = vcmp.gt.f32.partialorder %v1743, 0.0
        %vm1794 = vcmp.gt.f32.partialorder %v1748, 0.0
        %vm1795 = vcmp.gt.f32.partialorder %v1751, 0.0
        %vm1796 = vcmp.gt.f32.partialorder %v1756, 0.0
        %vm1797 = vcmp.gt.f32.partialorder %v1759, 0.0
        %vm1798 = vcmp.gt.f32.partialorder %v1764, 0.0
        %vm1799 = vcmp.gt.f32.partialorder %v1767, 0.0
        %vm1800 = vcmp.gt.f32.partialorder %v1772, 0.0
        %vm1801 = vcmp.gt.f32.partialorder %v1775, 0.0
        %vm1802 = vcmp.gt.f32.partialorder %v1780, 0.0
        %vm1803 = vcmp.gt.f32.partialorder %v1783, 0.0
        %v1804 = vmul.f32 %v1716, 0.02
        %v1805 = vmul.f32 %v1719, 0.02
        %v1806 = vmul.f32 %v1724, 0.02
        %v1807 = vmul.f32 %v1727, 0.02
        %v1808 = vmul.f32 %v1732, 0.02
        %v1809 = vmul.f32 %v1735, 0.02
        %v1810 = vmul.f32 %v1740, 0.02
        %v1811 = vmul.f32 %v1743, 0.02
        %v1812 = vmul.f32 %v1748, 0.02
        %v1813 = vmul.f32 %v1751, 0.02
        %v1814 = vmul.f32 %v1756, 0.02
        %v1815 = vmul.f32 %v1759, 0.02
        %v1816 = vmul.f32 %v1764, 0.02
        %v1817 = vmul.f32 %v1767, 0.02
        %v1818 = vmul.f32 %v1772, 0.02
        %v1819 = vmul.f32 %v1775, 0.02
        %v1820 = vmul.f32 %v1780, 0.02
        %v1821 = vmul.f32 %v1783, 0.02
        %v1822 = vsel %vm1786, %v1716, %v1804
        %v1823 = vsel %vm1787, %v1719, %v1805
        %v1824 = vsel %vm1788, %v1724, %v1806
        %v1825 = vsel %vm1789, %v1727, %v1807
        %v1826 = vsel %vm1790, %v1732, %v1808
        %v1827 = vsel %vm1791, %v1735, %v1809
        %v1828 = vsel %vm1792, %v1740, %v1810
        %v1829 = vsel %vm1793, %v1743, %v1811
        %v1830 = vsel %vm1794, %v1748, %v1812
        %v1831 = vsel %vm1795, %v1751, %v1813
        %v1832 = vsel %vm1796, %v1756, %v1814
        %v1833 = vsel %vm1797, %v1759, %v1815
        %v1834 = vsel %vm1798, %v1764, %v1816
        %v1835 = vsel %vm1799, %v1767, %v1817
        %v1836 = vsel %vm1800, %v1772, %v1818
        %v1837 = vsel %vm1801, %v1775, %v1819
        %v1838 = vsel %vm1802, %v1780, %v1820
        %v1839 = vsel %vm1803, %v1783, %v1821
        %v1840 = vpack.c.bf16 %v1823, %v1822
        %v1841 = vpack.c.bf16 %v1825, %v1824
        %v1842 = vpack.c.bf16 %v1827, %v1826
        %v1843 = vpack.c.bf16 %v1829, %v1828
        %v1844 = vpack.c.bf16 %v1831, %v1830
        %v1845 = vpack.c.bf16 %v1833, %v1832
        %v1846 = vpack.c.bf16 %v1835, %v1834
        %v1847 = vpack.c.bf16 %v1837, %v1836
        %v1848 = vpack.c.bf16 %v1839, %v1838
        %v1850 = vshrl.u32 %v1840, 16
        %v1852 = vshll.u32 %v1840, 16
        %v1854 = vrot.slane %v1852, 1
        %v1855 = vor.u32 %v1850, %v1854
        %v1857 = vshll.u32 %v1841, 16
        %v1859 = vrot.slane %v1857, 1
        %v1860 = vsel %vm1013, %v1855, %v1859
        %v1861 = vshrl.u32 %v1841, 16
        %v1863 = vor.u32 %v1861, %v1859
        %v1865 = vshll.u32 %v1842, 16
        %v1867 = vrot.slane %v1865, 1
        %v1868 = vsel %vm1013, %v1863, %v1867
        %v1869 = vshrl.u32 %v1842, 16
        %v1871 = vor.u32 %v1869, %v1867
        %v1873 = vshll.u32 %v1843, 16
        %v1875 = vrot.slane %v1873, 1
        %v1876 = vsel %vm1013, %v1871, %v1875
        %v1877 = vshrl.u32 %v1843, 16
        %v1879 = vor.u32 %v1877, %v1875
        %v1881 = vshll.u32 %v1844, 16
        %v1883 = vrot.slane %v1881, 1
        %v1884 = vsel %vm1013, %v1879, %v1883
        %v1885 = vshrl.u32 %v1844, 16
        %v1887 = vor.u32 %v1885, %v1883
        %v1889 = vshll.u32 %v1845, 16
        %v1891 = vrot.slane %v1889, 1
        %v1892 = vsel %vm1013, %v1887, %v1891
        %v1893 = vshrl.u32 %v1845, 16
        %v1895 = vor.u32 %v1893, %v1891
        %v1897 = vshll.u32 %v1846, 16
        %v1899 = vrot.slane %v1897, 1
        %v1900 = vsel %vm1013, %v1895, %v1899
        %1901 = vrot.lane.b32.xlu0 %v1860, 64
        %v1902 = vpop.permute.xlu0 %1901
        %1903 = vrot.lane.b32.xlu0 %v1868, 64
        %v1904 = vpop.permute.xlu0 %1903
        %1905 = vrot.lane.b32.xlu0 %v1876, 64
        %v1906 = vpop.permute.xlu0 %1905
        %1907 = vrot.lane.b32.xlu0 %v1884, 64
        %v1908 = vpop.permute.xlu0 %1907
        %1909 = vrot.lane.b32.xlu0 %v1892, 64
        %v1910 = vpop.permute.xlu0 %1909
        %1911 = vrot.lane.b32.xlu0 %v1900, 64
        %v1912 = vpop.permute.xlu0 %1911
        %vm1920 = vcmask 1046528
        %v1921 = vrot.slane %v1840, 1
        %v1922 = vrot.slane %v1841, 1
        %v1923 = vsel %vm1920, %v1921, %v1922
        %v1924 = vrot.slane %v1842, 1
        %v1925 = vsel %vm1920, %v1922, %v1924
        %v1926 = vrot.slane %v1843, 1
        %v1927 = vsel %vm1920, %v1924, %v1926
        %v1928 = vrot.slane %v1844, 1
        %v1929 = vsel %vm1920, %v1926, %v1928
        %v1930 = vrot.slane %v1845, 1
        %v1931 = vsel %vm1920, %v1928, %v1930
        %v1932 = vrot.slane %v1846, 1
        %v1933 = vsel %vm1920, %v1930, %v1932
        %1934 = vrot.lane.b32.xlu0 %v1841, 64
        %v1935 = vpop.permute.xlu0 %1934
        %1936 = vrot.lane.b32.xlu0 %v1842, 64
        %v1937 = vpop.permute.xlu0 %1936
        %1938 = vrot.lane.b32.xlu0 %v1843, 64
        %v1939 = vpop.permute.xlu0 %1938
        %1940 = vrot.lane.b32.xlu0 %v1844, 64
        %v1941 = vpop.permute.xlu0 %1940
        %1942 = vrot.lane.b32.xlu0 %v1845, 64
        %v1943 = vpop.permute.xlu0 %1942
        %1944 = vrot.lane.b32.xlu0 %v1846, 64
        %v1945 = vpop.permute.xlu0 %1944
        %v1946 = vshrl.u32 %v1846, 16
        %v1948 = vor.u32 %v1946, %v1899
        %v1950 = vshll.u32 %v1847, 16
        %v1952 = vrot.slane %v1950, 1
        %v1953 = vsel %vm1013, %v1948, %v1952
        %v1955 = vrot.slane %v1847, 1
        %v1956 = vsel %vm1920, %v1932, %v1955
        %1957 = vrot.lane.b32.xlu0 %v1925, 64
        %v1958 = vpop.permute.xlu0 %1957
        %1959 = vrot.lane.b32.xlu0 %v1927, 64
        %v1960 = vpop.permute.xlu0 %1959
        %1961 = vrot.lane.b32.xlu0 %v1929, 64
        %v1962 = vpop.permute.xlu0 %1961
        %1963 = vrot.lane.b32.xlu0 %v1931, 64
        %v1964 = vpop.permute.xlu0 %1963
        %1965 = vrot.lane.b32.xlu0 %v1933, 64
        %v1966 = vpop.permute.xlu0 %1965
        %1967 = vrot.lane.b32.xlu0 %v1956, 64
        %v1968 = vpop.permute.xlu0 %1967
        %v1969 = vshrl.u32 %v1847, 16
        %v1971 = vor.u32 %v1969, %v1952
        %v1973 = vshll.u32 %v1848, 16
        %v1975 = vrot.slane %v1973, 1
        %v1976 = vsel %vm1013, %v1971, %v1975
        %1977 = vrot.lane.b32.xlu0 %v1953, 64
        %v1978 = vpop.permute.xlu0 %1977
        %1979 = vrot.lane.b32.xlu0 %v1976, 64
        %v1980 = vpop.permute.xlu0 %1979
        %v1982 = vrot.slane %v1848, 1
        %v1983 = vsel %vm1920, %v1955, %v1982
        %v1985 = vsel %vm1279, %v1840, %v1902
        %v1988 = vsel %vm1279, %v1841, %v1904
        %v1991 = vsel %vm1279, %v1842, %v1906
        %v1994 = vsel %vm1279, %v1843, %v1908
        %v1997 = vsel %vm1279, %v1844, %v1910
        %v2000 = vsel %vm1279, %v1845, %v1912
        %v2004 = vsel %vm1279, %v1923, %v1935
        %v2008 = vsel %vm1279, %v1925, %v1937
        %v2012 = vsel %vm1279, %v1927, %v1939
        %v2016 = vsel %vm1279, %v1929, %v1941
        %v2020 = vsel %vm1279, %v1931, %v1943
        %v2024 = vsel %vm1279, %v1933, %v1945
        %v2028 = vsel %vm1279, %v1868, %v1958
        %v2032 = vsel %vm1279, %v1876, %v1960
        %v2036 = vsel %vm1279, %v1884, %v1962
        %v2040 = vsel %vm1279, %v1892, %v1964
        %v2044 = vsel %vm1279, %v1900, %v1966
        %v2048 = vsel %vm1279, %v1953, %v1968
        %v2051 = vsel %vm1279, %v1846, %v1978
        %v2054 = vsel %vm1279, %v1847, %v1980
        %v2056 = vld [vmem:[%s3] sm:$0xf]
        %v2057 = vld [vmem:[%s3 + $0x4] sm:$0xf]
        %v2058 = vld [vmem:[%s3 + $0x8] sm:$0xf]
        %v2059 = vld [vmem:[%s3 + $0xc] sm:$0xf]
        %v2060 = vld [vmem:[%s3 + $0x10] sm:$0xf]
        %v2061 = vld [vmem:[%s3 + $0x14] sm:$0xf]
        %v2062 = vld [vmem:[%s3 + $0x18] sm:$0xf]
        %v2063 = vld [vmem:[%s3 + $0x1c] sm:$0xf]
        %v2064 = vld [vmem:[%s3 + $0x20] sm:$0xf]
        %v2065 = vld [vmem:[%s3 + $0x24] sm:$0xf]
        %v2066 = vld [vmem:[%s3 + $0x28] sm:$0xf]
        %v2067 = vld [vmem:[%s3 + $0x2c] sm:$0xf]
        %v2068 = vld [vmem:[%s3 + $0x30] sm:$0xf]
        %v2069 = vld [vmem:[%s3 + $0x34] sm:$0xf]
        %v2070 = vld [vmem:[%s3 + $0x38] sm:$0xf]
        %v2071 = vld [vmem:[%s3 + $0x3c] sm:$0xf]
        %v2072 = vld [vmem:[%s3 + $0x40] sm:$0xf]
        %v2073 = vld [vmem:[%s3 + $0x44] sm:$0xf]
        %v2074 = vld [vmem:[%s3 + $0x48] sm:$0xf]
        %v2075 = vld [vmem:[%s3 + $0x4c] sm:$0xf]
        %v2076 = vld [vmem:[%s3 + $0x50] sm:$0xf]
        %v2077 = vld [vmem:[%s3 + $0x54] sm:$0xf]
        %v2078 = vld [vmem:[%s3 + $0x58] sm:$0xf]
        %v2079 = vld [vmem:[%s3 + $0x5c] sm:$0xf]
        %v2080 = vld [vmem:[%s3 + $0x60] sm:$0xf]
        %v2081 = vld [vmem:[%s3 + $0x64] sm:$0xf]
        %v2082 = vld [vmem:[%s3 + $0x68] sm:$0xf]
        %v2083 = vld [vmem:[%s3 + $0x6c] sm:$0xf]
        %v2084 = vld [vmem:[%s3 + $0x70] sm:$0xf]
        %v2085 = vld [vmem:[%s3 + $0x74] sm:$0xf]
        %v2086 = vld [vmem:[%s3 + $0x78] sm:$0xf]
        %v2087 = vld [vmem:[%s3 + $0x7c] sm:$0xf]
        %v2088 = vld [vmem:[%s3 + $0x80] sm:$0xf]
        %v2089 = vld [vmem:[%s3 + $0x84] sm:$0xf]
        %v2090 = vld [vmem:[%s3 + $0x88] sm:$0xf]
        %v2091 = vld [vmem:[%s3 + $0x8c] sm:$0xf]
        %v2092 = vld [vmem:[%s3 + $0x90] sm:$0xf]
        %v2093 = vld [vmem:[%s3 + $0x94] sm:$0xf]
        %v2094 = vld [vmem:[%s3 + $0x98] sm:$0xf]
        %v2095 = vld [vmem:[%s3 + $0x9c] sm:$0xf]
        %v2096 = vld [vmem:[%s3 + $0xa0] sm:$0xf]
        %v2097 = vld [vmem:[%s3 + $0xa4] sm:$0xf]
        %v2098 = vld [vmem:[%s3 + $0xa8] sm:$0xf]
        %v2099 = vld [vmem:[%s3 + $0xac] sm:$0xf]
        %v2100 = vld [vmem:[%s3 + $0xb0] sm:$0xf]
        %v2101 = vld [vmem:[%s3 + $0xb4] sm:$0xf]
        %v2102 = vld [vmem:[%s3 + $0xb8] sm:$0xf]
        %v2103 = vld [vmem:[%s3 + $0xbc] sm:$0xf]
        %v2104 = vld [vmem:[%s3 + $0xc0] sm:$0xf]
        %v2105 = vld [vmem:[%s3 + $0xc4] sm:$0xf]
        %v2106 = vld [vmem:[%s3 + $0xc8] sm:$0xf]
        %v2107 = vld [vmem:[%s3 + $0xcc] sm:$0xf]
        %v2108 = vld [vmem:[%s3 + $0xd0] sm:$0xf]
        %v2109 = vld [vmem:[%s3 + $0xd4] sm:$0xf]
        %v2110 = vld [vmem:[%s3 + $0xd8] sm:$0xf]
        %v2111 = vld [vmem:[%s3 + $0xdc] sm:$0xf]
        %v2112 = vld [vmem:[%s3 + $0xe0] sm:$0xf]
        %v2113 = vld [vmem:[%s3 + $0xe4] sm:$0xf]
        %v2114 = vld [vmem:[%s3 + $0xe8] sm:$0xf]
        %v2115 = vld [vmem:[%s3 + $0xec] sm:$0xf]
        %v2116 = vld [vmem:[%s3 + $0xf0] sm:$0xf]
        %v2117 = vld [vmem:[%s3 + $0xf4] sm:$0xf]
        %v2118 = vld [vmem:[%s3 + $0xf8] sm:$0xf]
        %v2119 = vld [vmem:[%s3 + $0xfc] sm:$0xf]
        %v2120 = vld [vmem:[%s3 + $0x100] sm:$0xf]
        %v2121 = vld [vmem:[%s3 + $0x104] sm:$0xf]
        %v2122 = vld [vmem:[%s3 + $0x108] sm:$0xf]
        %v2123 = vld [vmem:[%s3 + $0x10c] sm:$0xf]
        %v2124 = vld [vmem:[%s3 + $0x110] sm:$0xf]
        %v2125 = vld [vmem:[%s3 + $0x114] sm:$0xf]
        %v2126 = vld [vmem:[%s3 + $0x118] sm:$0xf]
        %v2127 = vld [vmem:[%s3 + $0x11c] sm:$0xf]
        %v2128 = vld [vmem:[%s8] sm:$0x1]
        %v2130 = vlaneseq
        %v2131 = vshrl.u32 %v2130, 7
        %v2132 = vsub.s32 0, %v2131
        %v2133 = vrot.slane %v2128, %v2132
        %v2207 = vunpack.c.l.b16 %v2056
        %v2208 = vunpack.c.l.b16 %v2057
        %v2209 = vunpack.c.l.b16 %v2058
        %v2210 = vunpack.c.l.b16 %v2059
        %v2211 = vunpack.c.l.b16 %v2060
        %v2212 = vunpack.c.l.b16 %v2061
        %v2213 = vunpack.c.l.b16 %v2062
        %v2214 = vunpack.c.l.b16 %v2063
        %v2215 = vunpack.c.l.b16 %v2064
        %v2216 = vunpack.c.l.b16 %v2065
        %v2217 = vunpack.c.l.b16 %v2066
        %v2218 = vunpack.c.l.b16 %v2067
        %v2219 = vunpack.c.l.b16 %v2068
        %v2220 = vunpack.c.l.b16 %v2069
        %v2221 = vunpack.c.l.b16 %v2070
        %v2222 = vunpack.c.l.b16 %v2071
        %v2223 = vunpack.c.l.b16 %v2072
        %v2224 = vunpack.c.l.b16 %v2073
        %v2225 = vunpack.c.l.b16 %v2074
        %v2226 = vunpack.c.l.b16 %v2075
        %v2227 = vunpack.c.l.b16 %v2076
        %v2228 = vunpack.c.l.b16 %v2077
        %v2229 = vunpack.c.l.b16 %v2078
        %v2230 = vunpack.c.l.b16 %v2079
        %v2231 = vunpack.c.l.b16 %v2080
        %v2232 = vunpack.c.l.b16 %v2081
        %v2233 = vunpack.c.l.b16 %v2082
        %v2234 = vunpack.c.l.b16 %v2083
        %v2235 = vunpack.c.l.b16 %v2084
        %v2236 = vunpack.c.l.b16 %v2085
        %v2237 = vunpack.c.l.b16 %v2086
        %v2238 = vunpack.c.l.b16 %v2087
        %v2239 = vunpack.c.l.b16 %v2088
        %v2240 = vunpack.c.l.b16 %v2089
        %v2241 = vunpack.c.l.b16 %v2090
        %v2242 = vunpack.c.l.b16 %v2091
        %v2243 = vunpack.c.l.b16 %v2092
        %v2244 = vunpack.c.l.b16 %v2093
        %v2245 = vunpack.c.l.b16 %v2094
        %v2246 = vunpack.c.l.b16 %v2095
        %v2247 = vunpack.c.l.b16 %v2096
        %v2248 = vunpack.c.l.b16 %v2097
        %v2249 = vunpack.c.l.b16 %v2098
        %v2250 = vunpack.c.l.b16 %v2099
        %v2251 = vunpack.c.l.b16 %v2100
        %v2252 = vunpack.c.l.b16 %v2101
        %v2253 = vunpack.c.l.b16 %v2102
        %v2254 = vunpack.c.l.b16 %v2103
        %v2255 = vunpack.c.l.b16 %v2104
        %v2256 = vunpack.c.l.b16 %v2105
        %v2257 = vunpack.c.l.b16 %v2106
        %v2258 = vunpack.c.l.b16 %v2107
        %v2259 = vunpack.c.l.b16 %v2108
        %v2260 = vunpack.c.l.b16 %v2109
        %v2261 = vunpack.c.l.b16 %v2110
        %v2262 = vunpack.c.l.b16 %v2111
        %v2263 = vunpack.c.l.b16 %v2112
        %v2264 = vunpack.c.l.b16 %v2113
        %v2265 = vunpack.c.l.b16 %v2114
        %v2266 = vunpack.c.l.b16 %v2115
        %v2267 = vunpack.c.l.b16 %v2116
        %v2268 = vunpack.c.l.b16 %v2117
        %v2269 = vunpack.c.l.b16 %v2118
        %v2270 = vunpack.c.l.b16 %v2119
        %v2271 = vunpack.c.l.b16 %v2120
        %v2272 = vunpack.c.l.b16 %v2121
        %v2273 = vunpack.c.l.b16 %v2122
        %v2274 = vunpack.c.l.b16 %v2123
        %v2275 = vunpack.c.l.b16 %v2124
        %v2276 = vunpack.c.l.b16 %v2125
        %v2277 = vunpack.c.l.b16 %v2126
        %v2278 = vunpack.c.l.b16 %v2127
        %v2279 = vpack.c.b16 %v2208, %v2207
        %v2280 = vpack.c.b16 %v2210, %v2209
        %v2281 = vpack.c.b16 %v2212, %v2211
        %v2282 = vpack.c.b16 %v2214, %v2213
        %v2283 = vpack.c.b16 %v2216, %v2215
        %v2284 = vpack.c.b16 %v2218, %v2217
        %v2285 = vpack.c.b16 %v2220, %v2219
        %v2286 = vpack.c.b16 %v2222, %v2221
        %v2287 = vpack.c.b16 %v2224, %v2223
        %v2288 = vpack.c.b16 %v2226, %v2225
        %v2289 = vpack.c.b16 %v2228, %v2227
        %v2290 = vpack.c.b16 %v2230, %v2229
        %v2291 = vpack.c.b16 %v2232, %v2231
        %v2292 = vpack.c.b16 %v2234, %v2233
        %v2293 = vpack.c.b16 %v2236, %v2235
        %v2294 = vpack.c.b16 %v2238, %v2237
        %v2295 = vpack.c.b16 %v2240, %v2239
        %v2296 = vpack.c.b16 %v2242, %v2241
        %v2297 = vpack.c.b16 %v2244, %v2243
        %v2298 = vpack.c.b16 %v2246, %v2245
        %v2299 = vpack.c.b16 %v2248, %v2247
        %v2300 = vpack.c.b16 %v2250, %v2249
        %v2301 = vpack.c.b16 %v2252, %v2251
        %v2302 = vpack.c.b16 %v2254, %v2253
        %v2303 = vpack.c.b16 %v2256, %v2255
        %v2304 = vpack.c.b16 %v2258, %v2257
        %v2305 = vpack.c.b16 %v2260, %v2259
        %v2306 = vpack.c.b16 %v2262, %v2261
        %v2307 = vpack.c.b16 %v2264, %v2263
        %v2308 = vpack.c.b16 %v2266, %v2265
        %v2309 = vpack.c.b16 %v2268, %v2267
        %v2310 = vpack.c.b16 %v2270, %v2269
        %v2311 = vpack.c.b16 %v2272, %v2271
        %v2312 = vpack.c.b16 %v2274, %v2273
        %v2313 = vpack.c.b16 %v2276, %v2275
        %v2314 = vpack.c.b16 %v2278, %v2277
        %v2351 = vsel %vm1279, %v1927, 0
        %v2353 = vsel %vm1279, %v1929, 0
        %v2355 = vsel %vm1279, %v1931, 0
        %v2357 = vsel %vm1279, %v1933, 0
        %v2360 = vsel %vm1279, %v1956, 0
        %v2363 = vsel %vm1279, %v1983, 0
        %2365 = vmatprep.subr.bf16.mxu0 0
        %2366 = vmatpush1.bf16.msra.mxu0 %v2279
        %2367 = vmatprep.subr.bf16.mxu0 0
        %2368 = vmatpush1.bf16.msra.mxu0 %v2280
        %2369 = vmatprep.subr.bf16.mxu0 0
        %2370 = vmatpush1.bf16.msra.mxu0 %v2281
        %2371 = vmatprep.subr.bf16.mxu0 0
        %2372 = vmatpush1.bf16.msra.mxu0 %v2282
        %2373 = vmatprep.subr.bf16.mxu0 0
        %2374 = vmatpush1.bf16.msra.mxu0 %v2283
        %2375 = vmatprep.subr.bf16.mxu0 0
        %2376 = vmatpush1.bf16.msra.mxu0 %v2284
        %2377 = vmatprep.subr.bf16.mxu0 0
        %2378 = vmatpush1.bf16.msra.mxu0 %v2285
        %2379 = vmatprep.subr.bf16.mxu0 0
        %2380 = vmatpush1.bf16.msra.mxu0 %v2286
        %2381 = vmatprep.subr.bf16.mxu0 0
        %2382 = vmatpush1.bf16.msra.mxu0 %v2287
        %2383 = vmatprep.subr.bf16.mxu0 0
        %2384 = vmatpush1.bf16.msra.mxu0 %v2288
        %2385 = vmatprep.subr.bf16.mxu0 0
        %2386 = vmatpush1.bf16.msra.mxu0 %v2289
        %2387 = vmatprep.subr.bf16.mxu0 0
        %2388 = vmatpush1.bf16.msra.mxu0 %v2290
        %2389 = vmatprep.subr.bf16.mxu0 0
        %2390 = vmatpush1.bf16.msra.mxu0 %v2291
        %2391 = vmatprep.subr.bf16.mxu0 0
        %2392 = vmatpush1.bf16.msra.mxu0 %v2292
        %2393 = vmatprep.subr.bf16.mxu0 0
        %2394 = vmatpush1.bf16.msra.mxu0 %v2293
        %2395 = vmatprep.subr.bf16.mxu0 0
        %2396 = vmatpush1.bf16.msra.mxu0 %v2294
        %2397 = vmatprep.mubr.bf16.mxu0 %v2004
        %2398 = vmatmul.mubr.bf16.gmra.mrb[0].mxu0 %v1985
        %v2399 = vpop.f32.mrb[0].mxu0
        %v2400 = vadd.f32 %v2133, %v2399
        %v2401 = vpop.f32.mrb[0].mxu0
        %v2402 = vpop.f32.mrb[0].mxu0
        %v2403 = vadd.f32 %v2133, %v2402
        %v2404 = vpop.f32.mrb[0].mxu0
        %2405 = vmatprep.mubr.bf16.mxu0 %v2008
        %2406 = vmatmul.mubr.bf16.gmra.mrb[0].mxu0 %v1988
        %v2407 = vpop.f32.mrb[0].mxu0
        %v2408 = vadd.f32 %v2133, %v2407
        %v2409 = vpop.f32.mrb[0].mxu0
        %v2410 = vpop.f32.mrb[0].mxu0
        %v2411 = vadd.f32 %v2133, %v2410
        %v2412 = vpop.f32.mrb[0].mxu0
        %2413 = vmatprep.mubr.bf16.mxu0 %v2012
        %2414 = vmatmul.mubr.bf16.gmra.mrb[0].mxu0 %v1991
        %v2415 = vpop.f32.mrb[0].mxu0
        %v2416 = vadd.f32 %v2133, %v2415
        %v2417 = vpop.f32.mrb[0].mxu0
        %v2418 = vpop.f32.mrb[0].mxu0
        %v2419 = vadd.f32 %v2133, %v2418
        %v2420 = vpop.f32.mrb[0].mxu0
        %2421 = vmatprep.mubr.bf16.mxu0 %v2016
        %2422 = vmatmul.mubr.bf16.gmra.mrb[0].mxu0 %v1994
        %v2423 = vpop.f32.mrb[0].mxu0
        %v2424 = vadd.f32 %v2133, %v2423
        %v2425 = vpop.f32.mrb[0].mxu0
        %v2426 = vpop.f32.mrb[0].mxu0
        %v2427 = vadd.f32 %v2133, %v2426
        %v2428 = vpop.f32.mrb[0].mxu0
        %2429 = vmatprep.mubr.bf16.mxu0 %v2020
        %2430 = vmatmul.mubr.bf16.gmra.mrb[0].mxu0 %v1997
        %v2431 = vpop.f32.mrb[0].mxu0
        %v2432 = vadd.f32 %v2133, %v2431
        %v2433 = vpop.f32.mrb[0].mxu0
        %v2434 = vpop.f32.mrb[0].mxu0
        %v2435 = vadd.f32 %v2133, %v2434
        %v2436 = vpop.f32.mrb[0].mxu0
        %2437 = vmatprep.mubr.bf16.mxu0 %v2024
        %2438 = vmatmul.mubr.bf16.gmra.mrb[0].mxu0 %v2000
        %v2439 = vpop.f32.mrb[0].mxu0
        %v2440 = vadd.f32 %v2133, %v2439
        %v2441 = vpop.f32.mrb[0].mxu0
        %v2442 = vpop.f32.mrb[0].mxu0
        %v2443 = vadd.f32 %v2133, %v2442
        %v2444 = vpop.f32.mrb[0].mxu0
        %2445 = vdwg.mxu0
        %2446 = vmatprep.subr.bf16.mxu0 0
        %2447 = vmatpush1.bf16.msra.mxu0 %v2295
        %2448 = vmatprep.subr.bf16.mxu0 0
        %2449 = vmatpush1.bf16.msra.mxu0 %v2296
        %2450 = vmatprep.subr.bf16.mxu0 0
        %2451 = vmatpush1.bf16.msra.mxu0 %v2297
        %2452 = vmatprep.subr.bf16.mxu0 0
        %2453 = vmatpush1.bf16.msra.mxu0 %v2298
        %2454 = vmatprep.subr.bf16.mxu0 0
        %2455 = vmatpush1.bf16.msra.mxu0 %v2299
        %2456 = vmatprep.subr.bf16.mxu0 0
        %2457 = vmatpush1.bf16.msra.mxu0 %v2300
        %2458 = vmatprep.subr.bf16.mxu0 0
        %2459 = vmatpush1.bf16.msra.mxu0 %v2301
        %2460 = vmatprep.subr.bf16.mxu0 0
        %2461 = vmatpush1.bf16.msra.mxu0 %v2302
        %2462 = vmatprep.subr.bf16.mxu0 0
        %2463 = vmatpush1.bf16.msra.mxu0 %v2303
        %2464 = vmatprep.subr.bf16.mxu0 0
        %2465 = vmatpush1.bf16.msra.mxu0 %v2304
        %2466 = vmatprep.subr.bf16.mxu0 0
        %2467 = vmatpush1.bf16.msra.mxu0 %v2305
        %2468 = vmatprep.subr.bf16.mxu0 0
        %2469 = vmatpush1.bf16.msra.mxu0 %v2306
        %2470 = vmatprep.subr.bf16.mxu0 0
        %2471 = vmatpush1.bf16.msra.mxu0 %v2307
        %2472 = vmatprep.subr.bf16.mxu0 0
        %2473 = vmatpush1.bf16.msra.mxu0 %v2308
        %2474 = vmatprep.subr.bf16.mxu0 0
        %2475 = vmatpush1.bf16.msra.mxu0 %v2309
        %2476 = vmatprep.subr.bf16.mxu0 0
        %2477 = vmatpush1.bf16.msra.mxu0 %v2310
        %2478 = vmatprep.mubr.bf16.mxu0 %v1991
        %2479 = vmatmul.mubr.bf16.gmra.mrb[0].mxu0 %v2028
        %v2480 = vpop.f32.mrb[0].mxu0
        %v2481 = vadd.f32 %v2400, %v2480
        %v2482 = vpop.f32.mrb[0].mxu0
        %v2483 = vpop.f32.mrb[0].mxu0
        %v2484 = vadd.f32 %v2403, %v2483
        %v2485 = vpop.f32.mrb[0].mxu0
        %2486 = vmatprep.mubr.bf16.mxu0 %v1994
        %2487 = vmatmul.mubr.bf16.gmra.mrb[0].mxu0 %v2032
        %v2488 = vpop.f32.mrb[0].mxu0
        %v2489 = vadd.f32 %v2408, %v2488
        %v2490 = vpop.f32.mrb[0].mxu0
        %v2491 = vpop.f32.mrb[0].mxu0
        %v2492 = vadd.f32 %v2411, %v2491
        %v2493 = vpop.f32.mrb[0].mxu0
        %2494 = vmatprep.mubr.bf16.mxu0 %v1997
        %2495 = vmatmul.mubr.bf16.gmra.mrb[0].mxu0 %v2036
        %v2496 = vpop.f32.mrb[0].mxu0
        %v2497 = vadd.f32 %v2416, %v2496
        %v2498 = vpop.f32.mrb[0].mxu0
        %v2499 = vpop.f32.mrb[0].mxu0
        %v2500 = vadd.f32 %v2419, %v2499
        %v2501 = vpop.f32.mrb[0].mxu0
        %2502 = vmatprep.mubr.bf16.mxu0 %v2000
        %2503 = vmatmul.mubr.bf16.gmra.mrb[0].mxu0 %v2040
        %v2504 = vpop.f32.mrb[0].mxu0
        %v2505 = vadd.f32 %v2424, %v2504
        %v2506 = vpop.f32.mrb[0].mxu0
        %v2507 = vpop.f32.mrb[0].mxu0
        %v2508 = vadd.f32 %v2427, %v2507
        %v2509 = vpop.f32.mrb[0].mxu0
        %2510 = vmatprep.mubr.bf16.mxu0 %v2051
        %2511 = vmatmul.mubr.bf16.gmra.mrb[0].mxu0 %v2044
        %v2512 = vpop.f32.mrb[0].mxu0
        %v2513 = vadd.f32 %v2432, %v2512
        %v2514 = vpop.f32.mrb[0].mxu0
        %v2515 = vpop.f32.mrb[0].mxu0
        %v2516 = vadd.f32 %v2435, %v2515
        %v2517 = vpop.f32.mrb[0].mxu0
        %2518 = vmatprep.mubr.bf16.mxu0 %v2054
        %2519 = vmatmul.mubr.bf16.gmra.mrb[0].mxu0 %v2048
        %v2520 = vpop.f32.mrb[0].mxu0
        %v2521 = vadd.f32 %v2440, %v2520
        %v2522 = vpop.f32.mrb[0].mxu0
        %v2523 = vpop.f32.mrb[0].mxu0
        %v2524 = vadd.f32 %v2443, %v2523
        %v2525 = vpop.f32.mrb[0].mxu0
        %2526 = vdwg.mxu0
        %2527 = vmatprep.subr.bf16.mxu0 0
        %2528 = vmatpush1.bf16.msra.mxu0 %v2311
        %2529 = vmatprep.subr.bf16.mxu0 0
        %2530 = vmatpush1.bf16.msra.mxu0 %v2312
        %2531 = vmatprep.subr.bf16.mxu0 0
        %2532 = vmatpush1.bf16.msra.mxu0 %v2313
        %2533 = vmatprep.subr.bf16.mxu0 0
        %2534 = vmatpush1.bf16.msra.mxu0 %v2314
        %2535 = vmatprep.subr.bf16.mxu0 0
        %2536 = vmatpush1.bf16.msra.mxu0 0
        %2537 = vmatprep.subr.bf16.mxu0 0
        %2538 = vmatpush1.bf16.msra.mxu0 0
        %2539 = vmatprep.subr.bf16.mxu0 0
        %2540 = vmatpush1.bf16.msra.mxu0 0
        %2541 = vmatprep.subr.bf16.mxu0 0
        %2542 = vmatpush1.bf16.msra.mxu0 0
        %2543 = vmatprep.subr.bf16.mxu0 0
        %2544 = vmatpush1.bf16.msra.mxu0 0
        %2545 = vmatprep.subr.bf16.mxu0 0
        %2546 = vmatpush1.bf16.msra.mxu0 0
        %2547 = vmatprep.subr.bf16.mxu0 0
        %2548 = vmatpush1.bf16.msra.mxu0 0
        %2549 = vmatprep.subr.bf16.mxu0 0
        %2550 = vmatpush1.bf16.msra.mxu0 0
        %2551 = vmatprep.subr.bf16.mxu0 0
        %2552 = vmatpush1.bf16.msra.mxu0 0
        %2553 = vmatprep.subr.bf16.mxu0 0
        %2554 = vmatpush1.bf16.msra.mxu0 0
        %2555 = vmatprep.subr.bf16.mxu0 0
        %2556 = vmatpush1.bf16.msra.mxu0 0
        %2557 = vmatprep.subr.bf16.mxu0 0
        %2558 = vmatpush1.bf16.msra.mxu0 0
        %2559 = vmatprep.mubr.bf16.mxu0 0
        %2560 = vmatmul.mubr.bf16.gmra.mrb[0].mxu0 %v2351
        %v2561 = vpop.f32.mrb[0].mxu0
        %v2562 = vadd.f32 %v2481, %v2561
        %v2563 = vpop.f32.mrb[0].mxu0
        %v2564 = vpop.f32.mrb[0].mxu0
        %v2565 = vadd.f32 %v2484, %v2564
        %v2566 = vpop.f32.mrb[0].mxu0
        %2567 = vmatprep.mubr.bf16.mxu0 0
        %2568 = vmatmul.mubr.bf16.gmra.mrb[0].mxu0 %v2353
        %v2569 = vpop.f32.mrb[0].mxu0
        %v2570 = vadd.f32 %v2489, %v2569
        %v2571 = vpop.f32.mrb[0].mxu0
        %v2572 = vpop.f32.mrb[0].mxu0
        %v2573 = vadd.f32 %v2492, %v2572
        %v2574 = vpop.f32.mrb[0].mxu0
        %2575 = vmatprep.mubr.bf16.mxu0 0
        %2576 = vmatmul.mubr.bf16.gmra.mrb[0].mxu0 %v2355
        %v2577 = vpop.f32.mrb[0].mxu0
        %v2578 = vadd.f32 %v2497, %v2577
        %v2579 = vpop.f32.mrb[0].mxu0
        %v2580 = vpop.f32.mrb[0].mxu0
        %v2581 = vadd.f32 %v2500, %v2580
        %v2582 = vpop.f32.mrb[0].mxu0
        %2583 = vmatprep.mubr.bf16.mxu0 0
        %2584 = vmatmul.mubr.bf16.gmra.mrb[0].mxu0 %v2357
        %v2585 = vpop.f32.mrb[0].mxu0
        %v2586 = vadd.f32 %v2505, %v2585
        %v2587 = vpop.f32.mrb[0].mxu0
        %v2588 = vpop.f32.mrb[0].mxu0
        %v2589 = vadd.f32 %v2508, %v2588
        %v2590 = vpop.f32.mrb[0].mxu0
        %2591 = vmatprep.mubr.bf16.mxu0 0
        %2592 = vmatmul.mubr.bf16.gmra.mrb[0].mxu0 %v2360
        %v2593 = vpop.f32.mrb[0].mxu0
        %v2594 = vadd.f32 %v2513, %v2593
        %v2595 = vpop.f32.mrb[0].mxu0
        %v2596 = vpop.f32.mrb[0].mxu0
        %v2597 = vadd.f32 %v2516, %v2596
        %v2598 = vpop.f32.mrb[0].mxu0
        %2599 = vmatprep.mubr.bf16.mxu0 0
        %2600 = vmatmul.mubr.bf16.gmra.mrb[0].mxu0 %v2363
        %v2601 = vpop.f32.mrb[0].mxu0
        %v2602 = vadd.f32 %v2521, %v2601
        %v2603 = vpop.f32.mrb[0].mxu0
        %v2604 = vpop.f32.mrb[0].mxu0
        %v2605 = vadd.f32 %v2524, %v2604
        %v2606 = vpop.f32.mrb[0].mxu0
        %2607 = vdwg.mxu0
        %vm2608 = vcmp.gt.f32.partialorder %v2562, 0.0
        %vm2609 = vcmp.gt.f32.partialorder %v2565, 0.0
        %vm2610 = vcmp.gt.f32.partialorder %v2570, 0.0
        %vm2611 = vcmp.gt.f32.partialorder %v2573, 0.0
        %vm2612 = vcmp.gt.f32.partialorder %v2578, 0.0
        %vm2613 = vcmp.gt.f32.partialorder %v2581, 0.0
        %vm2614 = vcmp.gt.f32.partialorder %v2586, 0.0
        %vm2615 = vcmp.gt.f32.partialorder %v2589, 0.0
        %vm2616 = vcmp.gt.f32.partialorder %v2594, 0.0
        %vm2617 = vcmp.gt.f32.partialorder %v2597, 0.0
        %vm2618 = vcmp.gt.f32.partialorder %v2602, 0.0
        %vm2619 = vcmp.gt.f32.partialorder %v2605, 0.0
        %v2620 = vmul.f32 %v2562, 0.02
        %v2621 = vmul.f32 %v2565, 0.02
        %v2622 = vmul.f32 %v2570, 0.02
        %v2623 = vmul.f32 %v2573, 0.02
        %v2624 = vmul.f32 %v2578, 0.02
        %v2625 = vmul.f32 %v2581, 0.02
        %v2626 = vmul.f32 %v2586, 0.02
        %v2627 = vmul.f32 %v2589, 0.02
        %v2628 = vmul.f32 %v2594, 0.02
        %v2629 = vmul.f32 %v2597, 0.02
        %v2630 = vmul.f32 %v2602, 0.02
        %v2631 = vmul.f32 %v2605, 0.02
        %v2632 = vsel %vm2608, %v2562, %v2620
        %v2633 = vsel %vm2609, %v2565, %v2621
        %v2634 = vsel %vm2610, %v2570, %v2622
        %v2635 = vsel %vm2611, %v2573, %v2623
        %v2636 = vsel %vm2612, %v2578, %v2624
        %v2637 = vsel %vm2613, %v2581, %v2625
        %v2638 = vsel %vm2614, %v2586, %v2626
        %v2639 = vsel %vm2615, %v2589, %v2627
        %v2640 = vsel %vm2616, %v2594, %v2628
        %v2641 = vsel %vm2617, %v2597, %v2629
        %v2642 = vsel %vm2618, %v2602, %v2630
        %v2643 = vsel %vm2619, %v2605, %v2631
        %v2644 = vpack.c.bf16 %v2633, %v2632
        %v2645 = vpack.c.bf16 %v2635, %v2634
        %v2646 = vpack.c.bf16 %v2637, %v2636
        %v2647 = vpack.c.bf16 %v2639, %v2638
        %v2648 = vpack.c.bf16 %v2641, %v2640
        %v2649 = vpack.c.bf16 %v2643, %v2642
        %v2651 = vshrl.u32 %v2644, 16
        %v2653 = vshll.u32 %v2644, 16
        %v2655 = vrot.slane %v2653, 1
        %v2656 = vor.u32 %v2651, %v2655
        %v2658 = vshll.u32 %v2645, 16
        %v2660 = vrot.slane %v2658, 1
        %v2661 = vsel %vm1013, %v2656, %v2660
        %v2662 = vshrl.u32 %v2645, 16
        %v2664 = vor.u32 %v2662, %v2660
        %v2666 = vshll.u32 %v2646, 16
        %v2668 = vrot.slane %v2666, 1
        %v2669 = vsel %vm1013, %v2664, %v2668
        %v2670 = vshrl.u32 %v2646, 16
        %v2672 = vor.u32 %v2670, %v2668
        %v2674 = vshll.u32 %v2647, 16
        %v2676 = vrot.slane %v2674, 1
        %v2677 = vsel %vm1013, %v2672, %v2676
        %v2685 = vrot.slane %v2644, 1
        %v2686 = vrot.slane %v2645, 1
        %v2687 = vsel %vm1920, %v2685, %v2686
        %v2688 = vrot.slane %v2646, 1
        %v2689 = vsel %vm1920, %v2686, %v2688
        %v2690 = vrot.slane %v2647, 1
        %v2691 = vsel %vm1920, %v2688, %v2690
        %v2695 = vshrl.u32 %v2647, 16
        %v2697 = vor.u32 %v2695, %v2676
        %v2699 = vshll.u32 %v2648, 16
        %v2701 = vrot.slane %v2699, 1
        %v2702 = vsel %vm1013, %v2697, %v2701
        %v2705 = vrot.slane %v2648, 1
        %v2706 = vsel %vm1920, %v2690, %v2705
        %v2708 = vshrl.u32 %v2648, 16
        %v2710 = vor.u32 %v2708, %v2701
        %v2712 = vshll.u32 %v2649, 16
        %v2714 = vrot.slane %v2712, 1
        %v2715 = vsel %vm1013, %v2710, %v2714
        %v2718 = vrot.slane %v2649, 1
        %v2719 = vsel %vm1920, %v2705, %v2718
        %v2721 = vld [vmem:[%s4] sm:$0xf]
        %v2722 = vld [vmem:[%s4 + $0x4] sm:$0xf]
        %v2723 = vld [vmem:[%s4 + $0x8] sm:$0xf]
        %v2724 = vld [vmem:[%s4 + $0xc] sm:$0xf]
        %v2725 = vld [vmem:[%s4 + $0x10] sm:$0xf]
        %v2726 = vld [vmem:[%s4 + $0x14] sm:$0xf]
        %v2727 = vld [vmem:[%s4 + $0x18] sm:$0xf]
        %v2728 = vld [vmem:[%s4 + $0x1c] sm:$0xf]
        %v2729 = vld [vmem:[%s4 + $0x20] sm:$0xf]
        %v2730 = vld [vmem:[%s4 + $0x24] sm:$0xf]
        %v2731 = vld [vmem:[%s4 + $0x28] sm:$0xf]
        %v2732 = vld [vmem:[%s4 + $0x2c] sm:$0xf]
        %v2733 = vld [vmem:[%s4 + $0x30] sm:$0xf]
        %v2734 = vld [vmem:[%s4 + $0x34] sm:$0xf]
        %v2735 = vld [vmem:[%s4 + $0x38] sm:$0xf]
        %v2736 = vld [vmem:[%s4 + $0x3c] sm:$0xf]
        %v2737 = vld [vmem:[%s4 + $0x40] sm:$0xf]
        %v2738 = vld [vmem:[%s4 + $0x44] sm:$0xf]
        %v2739 = vld [vmem:[%s4 + $0x48] sm:$0xf]
        %v2740 = vld [vmem:[%s4 + $0x4c] sm:$0xf]
        %v2741 = vld [vmem:[%s4 + $0x50] sm:$0xf]
        %v2742 = vld [vmem:[%s4 + $0x54] sm:$0xf]
        %v2743 = vld [vmem:[%s4 + $0x58] sm:$0xf]
        %v2744 = vld [vmem:[%s4 + $0x5c] sm:$0xf]
        %v2745 = vld [vmem:[%s4 + $0x60] sm:$0xf]
        %v2746 = vld [vmem:[%s4 + $0x64] sm:$0xf]
        %v2747 = vld [vmem:[%s4 + $0x68] sm:$0xf]
        %v2748 = vld [vmem:[%s4 + $0x6c] sm:$0xf]
        %v2749 = vld [vmem:[%s4 + $0x70] sm:$0xf]
        %v2750 = vld [vmem:[%s4 + $0x74] sm:$0xf]
        %v2751 = vld [vmem:[%s4 + $0x78] sm:$0xf]
        %v2752 = vld [vmem:[%s4 + $0x7c] sm:$0xf]
        %v2753 = vld [vmem:[%s4 + $0x80] sm:$0xf]
        %v2754 = vld [vmem:[%s4 + $0x84] sm:$0xf]
        %v2755 = vld [vmem:[%s4 + $0x88] sm:$0xf]
        %v2756 = vld [vmem:[%s4 + $0x8c] sm:$0xf]
        %v2757 = vld [vmem:[%s4 + $0x90] sm:$0xf]
        %v2758 = vld [vmem:[%s4 + $0x94] sm:$0xf]
        %v2759 = vld [vmem:[%s4 + $0x98] sm:$0xf]
        %v2760 = vld [vmem:[%s4 + $0x9c] sm:$0xf]
        %v2761 = vld [vmem:[%s4 + $0xa0] sm:$0xf]
        %v2762 = vld [vmem:[%s4 + $0xa4] sm:$0xf]
        %v2763 = vld [vmem:[%s4 + $0xa8] sm:$0xf]
        %v2764 = vld [vmem:[%s4 + $0xac] sm:$0xf]
        %v2765 = vld [vmem:[%s4 + $0xb0] sm:$0xf]
        %v2766 = vld [vmem:[%s4 + $0xb4] sm:$0xf]
        %v2767 = vld [vmem:[%s4 + $0xb8] sm:$0xf]
        %v2768 = vld [vmem:[%s4 + $0xbc] sm:$0xf]
        %v2769 = vld [vmem:[%s4 + $0xc0] sm:$0xf]
        %v2770 = vld [vmem:[%s4 + $0xc4] sm:$0xf]
        %v2771 = vld [vmem:[%s4 + $0xc8] sm:$0xf]
        %v2772 = vld [vmem:[%s4 + $0xcc] sm:$0xf]
        %v2773 = vld [vmem:[%s4 + $0xd0] sm:$0xf]
        %v2774 = vld [vmem:[%s4 + $0xd4] sm:$0xf]
        %v2775 = vld [vmem:[%s4 + $0xd8] sm:$0xf]
        %v2776 = vld [vmem:[%s4 + $0xdc] sm:$0xf]
        %v2777 = vld [vmem:[%s4 + $0xe0] sm:$0xf]
        %v2778 = vld [vmem:[%s4 + $0xe4] sm:$0xf]
        %v2779 = vld [vmem:[%s4 + $0xe8] sm:$0xf]
        %v2780 = vld [vmem:[%s4 + $0xec] sm:$0xf]
        %v2781 = vld [vmem:[%s4 + $0xf0] sm:$0xf]
        %v2782 = vld [vmem:[%s4 + $0xf4] sm:$0xf]
        %v2783 = vld [vmem:[%s4 + $0xf8] sm:$0xf]
        %v2784 = vld [vmem:[%s4 + $0xfc] sm:$0xf]
        %v2785 = vld [vmem:[%s4 + $0x100] sm:$0xf]
        %v2786 = vld [vmem:[%s4 + $0x104] sm:$0xf]
        %v2787 = vld [vmem:[%s4 + $0x108] sm:$0xf]
        %v2788 = vld [vmem:[%s4 + $0x10c] sm:$0xf]
        %v2789 = vld [vmem:[%s4 + $0x110] sm:$0xf]
        %v2790 = vld [vmem:[%s4 + $0x114] sm:$0xf]
        %v2791 = vld [vmem:[%s4 + $0x118] sm:$0xf]
        %v2792 = vld [vmem:[%s4 + $0x11c] sm:$0xf]
        %v2793 = vld [vmem:[%s4 + $0x120] sm:$0xf]
        %v2794 = vld [vmem:[%s4 + $0x124] sm:$0xf]
        %v2795 = vld [vmem:[%s4 + $0x128] sm:$0xf]
        %v2796 = vld [vmem:[%s4 + $0x12c] sm:$0xf]
        %v2797 = vld [vmem:[%s4 + $0x130] sm:$0xf]
        %v2798 = vld [vmem:[%s4 + $0x134] sm:$0xf]
        %v2799 = vld [vmem:[%s4 + $0x138] sm:$0xf]
        %v2800 = vld [vmem:[%s4 + $0x13c] sm:$0xf]
        %v2801 = vld [vmem:[%s4 + $0x140] sm:$0xf]
        %v2802 = vld [vmem:[%s4 + $0x144] sm:$0xf]
        %v2803 = vld [vmem:[%s4 + $0x148] sm:$0xf]
        %v2804 = vld [vmem:[%s4 + $0x14c] sm:$0xf]
        %v2805 = vld [vmem:[%s4 + $0x150] sm:$0xf]
        %v2806 = vld [vmem:[%s4 + $0x154] sm:$0xf]
        %v2807 = vld [vmem:[%s4 + $0x158] sm:$0xf]
        %v2808 = vld [vmem:[%s4 + $0x15c] sm:$0xf]
        %v2809 = vld [vmem:[%s4 + $0x160] sm:$0xf]
        %v2810 = vld [vmem:[%s4 + $0x164] sm:$0xf]
        %v2811 = vld [vmem:[%s4 + $0x168] sm:$0xf]
        %v2812 = vld [vmem:[%s4 + $0x16c] sm:$0xf]
        %v2813 = vld [vmem:[%s4 + $0x170] sm:$0xf]
        %v2814 = vld [vmem:[%s4 + $0x174] sm:$0xf]
        %v2815 = vld [vmem:[%s4 + $0x178] sm:$0xf]
        %v2816 = vld [vmem:[%s4 + $0x17c] sm:$0xf]
        %v2817 = vld [vmem:[%s4 + $0x180] sm:$0xf]
        %v2818 = vld [vmem:[%s4 + $0x184] sm:$0xf]
        %v2819 = vld [vmem:[%s4 + $0x188] sm:$0xf]
        %v2820 = vld [vmem:[%s4 + $0x18c] sm:$0xf]
        %v2821 = vld [vmem:[%s4 + $0x190] sm:$0xf]
        %v2822 = vld [vmem:[%s4 + $0x194] sm:$0xf]
        %v2823 = vld [vmem:[%s4 + $0x198] sm:$0xf]
        %v2824 = vld [vmem:[%s4 + $0x19c] sm:$0xf]
        %v2825 = vld [vmem:[%s4 + $0x1a0] sm:$0xf]
        %v2826 = vld [vmem:[%s4 + $0x1a4] sm:$0xf]
        %v2827 = vld [vmem:[%s4 + $0x1a8] sm:$0xf]
        %v2828 = vld [vmem:[%s4 + $0x1ac] sm:$0xf]
        %v2829 = vld [vmem:[%s4 + $0x1b0] sm:$0xf]
        %v2830 = vld [vmem:[%s4 + $0x1b4] sm:$0xf]
        %v2831 = vld [vmem:[%s4 + $0x1b8] sm:$0xf]
        %v2832 = vld [vmem:[%s4 + $0x1bc] sm:$0xf]
        %v2833 = vld [vmem:[%s4 + $0x1c0] sm:$0xf]
        %v2834 = vld [vmem:[%s4 + $0x1c4] sm:$0xf]
        %v2835 = vld [vmem:[%s4 + $0x1c8] sm:$0xf]
        %v2836 = vld [vmem:[%s4 + $0x1cc] sm:$0xf]
        %v2837 = vld [vmem:[%s4 + $0x1d0] sm:$0xf]
        %v2838 = vld [vmem:[%s4 + $0x1d4] sm:$0xf]
        %v2839 = vld [vmem:[%s4 + $0x1d8] sm:$0xf]
        %v2840 = vld [vmem:[%s4 + $0x1dc] sm:$0xf]
        %v2841 = vld [vmem:[%s4 + $0x1e0] sm:$0xf]
        %v2842 = vld [vmem:[%s4 + $0x1e4] sm:$0xf]
        %v2843 = vld [vmem:[%s4 + $0x1e8] sm:$0xf]
        %v2844 = vld [vmem:[%s4 + $0x1ec] sm:$0xf]
        %v2845 = vld [vmem:[%s4 + $0x1f0] sm:$0xf]
        %v2846 = vld [vmem:[%s4 + $0x1f4] sm:$0xf]
        %v2847 = vld [vmem:[%s4 + $0x1f8] sm:$0xf]
        %v2848 = vld [vmem:[%s4 + $0x1fc] sm:$0xf]
        %v2849 = vld [vmem:[%s4 + $0x200] sm:$0xf]
        %v2850 = vld [vmem:[%s4 + $0x204] sm:$0xf]
        %v2851 = vld [vmem:[%s4 + $0x208] sm:$0xf]
        %v2852 = vld [vmem:[%s4 + $0x20c] sm:$0xf]
        %v2853 = vld [vmem:[%s4 + $0x210] sm:$0xf]
        %v2854 = vld [vmem:[%s4 + $0x214] sm:$0xf]
        %v2855 = vld [vmem:[%s4 + $0x218] sm:$0xf]
        %v2856 = vld [vmem:[%s4 + $0x21c] sm:$0xf]
        %v2857 = vld [vmem:[%s4 + $0x220] sm:$0xf]
        %v2858 = vld [vmem:[%s4 + $0x224] sm:$0xf]
        %v2859 = vld [vmem:[%s4 + $0x228] sm:$0xf]
        %v2860 = vld [vmem:[%s4 + $0x22c] sm:$0xf]
        %v2861 = vld [vmem:[%s4 + $0x230] sm:$0xf]
        %v2862 = vld [vmem:[%s4 + $0x234] sm:$0xf]
        %v2863 = vld [vmem:[%s4 + $0x238] sm:$0xf]
        %v2864 = vld [vmem:[%s4 + $0x23c] sm:$0xf]
        %v2865 = vld [vmem:[%s9] sm:$0x1]
        %v2867 = vlaneseq
        %v2868 = vshrl.u32 %v2867, 7
        %v2869 = vsub.s32 0, %v2868
        %v2870 = vrot.slane %v2865, %v2869
        %v3016 = vunpack.c.l.b16 %v2721
        %v3017 = vunpack.c.l.b16 %v2722
        %v3018 = vunpack.c.l.b16 %v2723
        %v3019 = vunpack.c.l.b16 %v2724
        %v3020 = vunpack.c.l.b16 %v2725
        %v3021 = vunpack.c.l.b16 %v2726
        %v3022 = vunpack.c.l.b16 %v2727
        %v3023 = vunpack.c.l.b16 %v2728
        %v3024 = vunpack.c.l.b16 %v2729
        %v3025 = vunpack.c.l.b16 %v2730
        %v3026 = vunpack.c.l.b16 %v2731
        %v3027 = vunpack.c.l.b16 %v2732
        %v3028 = vunpack.c.l.b16 %v2733
        %v3029 = vunpack.c.l.b16 %v2734
        %v3030 = vunpack.c.l.b16 %v2735
        %v3031 = vunpack.c.l.b16 %v2736
        %v3032 = vunpack.c.l.b16 %v2737
        %v3033 = vunpack.c.l.b16 %v2738
        %v3034 = vunpack.c.l.b16 %v2739
        %v3035 = vunpack.c.l.b16 %v2740
        %v3036 = vunpack.c.l.b16 %v2741
        %v3037 = vunpack.c.l.b16 %v2742
        %v3038 = vunpack.c.l.b16 %v2743
        %v3039 = vunpack.c.l.b16 %v2744
        %v3040 = vunpack.c.l.b16 %v2745
        %v3041 = vunpack.c.l.b16 %v2746
        %v3042 = vunpack.c.l.b16 %v2747
        %v3043 = vunpack.c.l.b16 %v2748
        %v3044 = vunpack.c.l.b16 %v2749
        %v3045 = vunpack.c.l.b16 %v2750
        %v3046 = vunpack.c.l.b16 %v2751
        %v3047 = vunpack.c.l.b16 %v2752
        %v3048 = vunpack.c.l.b16 %v2753
        %v3049 = vunpack.c.l.b16 %v2754
        %v3050 = vunpack.c.l.b16 %v2755
        %v3051 = vunpack.c.l.b16 %v2756
        %v3052 = vunpack.c.l.b16 %v2757
        %v3053 = vunpack.c.l.b16 %v2758
        %v3054 = vunpack.c.l.b16 %v2759
        %v3055 = vunpack.c.l.b16 %v2760
        %v3056 = vunpack.c.l.b16 %v2761
        %v3057 = vunpack.c.l.b16 %v2762
        %v3058 = vunpack.c.l.b16 %v2763
        %v3059 = vunpack.c.l.b16 %v2764
        %v3060 = vunpack.c.l.b16 %v2765
        %v3061 = vunpack.c.l.b16 %v2766
        %v3062 = vunpack.c.l.b16 %v2767
        %v3063 = vunpack.c.l.b16 %v2768
        %v3064 = vunpack.c.l.b16 %v2769
        %v3065 = vunpack.c.l.b16 %v2770
        %v3066 = vunpack.c.l.b16 %v2771
        %v3067 = vunpack.c.l.b16 %v2772
        %v3068 = vunpack.c.l.b16 %v2773
        %v3069 = vunpack.c.l.b16 %v2774
        %v3070 = vunpack.c.l.b16 %v2775
        %v3071 = vunpack.c.l.b16 %v2776
        %v3072 = vunpack.c.l.b16 %v2777
        %v3073 = vunpack.c.l.b16 %v2778
        %v3074 = vunpack.c.l.b16 %v2779
        %v3075 = vunpack.c.l.b16 %v2780
        %v3076 = vunpack.c.l.b16 %v2781
        %v3077 = vunpack.c.l.b16 %v2782
        %v3078 = vunpack.c.l.b16 %v2783
        %v3079 = vunpack.c.l.b16 %v2784
        %v3080 = vunpack.c.l.b16 %v2785
        %v3081 = vunpack.c.l.b16 %v2786
        %v3082 = vunpack.c.l.b16 %v2787
        %v3083 = vunpack.c.l.b16 %v2788
        %v3084 = vunpack.c.l.b16 %v2789
        %v3085 = vunpack.c.l.b16 %v2790
        %v3086 = vunpack.c.l.b16 %v2791
        %v3087 = vunpack.c.l.b16 %v2792
        %v3088 = vunpack.c.l.b16 %v2793
        %v3089 = vunpack.c.l.b16 %v2794
        %v3090 = vunpack.c.l.b16 %v2795
        %v3091 = vunpack.c.l.b16 %v2796
        %v3092 = vunpack.c.l.b16 %v2797
        %v3093 = vunpack.c.l.b16 %v2798
        %v3094 = vunpack.c.l.b16 %v2799
        %v3095 = vunpack.c.l.b16 %v2800
        %v3096 = vunpack.c.l.b16 %v2801
        %v3097 = vunpack.c.l.b16 %v2802
        %v3098 = vunpack.c.l.b16 %v2803
        %v3099 = vunpack.c.l.b16 %v2804
        %v3100 = vunpack.c.l.b16 %v2805
        %v3101 = vunpack.c.l.b16 %v2806
        %v3102 = vunpack.c.l.b16 %v2807
        %v3103 = vunpack.c.l.b16 %v2808
        %v3104 = vunpack.c.l.b16 %v2809
        %v3105 = vunpack.c.l.b16 %v2810
        %v3106 = vunpack.c.l.b16 %v2811
        %v3107 = vunpack.c.l.b16 %v2812
        %v3108 = vunpack.c.l.b16 %v2813
        %v3109 = vunpack.c.l.b16 %v2814
        %v3110 = vunpack.c.l.b16 %v2815
        %v3111 = vunpack.c.l.b16 %v2816
        %v3112 = vunpack.c.l.b16 %v2817
        %v3113 = vunpack.c.l.b16 %v2818
        %v3114 = vunpack.c.l.b16 %v2819
        %v3115 = vunpack.c.l.b16 %v2820
        %v3116 = vunpack.c.l.b16 %v2821
        %v3117 = vunpack.c.l.b16 %v2822
        %v3118 = vunpack.c.l.b16 %v2823
        %v3119 = vunpack.c.l.b16 %v2824
        %v3120 = vunpack.c.l.b16 %v2825
        %v3121 = vunpack.c.l.b16 %v2826
        %v3122 = vunpack.c.l.b16 %v2827
        %v3123 = vunpack.c.l.b16 %v2828
        %v3124 = vunpack.c.l.b16 %v2829
        %v3125 = vunpack.c.l.b16 %v2830
        %v3126 = vunpack.c.l.b16 %v2831
        %v3127 = vunpack.c.l.b16 %v2832
        %v3128 = vunpack.c.l.b16 %v2833
        %v3129 = vunpack.c.l.b16 %v2834
        %v3130 = vunpack.c.l.b16 %v2835
        %v3131 = vunpack.c.l.b16 %v2836
        %v3132 = vunpack.c.l.b16 %v2837
        %v3133 = vunpack.c.l.b16 %v2838
        %v3134 = vunpack.c.l.b16 %v2839
        %v3135 = vunpack.c.l.b16 %v2840
        %v3136 = vunpack.c.l.b16 %v2841
        %v3137 = vunpack.c.l.b16 %v2842
        %v3138 = vunpack.c.l.b16 %v2843
        %v3139 = vunpack.c.l.b16 %v2844
        %v3140 = vunpack.c.l.b16 %v2845
        %v3141 = vunpack.c.l.b16 %v2846
        %v3142 = vunpack.c.l.b16 %v2847
        %v3143 = vunpack.c.l.b16 %v2848
        %v3144 = vunpack.c.l.b16 %v2849
        %v3145 = vunpack.c.l.b16 %v2850
        %v3146 = vunpack.c.l.b16 %v2851
        %v3147 = vunpack.c.l.b16 %v2852
        %v3148 = vunpack.c.l.b16 %v2853
        %v3149 = vunpack.c.l.b16 %v2854
        %v3150 = vunpack.c.l.b16 %v2855
        %v3151 = vunpack.c.l.b16 %v2856
        %v3152 = vunpack.c.l.b16 %v2857
        %v3153 = vunpack.c.l.b16 %v2858
        %v3154 = vunpack.c.l.b16 %v2859
        %v3155 = vunpack.c.l.b16 %v2860
        %v3156 = vunpack.c.l.b16 %v2861
        %v3157 = vunpack.c.l.b16 %v2862
        %v3158 = vunpack.c.l.b16 %v2863
        %v3159 = vunpack.c.l.b16 %v2864
        %v3160 = vpack.c.b16 %v3017, %v3016
        %v3161 = vpack.c.b16 %v3019, %v3018
        %v3162 = vpack.c.b16 %v3021, %v3020
        %v3163 = vpack.c.b16 %v3023, %v3022
        %v3164 = vpack.c.b16 %v3025, %v3024
        %v3165 = vpack.c.b16 %v3027, %v3026
        %v3166 = vpack.c.b16 %v3029, %v3028
        %v3167 = vpack.c.b16 %v3031, %v3030
        %v3168 = vpack.c.b16 %v3033, %v3032
        %v3169 = vpack.c.b16 %v3035, %v3034
        %v3170 = vpack.c.b16 %v3037, %v3036
        %v3171 = vpack.c.b16 %v3039, %v3038
        %v3172 = vpack.c.b16 %v3041, %v3040
        %v3173 = vpack.c.b16 %v3043, %v3042
        %v3174 = vpack.c.b16 %v3045, %v3044
        %v3175 = vpack.c.b16 %v3047, %v3046
        %v3176 = vpack.c.b16 %v3049, %v3048
        %v3177 = vpack.c.b16 %v3051, %v3050
        %v3178 = vpack.c.b16 %v3053, %v3052
        %v3179 = vpack.c.b16 %v3055, %v3054
        %v3180 = vpack.c.b16 %v3057, %v3056
        %v3181 = vpack.c.b16 %v3059, %v3058
        %v3182 = vpack.c.b16 %v3061, %v3060
        %v3183 = vpack.c.b16 %v3063, %v3062
        %v3184 = vpack.c.b16 %v3065, %v3064
        %v3185 = vpack.c.b16 %v3067, %v3066
        %v3186 = vpack.c.b16 %v3069, %v3068
        %v3187 = vpack.c.b16 %v3071, %v3070
        %v3188 = vpack.c.b16 %v3073, %v3072
        %v3189 = vpack.c.b16 %v3075, %v3074
        %v3190 = vpack.c.b16 %v3077, %v3076
        %v3191 = vpack.c.b16 %v3079, %v3078
        %v3192 = vpack.c.b16 %v3081, %v3080
        %v3193 = vpack.c.b16 %v3083, %v3082
        %v3194 = vpack.c.b16 %v3085, %v3084
        %v3195 = vpack.c.b16 %v3087, %v3086
        %v3196 = vpack.c.b16 %v3089, %v3088
        %v3197 = vpack.c.b16 %v3091, %v3090
        %v3198 = vpack.c.b16 %v3093, %v3092
        %v3199 = vpack.c.b16 %v3095, %v3094
        %v3200 = vpack.c.b16 %v3097, %v3096
        %v3201 = vpack.c.b16 %v3099, %v3098
        %v3202 = vpack.c.b16 %v3101, %v3100
        %v3203 = vpack.c.b16 %v3103, %v3102
        %v3204 = vpack.c.b16 %v3105, %v3104
        %v3205 = vpack.c.b16 %v3107, %v3106
        %v3206 = vpack.c.b16 %v3109, %v3108
        %v3207 = vpack.c.b16 %v3111, %v3110
        %v3208 = vpack.c.b16 %v3113, %v3112
        %v3209 = vpack.c.b16 %v3115, %v3114
        %v3210 = vpack.c.b16 %v3117, %v3116
        %v3211 = vpack.c.b16 %v3119, %v3118
        %v3212 = vpack.c.b16 %v3121, %v3120
        %v3213 = vpack.c.b16 %v3123, %v3122
        %v3214 = vpack.c.b16 %v3125, %v3124
        %v3215 = vpack.c.b16 %v3127, %v3126
        %v3216 = vpack.c.b16 %v3129, %v3128
        %v3217 = vpack.c.b16 %v3131, %v3130
        %v3218 = vpack.c.b16 %v3133, %v3132
        %v3219 = vpack.c.b16 %v3135, %v3134
        %v3220 = vpack.c.b16 %v3137, %v3136
        %v3221 = vpack.c.b16 %v3139, %v3138
        %v3222 = vpack.c.b16 %v3141, %v3140
        %v3223 = vpack.c.b16 %v3143, %v3142
        %v3224 = vpack.c.b16 %v3145, %v3144
        %v3225 = vpack.c.b16 %v3147, %v3146
        %v3226 = vpack.c.b16 %v3149, %v3148
        %v3227 = vpack.c.b16 %v3151, %v3150
        %v3228 = vpack.c.b16 %v3153, %v3152
        %v3229 = vpack.c.b16 %v3155, %v3154
        %v3230 = vpack.c.b16 %v3157, %v3156
        %v3231 = vpack.c.b16 %v3159, %v3158
        %3304 = vmatprep.subr.bf16.mxu0 0
        %3305 = vmatpush1.bf16.msra.mxu0 %v3160
        %3306 = vmatprep.subr.bf16.mxu0 0
        %3307 = vmatpush1.bf16.msra.mxu0 %v3161
        %3308 = vmatprep.subr.bf16.mxu0 0
        %3309 = vmatpush1.bf16.msra.mxu0 %v3162
        %3310 = vmatprep.subr.bf16.mxu0 0
        %3311 = vmatpush1.bf16.msra.mxu0 %v3163
        %3312 = vmatprep.subr.bf16.mxu0 0
        %3313 = vmatpush1.bf16.msra.mxu0 %v3164
        %3314 = vmatprep.subr.bf16.mxu0 0
        %3315 = vmatpush1.bf16.msra.mxu0 %v3165
        %3316 = vmatprep.subr.bf16.mxu0 0
        %3317 = vmatpush1.bf16.msra.mxu0 %v3166
        %3318 = vmatprep.subr.bf16.mxu0 0
        %3319 = vmatpush1.bf16.msra.mxu0 %v3167
        %3320 = vmatprep.subr.bf16.mxu0 0
        %3321 = vmatpush1.bf16.msra.mxu0 %v3168
        %3322 = vmatprep.subr.bf16.mxu0 0
        %3323 = vmatpush1.bf16.msra.mxu0 %v3169
        %3324 = vmatprep.subr.bf16.mxu0 0
        %3325 = vmatpush1.bf16.msra.mxu0 %v3170
        %3326 = vmatprep.subr.bf16.mxu0 0
        %3327 = vmatpush1.bf16.msra.mxu0 %v3171
        %3328 = vmatprep.subr.bf16.mxu0 0
        %3329 = vmatpush1.bf16.msra.mxu0 %v3172
        %3330 = vmatprep.subr.bf16.mxu0 0
        %3331 = vmatpush1.bf16.msra.mxu0 %v3173
        %3332 = vmatprep.subr.bf16.mxu0 0
        %3333 = vmatpush1.bf16.msra.mxu0 %v3174
        %3334 = vmatprep.subr.bf16.mxu0 0
        %3335 = vmatpush1.bf16.msra.mxu0 %v3175
        %3336 = vmatprep.mubr.bf16.mxu0 %v2661
        %3337 = vmatmul.mubr.bf16.gmra.mrb[0].mxu0 %v2644
        %v3338 = vpop.f32.mrb[0].mxu0
        %v3339 = vadd.f32 %v2870, %v3338
        %v3340 = vpop.f32.mrb[0].mxu0
        %v3341 = vpop.f32.mrb[0].mxu0
        %v3342 = vadd.f32 %v2870, %v3341
        %v3343 = vpop.f32.mrb[0].mxu0
        %3344 = vmatprep.mubr.bf16.mxu0 %v2669
        %3345 = vmatmul.mubr.bf16.gmra.mrb[0].mxu0 %v2645
        %v3346 = vpop.f32.mrb[0].mxu0
        %v3347 = vadd.f32 %v2870, %v3346
        %v3348 = vpop.f32.mrb[0].mxu0
        %v3349 = vpop.f32.mrb[0].mxu0
        %v3350 = vadd.f32 %v2870, %v3349
        %v3351 = vpop.f32.mrb[0].mxu0
        %3352 = vmatprep.mubr.bf16.mxu0 %v2677
        %3353 = vmatmul.mubr.bf16.gmra.mrb[0].mxu0 %v2646
        %v3354 = vpop.f32.mrb[0].mxu0
        %v3355 = vadd.f32 %v2870, %v3354
        %v3356 = vpop.f32.mrb[0].mxu0
        %v3357 = vpop.f32.mrb[0].mxu0
        %v3358 = vadd.f32 %v2870, %v3357
        %v3359 = vpop.f32.mrb[0].mxu0
        %3360 = vdwg.mxu0
        %3361 = vmatprep.subr.bf16.mxu0 0
        %3362 = vmatpush1.bf16.msra.mxu0 %v3176
        %3363 = vmatprep.subr.bf16.mxu0 0
        %3364 = vmatpush1.bf16.msra.mxu0 %v3177
        %3365 = vmatprep.subr.bf16.mxu0 0
        %3366 = vmatpush1.bf16.msra.mxu0 %v3178
        %3367 = vmatprep.subr.bf16.mxu0 0
        %3368 = vmatpush1.bf16.msra.mxu0 %v3179
        %3369 = vmatprep.subr.bf16.mxu0 0
        %3370 = vmatpush1.bf16.msra.mxu0 %v3180
        %3371 = vmatprep.subr.bf16.mxu0 0
        %3372 = vmatpush1.bf16.msra.mxu0 %v3181
        %3373 = vmatprep.subr.bf16.mxu0 0
        %3374 = vmatpush1.bf16.msra.mxu0 %v3182
        %3375 = vmatprep.subr.bf16.mxu0 0
        %3376 = vmatpush1.bf16.msra.mxu0 %v3183
        %3377 = vmatprep.subr.bf16.mxu0 0
        %3378 = vmatpush1.bf16.msra.mxu0 %v3184
        %3379 = vmatprep.subr.bf16.mxu0 0
        %3380 = vmatpush1.bf16.msra.mxu0 %v3185
        %3381 = vmatprep.subr.bf16.mxu0 0
        %3382 = vmatpush1.bf16.msra.mxu0 %v3186
        %3383 = vmatprep.subr.bf16.mxu0 0
        %3384 = vmatpush1.bf16.msra.mxu0 %v3187
        %3385 = vmatprep.subr.bf16.mxu0 0
        %3386 = vmatpush1.bf16.msra.mxu0 %v3188
        %3387 = vmatprep.subr.bf16.mxu0 0
        %3388 = vmatpush1.bf16.msra.mxu0 %v3189
        %3389 = vmatprep.subr.bf16.mxu0 0
        %3390 = vmatpush1.bf16.msra.mxu0 %v3190
        %3391 = vmatprep.subr.bf16.mxu0 0
        %3392 = vmatpush1.bf16.msra.mxu0 %v3191
        %3393 = vmatprep.mubr.bf16.mxu0 %v2645
        %3394 = vmatmul.mubr.bf16.gmra.mrb[0].mxu0 %v2687
        %v3395 = vpop.f32.mrb[0].mxu0
        %v3396 = vadd.f32 %v3339, %v3395
        %v3397 = vpop.f32.mrb[0].mxu0
        %v3398 = vpop.f32.mrb[0].mxu0
        %v3399 = vadd.f32 %v3342, %v3398
        %v3400 = vpop.f32.mrb[0].mxu0
        %3401 = vmatprep.mubr.bf16.mxu0 %v2646
        %3402 = vmatmul.mubr.bf16.gmra.mrb[0].mxu0 %v2689
        %v3403 = vpop.f32.mrb[0].mxu0
        %v3404 = vadd.f32 %v3347, %v3403
        %v3405 = vpop.f32.mrb[0].mxu0
        %v3406 = vpop.f32.mrb[0].mxu0
        %v3407 = vadd.f32 %v3350, %v3406
        %v3408 = vpop.f32.mrb[0].mxu0
        %3409 = vmatprep.mubr.bf16.mxu0 %v2647
        %3410 = vmatmul.mubr.bf16.gmra.mrb[0].mxu0 %v2691
        %v3411 = vpop.f32.mrb[0].mxu0
        %v3412 = vadd.f32 %v3355, %v3411
        %v3413 = vpop.f32.mrb[0].mxu0
        %v3414 = vpop.f32.mrb[0].mxu0
        %v3415 = vadd.f32 %v3358, %v3414
        %v3416 = vpop.f32.mrb[0].mxu0
        %3417 = vdwg.mxu0
        %3418 = vmatprep.subr.bf16.mxu0 0
        %3419 = vmatpush1.bf16.msra.mxu0 %v3192
        %3420 = vmatprep.subr.bf16.mxu0 0
        %3421 = vmatpush1.bf16.msra.mxu0 %v3193
        %3422 = vmatprep.subr.bf16.mxu0 0
        %3423 = vmatpush1.bf16.msra.mxu0 %v3194
        %3424 = vmatprep.subr.bf16.mxu0 0
        %3425 = vmatpush1.bf16.msra.mxu0 %v3195
        %3426 = vmatprep.subr.bf16.mxu0 0
        %3427 = vmatpush1.bf16.msra.mxu0 %v3196
        %3428 = vmatprep.subr.bf16.mxu0 0
        %3429 = vmatpush1.bf16.msra.mxu0 %v3197
        %3430 = vmatprep.subr.bf16.mxu0 0
        %3431 = vmatpush1.bf16.msra.mxu0 %v3198
        %3432 = vmatprep.subr.bf16.mxu0 0
        %3433 = vmatpush1.bf16.msra.mxu0 %v3199
        %3434 = vmatprep.subr.bf16.mxu0 0
        %3435 = vmatpush1.bf16.msra.mxu0 %v3200
        %3436 = vmatprep.subr.bf16.mxu0 0
        %3437 = vmatpush1.bf16.msra.mxu0 %v3201
        %3438 = vmatprep.subr.bf16.mxu0 0
        %3439 = vmatpush1.bf16.msra.mxu0 %v3202
        %3440 = vmatprep.subr.bf16.mxu0 0
        %3441 = vmatpush1.bf16.msra.mxu0 %v3203
        %3442 = vmatprep.subr.bf16.mxu0 0
        %3443 = vmatpush1.bf16.msra.mxu0 %v3204
        %3444 = vmatprep.subr.bf16.mxu0 0
        %3445 = vmatpush1.bf16.msra.mxu0 %v3205
        %3446 = vmatprep.subr.bf16.mxu0 0
        %3447 = vmatpush1.bf16.msra.mxu0 %v3206
        %3448 = vmatprep.subr.bf16.mxu0 0
        %3449 = vmatpush1.bf16.msra.mxu0 %v3207
        %3450 = vmatprep.mubr.bf16.mxu0 %v2689
        %3451 = vmatmul.mubr.bf16.gmra.mrb[0].mxu0 %v2669
        %v3452 = vpop.f32.mrb[0].mxu0
        %v3453 = vadd.f32 %v3396, %v3452
        %v3454 = vpop.f32.mrb[0].mxu0
        %v3455 = vpop.f32.mrb[0].mxu0
        %v3456 = vadd.f32 %v3399, %v3455
        %v3457 = vpop.f32.mrb[0].mxu0
        %3458 = vmatprep.mubr.bf16.mxu0 %v2691
        %3459 = vmatmul.mubr.bf16.gmra.mrb[0].mxu0 %v2677
        %v3460 = vpop.f32.mrb[0].mxu0
        %v3461 = vadd.f32 %v3404, %v3460
        %v3462 = vpop.f32.mrb[0].mxu0
        %v3463 = vpop.f32.mrb[0].mxu0
        %v3464 = vadd.f32 %v3407, %v3463
        %v3465 = vpop.f32.mrb[0].mxu0
        %3466 = vmatprep.mubr.bf16.mxu0 %v2706
        %3467 = vmatmul.mubr.bf16.gmra.mrb[0].mxu0 %v2702
        %v3468 = vpop.f32.mrb[0].mxu0
        %v3469 = vadd.f32 %v3412, %v3468
        %v3470 = vpop.f32.mrb[0].mxu0
        %v3471 = vpop.f32.mrb[0].mxu0
        %v3472 = vadd.f32 %v3415, %v3471
        %v3473 = vpop.f32.mrb[0].mxu0
        %3474 = vdwg.mxu0
        %3475 = vmatprep.subr.bf16.mxu0 0
        %3476 = vmatpush1.bf16.msra.mxu0 %v3208
        %3477 = vmatprep.subr.bf16.mxu0 0
        %3478 = vmatpush1.bf16.msra.mxu0 %v3209
        %3479 = vmatprep.subr.bf16.mxu0 0
        %3480 = vmatpush1.bf16.msra.mxu0 %v3210
        %3481 = vmatprep.subr.bf16.mxu0 0
        %3482 = vmatpush1.bf16.msra.mxu0 %v3211
        %3483 = vmatprep.subr.bf16.mxu0 0
        %3484 = vmatpush1.bf16.msra.mxu0 %v3212
        %3485 = vmatprep.subr.bf16.mxu0 0
        %3486 = vmatpush1.bf16.msra.mxu0 %v3213
        %3487 = vmatprep.subr.bf16.mxu0 0
        %3488 = vmatpush1.bf16.msra.mxu0 %v3214
        %3489 = vmatprep.subr.bf16.mxu0 0
        %3490 = vmatpush1.bf16.msra.mxu0 %v3215
        %3491 = vmatprep.subr.bf16.mxu0 0
        %3492 = vmatpush1.bf16.msra.mxu0 %v3216
        %3493 = vmatprep.subr.bf16.mxu0 0
        %3494 = vmatpush1.bf16.msra.mxu0 %v3217
        %3495 = vmatprep.subr.bf16.mxu0 0
        %3496 = vmatpush1.bf16.msra.mxu0 %v3218
        %3497 = vmatprep.subr.bf16.mxu0 0
        %3498 = vmatpush1.bf16.msra.mxu0 %v3219
        %3499 = vmatprep.subr.bf16.mxu0 0
        %3500 = vmatpush1.bf16.msra.mxu0 %v3220
        %3501 = vmatprep.subr.bf16.mxu0 0
        %3502 = vmatpush1.bf16.msra.mxu0 %v3221
        %3503 = vmatprep.subr.bf16.mxu0 0
        %3504 = vmatpush1.bf16.msra.mxu0 %v3222
        %3505 = vmatprep.subr.bf16.mxu0 0
        %3506 = vmatpush1.bf16.msra.mxu0 %v3223
        %3507 = vmatprep.mubr.bf16.mxu0 %v2677
        %3508 = vmatmul.mubr.bf16.gmra.mrb[0].mxu0 %v2646
        %v3509 = vpop.f32.mrb[0].mxu0
        %v3510 = vadd.f32 %v3453, %v3509
        %v3511 = vpop.f32.mrb[0].mxu0
        %v3512 = vpop.f32.mrb[0].mxu0
        %v3513 = vadd.f32 %v3456, %v3512
        %v3514 = vpop.f32.mrb[0].mxu0
        %3515 = vmatprep.mubr.bf16.mxu0 %v2702
        %3516 = vmatmul.mubr.bf16.gmra.mrb[0].mxu0 %v2647
        %v3517 = vpop.f32.mrb[0].mxu0
        %v3518 = vadd.f32 %v3461, %v3517
        %v3519 = vpop.f32.mrb[0].mxu0
        %v3520 = vpop.f32.mrb[0].mxu0
        %v3521 = vadd.f32 %v3464, %v3520
        %v3522 = vpop.f32.mrb[0].mxu0
        %3523 = vmatprep.mubr.bf16.mxu0 %v2715
        %3524 = vmatmul.mubr.bf16.gmra.mrb[0].mxu0 %v2648
        %v3525 = vpop.f32.mrb[0].mxu0
        %v3526 = vadd.f32 %v3469, %v3525
        %v3527 = vpop.f32.mrb[0].mxu0
        %v3528 = vpop.f32.mrb[0].mxu0
        %v3529 = vadd.f32 %v3472, %v3528
        %v3530 = vpop.f32.mrb[0].mxu0
        %3531 = vdwg.mxu0
        %3532 = vmatprep.subr.bf16.mxu0 0
        %3533 = vmatpush1.bf16.msra.mxu0 %v3224
        %3534 = vmatprep.subr.bf16.mxu0 0
        %3535 = vmatpush1.bf16.msra.mxu0 %v3225
        %3536 = vmatprep.subr.bf16.mxu0 0
        %3537 = vmatpush1.bf16.msra.mxu0 %v3226
        %3538 = vmatprep.subr.bf16.mxu0 0
        %3539 = vmatpush1.bf16.msra.mxu0 %v3227
        %3540 = vmatprep.subr.bf16.mxu0 0
        %3541 = vmatpush1.bf16.msra.mxu0 %v3228
        %3542 = vmatprep.subr.bf16.mxu0 0
        %3543 = vmatpush1.bf16.msra.mxu0 %v3229
        %3544 = vmatprep.subr.bf16.mxu0 0
        %3545 = vmatpush1.bf16.msra.mxu0 %v3230
        %3546 = vmatprep.subr.bf16.mxu0 0
        %3547 = vmatpush1.bf16.msra.mxu0 %v3231
        %3548 = vmatprep.subr.bf16.mxu0 0
        %3549 = vmatpush1.bf16.msra.mxu0 0
        %3550 = vmatprep.subr.bf16.mxu0 0
        %3551 = vmatpush1.bf16.msra.mxu0 0
        %3552 = vmatprep.subr.bf16.mxu0 0
        %3553 = vmatpush1.bf16.msra.mxu0 0
        %3554 = vmatprep.subr.bf16.mxu0 0
        %3555 = vmatpush1.bf16.msra.mxu0 0
        %3556 = vmatprep.subr.bf16.mxu0 0
        %3557 = vmatpush1.bf16.msra.mxu0 0
        %3558 = vmatprep.subr.bf16.mxu0 0
        %3559 = vmatpush1.bf16.msra.mxu0 0
        %3560 = vmatprep.subr.bf16.mxu0 0
        %3561 = vmatpush1.bf16.msra.mxu0 0
        %3562 = vmatprep.subr.bf16.mxu0 0
        %3563 = vmatpush1.bf16.msra.mxu0 0
        %3564 = vmatprep.mubr.bf16.mxu0 0
        %3565 = vmatmul.mubr.bf16.gmra.mrb[0].mxu0 %v2691
        %v3566 = vpop.f32.mrb[0].mxu0
        %v3567 = vadd.f32 %v3510, %v3566
        %v3568 = vpop.f32.mrb[0].mxu0
        %v3569 = vpop.f32.mrb[0].mxu0
        %v3570 = vadd.f32 %v3513, %v3569
        %v3571 = vpop.f32.mrb[0].mxu0
        %3572 = vmatprep.mubr.bf16.mxu0 0
        %3573 = vmatmul.mubr.bf16.gmra.mrb[0].mxu0 %v2706
        %v3574 = vpop.f32.mrb[0].mxu0
        %v3575 = vadd.f32 %v3518, %v3574
        %v3576 = vpop.f32.mrb[0].mxu0
        %v3577 = vpop.f32.mrb[0].mxu0
        %v3578 = vadd.f32 %v3521, %v3577
        %v3579 = vpop.f32.mrb[0].mxu0
        %3580 = vmatprep.mubr.bf16.mxu0 0
        %3581 = vmatmul.mubr.bf16.gmra.mrb[0].mxu0 %v2719
        %v3582 = vpop.f32.mrb[0].mxu0
        %v3583 = vadd.f32 %v3526, %v3582
        %v3584 = vpop.f32.mrb[0].mxu0
        %v3585 = vpop.f32.mrb[0].mxu0
        %v3586 = vadd.f32 %v3529, %v3585
        %v3587 = vpop.f32.mrb[0].mxu0
        %3588 = vdwg.mxu0
        %vm3589 = vcmp.gt.f32.partialorder %v3567, 0.0
        %vm3590 = vcmp.gt.f32.partialorder %v3570, 0.0
        %vm3591 = vcmp.gt.f32.partialorder %v3575, 0.0
        %vm3592 = vcmp.gt.f32.partialorder %v3578, 0.0
        %vm3593 = vcmp.gt.f32.partialorder %v3583, 0.0
        %vm3594 = vcmp.gt.f32.partialorder %v3586, 0.0
        %v3595 = vmul.f32 %v3567, 0.02
        %v3596 = vmul.f32 %v3570, 0.02
        %v3597 = vmul.f32 %v3575, 0.02
        %v3598 = vmul.f32 %v3578, 0.02
        %v3599 = vmul.f32 %v3583, 0.02
        %v3600 = vmul.f32 %v3586, 0.02
        %v3601 = vsel %vm3589, %v3567, %v3595
        %v3602 = vsel %vm3590, %v3570, %v3596
        %v3603 = vsel %vm3591, %v3575, %v3597
        %v3604 = vsel %vm3592, %v3578, %v3598
        %v3605 = vsel %vm3593, %v3583, %v3599
        %v3606 = vsel %vm3594, %v3586, %v3600
        %v3607 = vpack.c.bf16 %v3602, %v3601
        %v3608 = vpack.c.bf16 %v3604, %v3603
        %v3609 = vpack.c.bf16 %v3606, %v3605
        %v3611 = vshrl.u32 %v3607, 16
        %v3615 = vrot.slane %v3607, 1
        %v3618 = vshrl.u32 %v3608, 16
        %v3622 = vrot.slane %v3608, 1
        %v3625 = vshrl.u32 %v3609, 16
        %v3629 = vrot.slane %v3609, 1
        %v3631 = vld [vmem:[%s5] sm:$0xf]
        %v3632 = vld [vmem:[%s5 + $0x4] sm:$0xf]
        %v3633 = vld [vmem:[%s5 + $0x8] sm:$0xf]
        %v3634 = vld [vmem:[%s5 + $0xc] sm:$0xf]
        %v3635 = vld [vmem:[%s5 + $0x10] sm:$0xf]
        %v3636 = vld [vmem:[%s5 + $0x14] sm:$0xf]
        %v3637 = vld [vmem:[%s5 + $0x18] sm:$0xf]
        %v3638 = vld [vmem:[%s5 + $0x1c] sm:$0xf]
        %v3639 = vld [vmem:[%s5 + $0x20] sm:$0xf]
        %v3640 = vld [vmem:[%s5 + $0x24] sm:$0xf]
        %v3641 = vld [vmem:[%s5 + $0x28] sm:$0xf]
        %v3642 = vld [vmem:[%s5 + $0x2c] sm:$0xf]
        %v3643 = vld [vmem:[%s5 + $0x30] sm:$0xf]
        %v3644 = vld [vmem:[%s5 + $0x34] sm:$0xf]
        %v3645 = vld [vmem:[%s5 + $0x38] sm:$0xf]
        %v3646 = vld [vmem:[%s5 + $0x3c] sm:$0xf]
        %v3647 = vld [vmem:[%s5 + $0x40] sm:$0xf]
        %v3648 = vld [vmem:[%s5 + $0x44] sm:$0xf]
        %v3649 = vld [vmem:[%s5 + $0x48] sm:$0xf]
        %v3650 = vld [vmem:[%s5 + $0x4c] sm:$0xf]
        %v3651 = vld [vmem:[%s5 + $0x50] sm:$0xf]
        %v3652 = vld [vmem:[%s5 + $0x54] sm:$0xf]
        %v3653 = vld [vmem:[%s5 + $0x58] sm:$0xf]
        %v3654 = vld [vmem:[%s5 + $0x5c] sm:$0xf]
        %v3655 = vld [vmem:[%s5 + $0x60] sm:$0xf]
        %v3656 = vld [vmem:[%s5 + $0x64] sm:$0xf]
        %v3657 = vld [vmem:[%s5 + $0x68] sm:$0xf]
        %v3658 = vld [vmem:[%s5 + $0x6c] sm:$0xf]
        %v3659 = vld [vmem:[%s5 + $0x70] sm:$0xf]
        %v3660 = vld [vmem:[%s5 + $0x74] sm:$0xf]
        %v3661 = vld [vmem:[%s5 + $0x78] sm:$0xf]
        %v3662 = vld [vmem:[%s5 + $0x7c] sm:$0xf]
        %v3663 = vld [vmem:[%s5 + $0x80] sm:$0xf]
        %v3664 = vld [vmem:[%s5 + $0x84] sm:$0xf]
        %v3665 = vld [vmem:[%s5 + $0x88] sm:$0xf]
        %v3666 = vld [vmem:[%s5 + $0x8c] sm:$0xf]
        %v3667 = vld [vmem:[%s5 + $0x90] sm:$0xf]
        %v3668 = vld [vmem:[%s5 + $0x94] sm:$0xf]
        %v3669 = vld [vmem:[%s5 + $0x98] sm:$0xf]
        %v3670 = vld [vmem:[%s5 + $0x9c] sm:$0xf]
        %v3671 = vld [vmem:[%s5 + $0xa0] sm:$0xf]
        %v3672 = vld [vmem:[%s5 + $0xa4] sm:$0xf]
        %v3673 = vld [vmem:[%s5 + $0xa8] sm:$0xf]
        %v3674 = vld [vmem:[%s5 + $0xac] sm:$0xf]
        %v3675 = vld [vmem:[%s5 + $0xb0] sm:$0xf]
        %v3676 = vld [vmem:[%s5 + $0xb4] sm:$0xf]
        %v3677 = vld [vmem:[%s5 + $0xb8] sm:$0xf]
        %v3678 = vld [vmem:[%s5 + $0xbc] sm:$0xf]
        %v3679 = vld [vmem:[%s5 + $0xc0] sm:$0xf]
        %v3680 = vld [vmem:[%s5 + $0xc4] sm:$0xf]
        %v3681 = vld [vmem:[%s5 + $0xc8] sm:$0xf]
        %v3682 = vld [vmem:[%s5 + $0xcc] sm:$0xf]
        %v3683 = vld [vmem:[%s5 + $0xd0] sm:$0xf]
        %v3684 = vld [vmem:[%s5 + $0xd4] sm:$0xf]
        %v3685 = vld [vmem:[%s5 + $0xd8] sm:$0xf]
        %v3686 = vld [vmem:[%s5 + $0xdc] sm:$0xf]
        %v3687 = vld [vmem:[%s5 + $0xe0] sm:$0xf]
        %v3688 = vld [vmem:[%s5 + $0xe4] sm:$0xf]
        %v3689 = vld [vmem:[%s5 + $0xe8] sm:$0xf]
        %v3690 = vld [vmem:[%s5 + $0xec] sm:$0xf]
        %v3691 = vld [vmem:[%s5 + $0xf0] sm:$0xf]
        %v3692 = vld [vmem:[%s5 + $0xf4] sm:$0xf]
        %v3693 = vld [vmem:[%s5 + $0xf8] sm:$0xf]
        %v3694 = vld [vmem:[%s5 + $0xfc] sm:$0xf]
        %v3695 = vld [vmem:[%s5 + $0x100] sm:$0xf]
        %v3696 = vld [vmem:[%s5 + $0x104] sm:$0xf]
        %v3697 = vld [vmem:[%s5 + $0x108] sm:$0xf]
        %v3698 = vld [vmem:[%s5 + $0x10c] sm:$0xf]
        %v3699 = vld [vmem:[%s5 + $0x110] sm:$0xf]
        %v3700 = vld [vmem:[%s5 + $0x114] sm:$0xf]
        %v3701 = vld [vmem:[%s5 + $0x118] sm:$0xf]
        %v3702 = vld [vmem:[%s5 + $0x11c] sm:$0xf]
        %v3703 = vld [vmem:[%s5 + $0x120] sm:$0xf]
        %v3704 = vld [vmem:[%s5 + $0x124] sm:$0xf]
        %v3705 = vld [vmem:[%s5 + $0x128] sm:$0xf]
        %v3706 = vld [vmem:[%s5 + $0x12c] sm:$0xf]
        %v3707 = vld [vmem:[%s5 + $0x130] sm:$0xf]
        %v3708 = vld [vmem:[%s5 + $0x134] sm:$0xf]
        %v3709 = vld [vmem:[%s5 + $0x138] sm:$0xf]
        %v3710 = vld [vmem:[%s5 + $0x13c] sm:$0xf]
        %v3711 = vld [vmem:[%s5 + $0x140] sm:$0xf]
        %v3712 = vld [vmem:[%s5 + $0x144] sm:$0xf]
        %v3713 = vld [vmem:[%s5 + $0x148] sm:$0xf]
        %v3714 = vld [vmem:[%s5 + $0x14c] sm:$0xf]
        %v3715 = vld [vmem:[%s5 + $0x150] sm:$0xf]
        %v3716 = vld [vmem:[%s5 + $0x154] sm:$0xf]
        %v3717 = vld [vmem:[%s5 + $0x158] sm:$0xf]
        %v3718 = vld [vmem:[%s5 + $0x15c] sm:$0xf]
        %v3719 = vld [vmem:[%s5 + $0x160] sm:$0xf]
        %v3720 = vld [vmem:[%s5 + $0x164] sm:$0xf]
        %v3721 = vld [vmem:[%s5 + $0x168] sm:$0xf]
        %v3722 = vld [vmem:[%s5 + $0x16c] sm:$0xf]
        %v3723 = vld [vmem:[%s5 + $0x170] sm:$0xf]
        %v3724 = vld [vmem:[%s5 + $0x174] sm:$0xf]
        %v3725 = vld [vmem:[%s5 + $0x178] sm:$0xf]
        %v3726 = vld [vmem:[%s5 + $0x17c] sm:$0xf]
        %v3727 = vld [vmem:[%s5 + $0x180] sm:$0xf]
        %v3728 = vld [vmem:[%s5 + $0x184] sm:$0xf]
        %v3729 = vld [vmem:[%s5 + $0x188] sm:$0xf]
        %v3730 = vld [vmem:[%s5 + $0x18c] sm:$0xf]
        %v3731 = vld [vmem:[%s5 + $0x190] sm:$0xf]
        %v3732 = vld [vmem:[%s5 + $0x194] sm:$0xf]
        %v3733 = vld [vmem:[%s5 + $0x198] sm:$0xf]
        %v3734 = vld [vmem:[%s5 + $0x19c] sm:$0xf]
        %v3735 = vld [vmem:[%s5 + $0x1a0] sm:$0xf]
        %v3736 = vld [vmem:[%s5 + $0x1a4] sm:$0xf]
        %v3737 = vld [vmem:[%s5 + $0x1a8] sm:$0xf]
        %v3738 = vld [vmem:[%s5 + $0x1ac] sm:$0xf]
        %v3739 = vld [vmem:[%s5 + $0x1b0] sm:$0xf]
        %v3740 = vld [vmem:[%s5 + $0x1b4] sm:$0xf]
        %v3741 = vld [vmem:[%s5 + $0x1b8] sm:$0xf]
        %v3742 = vld [vmem:[%s5 + $0x1bc] sm:$0xf]
        %v3743 = vld [vmem:[%s5 + $0x1c0] sm:$0xf]
        %v3744 = vld [vmem:[%s5 + $0x1c4] sm:$0xf]
        %v3745 = vld [vmem:[%s5 + $0x1c8] sm:$0xf]
        %v3746 = vld [vmem:[%s5 + $0x1cc] sm:$0xf]
        %v3747 = vld [vmem:[%s5 + $0x1d0] sm:$0xf]
        %v3748 = vld [vmem:[%s5 + $0x1d4] sm:$0xf]
        %v3749 = vld [vmem:[%s5 + $0x1d8] sm:$0xf]
        %v3750 = vld [vmem:[%s5 + $0x1dc] sm:$0xf]
        %v3751 = vld [vmem:[%s5 + $0x1e0] sm:$0xf]
        %v3752 = vld [vmem:[%s5 + $0x1e4] sm:$0xf]
        %v3753 = vld [vmem:[%s5 + $0x1e8] sm:$0xf]
        %v3754 = vld [vmem:[%s5 + $0x1ec] sm:$0xf]
        %v3755 = vld [vmem:[%s5 + $0x1f0] sm:$0xf]
        %v3756 = vld [vmem:[%s5 + $0x1f4] sm:$0xf]
        %v3757 = vld [vmem:[%s5 + $0x1f8] sm:$0xf]
        %v3758 = vld [vmem:[%s5 + $0x1fc] sm:$0xf]
        %v3759 = vld [vmem:[%s5 + $0x200] sm:$0xf]
        %v3760 = vld [vmem:[%s5 + $0x204] sm:$0xf]
        %v3761 = vld [vmem:[%s5 + $0x208] sm:$0xf]
        %v3762 = vld [vmem:[%s5 + $0x20c] sm:$0xf]
        %v3763 = vld [vmem:[%s5 + $0x210] sm:$0xf]
        %v3764 = vld [vmem:[%s5 + $0x214] sm:$0xf]
        %v3765 = vld [vmem:[%s5 + $0x218] sm:$0xf]
        %v3766 = vld [vmem:[%s5 + $0x21c] sm:$0xf]
        %v3767 = vld [vmem:[%s5 + $0x220] sm:$0xf]
        %v3768 = vld [vmem:[%s5 + $0x224] sm:$0xf]
        %v3769 = vld [vmem:[%s5 + $0x228] sm:$0xf]
        %v3770 = vld [vmem:[%s5 + $0x22c] sm:$0xf]
        %v3771 = vld [vmem:[%s5 + $0x230] sm:$0xf]
        %v3772 = vld [vmem:[%s5 + $0x234] sm:$0xf]
        %v3773 = vld [vmem:[%s5 + $0x238] sm:$0xf]
        %v3774 = vld [vmem:[%s5 + $0x23c] sm:$0xf]
        %v3775 = vld [vmem:[%s10] sm:$0x1]
        %v3920 = vunpack.c.l.b16 %v3631
        %v3921 = vunpack.c.l.b16 %v3632
        %v3922 = vunpack.c.l.b16 %v3633
        %v3923 = vunpack.c.l.b16 %v3634
        %v3924 = vunpack.c.l.b16 %v3635
        %v3925 = vunpack.c.l.b16 %v3636
        %v3926 = vunpack.c.l.b16 %v3637
        %v3927 = vunpack.c.l.b16 %v3638
        %v3928 = vunpack.c.l.b16 %v3639
        %v3929 = vunpack.c.l.b16 %v3640
        %v3930 = vunpack.c.l.b16 %v3641
        %v3931 = vunpack.c.l.b16 %v3642
        %v3932 = vunpack.c.l.b16 %v3643
        %v3933 = vunpack.c.l.b16 %v3644
        %v3934 = vunpack.c.l.b16 %v3645
        %v3935 = vunpack.c.l.b16 %v3646
        %v3936 = vunpack.c.l.b16 %v3647
        %v3937 = vunpack.c.l.b16 %v3648
        %v3938 = vunpack.c.l.b16 %v3649
        %v3939 = vunpack.c.l.b16 %v3650
        %v3940 = vunpack.c.l.b16 %v3651
        %v3941 = vunpack.c.l.b16 %v3652
        %v3942 = vunpack.c.l.b16 %v3653
        %v3943 = vunpack.c.l.b16 %v3654
        %v3944 = vunpack.c.l.b16 %v3655
        %v3945 = vunpack.c.l.b16 %v3656
        %v3946 = vunpack.c.l.b16 %v3657
        %v3947 = vunpack.c.l.b16 %v3658
        %v3948 = vunpack.c.l.b16 %v3659
        %v3949 = vunpack.c.l.b16 %v3660
        %v3950 = vunpack.c.l.b16 %v3661
        %v3951 = vunpack.c.l.b16 %v3662
        %v3952 = vunpack.c.l.b16 %v3663
        %v3953 = vunpack.c.l.b16 %v3664
        %v3954 = vunpack.c.l.b16 %v3665
        %v3955 = vunpack.c.l.b16 %v3666
        %v3956 = vunpack.c.l.b16 %v3667
        %v3957 = vunpack.c.l.b16 %v3668
        %v3958 = vunpack.c.l.b16 %v3669
        %v3959 = vunpack.c.l.b16 %v3670
        %v3960 = vunpack.c.l.b16 %v3671
        %v3961 = vunpack.c.l.b16 %v3672
        %v3962 = vunpack.c.l.b16 %v3673
        %v3963 = vunpack.c.l.b16 %v3674
        %v3964 = vunpack.c.l.b16 %v3675
        %v3965 = vunpack.c.l.b16 %v3676
        %v3966 = vunpack.c.l.b16 %v3677
        %v3967 = vunpack.c.l.b16 %v3678
        %v3968 = vunpack.c.l.b16 %v3679
        %v3969 = vunpack.c.l.b16 %v3680
        %v3970 = vunpack.c.l.b16 %v3681
        %v3971 = vunpack.c.l.b16 %v3682
        %v3972 = vunpack.c.l.b16 %v3683
        %v3973 = vunpack.c.l.b16 %v3684
        %v3974 = vunpack.c.l.b16 %v3685
        %v3975 = vunpack.c.l.b16 %v3686
        %v3976 = vunpack.c.l.b16 %v3687
        %v3977 = vunpack.c.l.b16 %v3688
        %v3978 = vunpack.c.l.b16 %v3689
        %v3979 = vunpack.c.l.b16 %v3690
        %v3980 = vunpack.c.l.b16 %v3691
        %v3981 = vunpack.c.l.b16 %v3692
        %v3982 = vunpack.c.l.b16 %v3693
        %v3983 = vunpack.c.l.b16 %v3694
        %v3984 = vunpack.c.l.b16 %v3695
        %v3985 = vunpack.c.l.b16 %v3696
        %v3986 = vunpack.c.l.b16 %v3697
        %v3987 = vunpack.c.l.b16 %v3698
        %v3988 = vunpack.c.l.b16 %v3699
        %v3989 = vunpack.c.l.b16 %v3700
        %v3990 = vunpack.c.l.b16 %v3701
        %v3991 = vunpack.c.l.b16 %v3702
        %v3992 = vunpack.c.l.b16 %v3703
        %v3993 = vunpack.c.l.b16 %v3704
        %v3994 = vunpack.c.l.b16 %v3705
        %v3995 = vunpack.c.l.b16 %v3706
        %v3996 = vunpack.c.l.b16 %v3707
        %v3997 = vunpack.c.l.b16 %v3708
        %v3998 = vunpack.c.l.b16 %v3709
        %v3999 = vunpack.c.l.b16 %v3710
        %v4000 = vunpack.c.l.b16 %v3711
        %v4001 = vunpack.c.l.b16 %v3712
        %v4002 = vunpack.c.l.b16 %v3713
        %v4003 = vunpack.c.l.b16 %v3714
        %v4004 = vunpack.c.l.b16 %v3715
        %v4005 = vunpack.c.l.b16 %v3716
        %v4006 = vunpack.c.l.b16 %v3717
        %v4007 = vunpack.c.l.b16 %v3718
        %v4008 = vunpack.c.l.b16 %v3719
        %v4009 = vunpack.c.l.b16 %v3720
        %v4010 = vunpack.c.l.b16 %v3721
        %v4011 = vunpack.c.l.b16 %v3722
        %v4012 = vunpack.c.l.b16 %v3723
        %v4013 = vunpack.c.l.b16 %v3724
        %v4014 = vunpack.c.l.b16 %v3725
        %v4015 = vunpack.c.l.b16 %v3726
        %v4016 = vunpack.c.l.b16 %v3727
        %v4017 = vunpack.c.l.b16 %v3728
        %v4018 = vunpack.c.l.b16 %v3729
        %v4019 = vunpack.c.l.b16 %v3730
        %v4020 = vunpack.c.l.b16 %v3731
        %v4021 = vunpack.c.l.b16 %v3732
        %v4022 = vunpack.c.l.b16 %v3733
        %v4023 = vunpack.c.l.b16 %v3734
        %v4024 = vunpack.c.l.b16 %v3735
        %v4025 = vunpack.c.l.b16 %v3736
        %v4026 = vunpack.c.l.b16 %v3737
        %v4027 = vunpack.c.l.b16 %v3738
        %v4028 = vunpack.c.l.b16 %v3739
        %v4029 = vunpack.c.l.b16 %v3740
        %v4030 = vunpack.c.l.b16 %v3741
        %v4031 = vunpack.c.l.b16 %v3742
        %v4032 = vunpack.c.l.b16 %v3743
        %v4033 = vunpack.c.l.b16 %v3744
        %v4034 = vunpack.c.l.b16 %v3745
        %v4035 = vunpack.c.l.b16 %v3746
        %v4036 = vunpack.c.l.b16 %v3747
        %v4037 = vunpack.c.l.b16 %v3748
        %v4038 = vunpack.c.l.b16 %v3749
        %v4039 = vunpack.c.l.b16 %v3750
        %v4040 = vunpack.c.l.b16 %v3751
        %v4041 = vunpack.c.l.b16 %v3752
        %v4042 = vunpack.c.l.b16 %v3753
        %v4043 = vunpack.c.l.b16 %v3754
        %v4044 = vunpack.c.l.b16 %v3755
        %v4045 = vunpack.c.l.b16 %v3756
        %v4046 = vunpack.c.l.b16 %v3757
        %v4047 = vunpack.c.l.b16 %v3758
        %v4048 = vunpack.c.l.b16 %v3759
        %v4049 = vunpack.c.l.b16 %v3760
        %v4050 = vunpack.c.l.b16 %v3761
        %v4051 = vunpack.c.l.b16 %v3762
        %v4052 = vunpack.c.l.b16 %v3763
        %v4053 = vunpack.c.l.b16 %v3764
        %v4054 = vunpack.c.l.b16 %v3765
        %v4055 = vunpack.c.l.b16 %v3766
        %v4056 = vunpack.c.l.b16 %v3767
        %v4057 = vunpack.c.l.b16 %v3768
        %v4058 = vunpack.c.l.b16 %v3769
        %v4059 = vunpack.c.l.b16 %v3770
        %v4060 = vunpack.c.l.b16 %v3771
        %v4061 = vunpack.c.l.b16 %v3772
        %v4062 = vunpack.c.l.b16 %v3773
        %v4063 = vunpack.c.l.b16 %v3774
        %v4064 = vpack.c.b16 %v3921, %v3920
        %v4065 = vpack.c.b16 %v3923, %v3922
        %v4066 = vpack.c.b16 %v3925, %v3924
        %v4067 = vpack.c.b16 %v3927, %v3926
        %v4068 = vpack.c.b16 %v3929, %v3928
        %v4069 = vpack.c.b16 %v3931, %v3930
        %v4070 = vpack.c.b16 %v3933, %v3932
        %v4071 = vpack.c.b16 %v3935, %v3934
        %v4072 = vpack.c.b16 %v3937, %v3936
        %v4073 = vpack.c.b16 %v3939, %v3938
        %v4074 = vpack.c.b16 %v3941, %v3940
        %v4075 = vpack.c.b16 %v3943, %v3942
        %v4076 = vpack.c.b16 %v3945, %v3944
        %v4077 = vpack.c.b16 %v3947, %v3946
        %v4078 = vpack.c.b16 %v3949, %v3948
        %v4079 = vpack.c.b16 %v3951, %v3950
        %v4080 = vpack.c.b16 %v3953, %v3952
        %v4081 = vpack.c.b16 %v3955, %v3954
        %v4082 = vpack.c.b16 %v3957, %v3956
        %v4083 = vpack.c.b16 %v3959, %v3958
        %v4084 = vpack.c.b16 %v3961, %v3960
        %v4085 = vpack.c.b16 %v3963, %v3962
        %v4086 = vpack.c.b16 %v3965, %v3964
        %v4087 = vpack.c.b16 %v3967, %v3966
        %v4088 = vpack.c.b16 %v3969, %v3968
        %v4089 = vpack.c.b16 %v3971, %v3970
        %v4090 = vpack.c.b16 %v3973, %v3972
        %v4091 = vpack.c.b16 %v3975, %v3974
        %v4092 = vpack.c.b16 %v3977, %v3976
        %v4093 = vpack.c.b16 %v3979, %v3978
        %v4094 = vpack.c.b16 %v3981, %v3980
        %v4095 = vpack.c.b16 %v3983, %v3982
        %v4096 = vpack.c.b16 %v3985, %v3984
        %v4097 = vpack.c.b16 %v3987, %v3986
        %v4098 = vpack.c.b16 %v3989, %v3988
        %v4099 = vpack.c.b16 %v3991, %v3990
        %v4100 = vpack.c.b16 %v3993, %v3992
        %v4101 = vpack.c.b16 %v3995, %v3994
        %v4102 = vpack.c.b16 %v3997, %v3996
        %v4103 = vpack.c.b16 %v3999, %v3998
        %v4104 = vpack.c.b16 %v4001, %v4000
        %v4105 = vpack.c.b16 %v4003, %v4002
        %v4106 = vpack.c.b16 %v4005, %v4004
        %v4107 = vpack.c.b16 %v4007, %v4006
        %v4108 = vpack.c.b16 %v4009, %v4008
        %v4109 = vpack.c.b16 %v4011, %v4010
        %v4110 = vpack.c.b16 %v4013, %v4012
        %v4111 = vpack.c.b16 %v4015, %v4014
        %v4112 = vpack.c.b16 %v4017, %v4016
        %v4113 = vpack.c.b16 %v4019, %v4018
        %v4114 = vpack.c.b16 %v4021, %v4020
        %v4115 = vpack.c.b16 %v4023, %v4022
        %v4116 = vpack.c.b16 %v4025, %v4024
        %v4117 = vpack.c.b16 %v4027, %v4026
        %v4118 = vpack.c.b16 %v4029, %v4028
        %v4119 = vpack.c.b16 %v4031, %v4030
        %v4120 = vpack.c.b16 %v4033, %v4032
        %v4121 = vpack.c.b16 %v4035, %v4034
        %v4122 = vpack.c.b16 %v4037, %v4036
        %v4123 = vpack.c.b16 %v4039, %v4038
        %v4124 = vpack.c.b16 %v4041, %v4040
        %v4125 = vpack.c.b16 %v4043, %v4042
        %v4126 = vpack.c.b16 %v4045, %v4044
        %v4127 = vpack.c.b16 %v4047, %v4046
        %v4128 = vpack.c.b16 %v4049, %v4048
        %v4129 = vpack.c.b16 %v4051, %v4050
        %v4130 = vpack.c.b16 %v4053, %v4052
        %v4131 = vpack.c.b16 %v4055, %v4054
        %v4132 = vpack.c.b16 %v4057, %v4056
        %v4133 = vpack.c.b16 %v4059, %v4058
        %v4134 = vpack.c.b16 %v4061, %v4060
        %v4135 = vpack.c.b16 %v4063, %v4062
        %4208 = vmatprep.subr.bf16.mxu0 0
        %4209 = vmatpush1.bf16.msra.mxu0 %v4064
        %4210 = vmatprep.subr.bf16.mxu0 0
        %4211 = vmatpush1.bf16.msra.mxu0 %v4065
        %4212 = vmatprep.subr.bf16.mxu0 0
        %4213 = vmatpush1.bf16.msra.mxu0 %v4066
        %4214 = vmatprep.subr.bf16.mxu0 0
        %4215 = vmatpush1.bf16.msra.mxu0 %v4067
        %4216 = vmatprep.subr.bf16.mxu0 0
        %4217 = vmatpush1.bf16.msra.mxu0 %v4068
        %4218 = vmatprep.subr.bf16.mxu0 0
        %4219 = vmatpush1.bf16.msra.mxu0 %v4069
        %4220 = vmatprep.subr.bf16.mxu0 0
        %4221 = vmatpush1.bf16.msra.mxu0 %v4070
        %4222 = vmatprep.subr.bf16.mxu0 0
        %4223 = vmatpush1.bf16.msra.mxu0 %v4071
        %4224 = vmatprep.subr.bf16.mxu0 0
        %4225 = vmatpush1.bf16.msra.mxu0 %v4072
        %4226 = vmatprep.subr.bf16.mxu0 0
        %4227 = vmatpush1.bf16.msra.mxu0 %v4073
        %4228 = vmatprep.subr.bf16.mxu0 0
        %4229 = vmatpush1.bf16.msra.mxu0 %v4074
        %4230 = vmatprep.subr.bf16.mxu0 0
        %4231 = vmatpush1.bf16.msra.mxu0 %v4075
        %4232 = vmatprep.subr.bf16.mxu0 0
        %4233 = vmatpush1.bf16.msra.mxu0 %v4076
        %4234 = vmatprep.subr.bf16.mxu0 0
        %4235 = vmatpush1.bf16.msra.mxu0 %v4077
        %4236 = vmatprep.subr.bf16.mxu0 0
        %4237 = vmatpush1.bf16.msra.mxu0 %v4078
        %4238 = vmatprep.subr.bf16.mxu0 0
        %4239 = vmatpush1.bf16.msra.mxu0 %v4079
        %4240 = vmatprep.mubr.bf16.mxu0 %v3611
        %4241 = vmatmul.mubr.bf16.gmra.mrb[0].mxu0 %v3607
        %v4242 = vpop.f32.mrb[0].mxu0
        %v4243 = vadd.f32 %v3775, %v4242
        %v4244 = vpop.f32.mrb[0].mxu0
        %v4245 = vpop.f32.mrb[0].mxu0
        %v4246 = vpop.f32.mrb[0].mxu0
        %4247 = vdwg.mxu0
        %4248 = vmatprep.subr.bf16.mxu0 0
        %4249 = vmatpush1.bf16.msra.mxu0 %v4080
        %4250 = vmatprep.subr.bf16.mxu0 0
        %4251 = vmatpush1.bf16.msra.mxu0 %v4081
        %4252 = vmatprep.subr.bf16.mxu0 0
        %4253 = vmatpush1.bf16.msra.mxu0 %v4082
        %4254 = vmatprep.subr.bf16.mxu0 0
        %4255 = vmatpush1.bf16.msra.mxu0 %v4083
        %4256 = vmatprep.subr.bf16.mxu0 0
        %4257 = vmatpush1.bf16.msra.mxu0 %v4084
        %4258 = vmatprep.subr.bf16.mxu0 0
        %4259 = vmatpush1.bf16.msra.mxu0 %v4085
        %4260 = vmatprep.subr.bf16.mxu0 0
        %4261 = vmatpush1.bf16.msra.mxu0 %v4086
        %4262 = vmatprep.subr.bf16.mxu0 0
        %4263 = vmatpush1.bf16.msra.mxu0 %v4087
        %4264 = vmatprep.subr.bf16.mxu0 0
        %4265 = vmatpush1.bf16.msra.mxu0 %v4088
        %4266 = vmatprep.subr.bf16.mxu0 0
        %4267 = vmatpush1.bf16.msra.mxu0 %v4089
        %4268 = vmatprep.subr.bf16.mxu0 0
        %4269 = vmatpush1.bf16.msra.mxu0 %v4090
        %4270 = vmatprep.subr.bf16.mxu0 0
        %4271 = vmatpush1.bf16.msra.mxu0 %v4091
        %4272 = vmatprep.subr.bf16.mxu0 0
        %4273 = vmatpush1.bf16.msra.mxu0 %v4092
        %4274 = vmatprep.subr.bf16.mxu0 0
        %4275 = vmatpush1.bf16.msra.mxu0 %v4093
        %4276 = vmatprep.subr.bf16.mxu0 0
        %4277 = vmatpush1.bf16.msra.mxu0 %v4094
        %4278 = vmatprep.subr.bf16.mxu0 0
        %4279 = vmatpush1.bf16.msra.mxu0 %v4095
        %4280 = vmatprep.mubr.bf16.mxu0 %v3608
        %4281 = vmatmul.mubr.bf16.gmra.mrb[0].mxu0 %v3615
        %v4282 = vpop.f32.mrb[0].mxu0
        %v4283 = vadd.f32 %v4243, %v4282
        %v4284 = vpop.f32.mrb[0].mxu0
        %v4285 = vpop.f32.mrb[0].mxu0
        %v4286 = vpop.f32.mrb[0].mxu0
        %4287 = vdwg.mxu0
        %4288 = vmatprep.subr.bf16.mxu0 0
        %4289 = vmatpush1.bf16.msra.mxu0 %v4096
        %4290 = vmatprep.subr.bf16.mxu0 0
        %4291 = vmatpush1.bf16.msra.mxu0 %v4097
        %4292 = vmatprep.subr.bf16.mxu0 0
        %4293 = vmatpush1.bf16.msra.mxu0 %v4098
        %4294 = vmatprep.subr.bf16.mxu0 0
        %4295 = vmatpush1.bf16.msra.mxu0 %v4099
        %4296 = vmatprep.subr.bf16.mxu0 0
        %4297 = vmatpush1.bf16.msra.mxu0 %v4100
        %4298 = vmatprep.subr.bf16.mxu0 0
        %4299 = vmatpush1.bf16.msra.mxu0 %v4101
        %4300 = vmatprep.subr.bf16.mxu0 0
        %4301 = vmatpush1.bf16.msra.mxu0 %v4102
        %4302 = vmatprep.subr.bf16.mxu0 0
        %4303 = vmatpush1.bf16.msra.mxu0 %v4103
        %4304 = vmatprep.subr.bf16.mxu0 0
        %4305 = vmatpush1.bf16.msra.mxu0 %v4104
        %4306 = vmatprep.subr.bf16.mxu0 0
        %4307 = vmatpush1.bf16.msra.mxu0 %v4105
        %4308 = vmatprep.subr.bf16.mxu0 0
        %4309 = vmatpush1.bf16.msra.mxu0 %v4106
        %4310 = vmatprep.subr.bf16.mxu0 0
        %4311 = vmatpush1.bf16.msra.mxu0 %v4107
        %4312 = vmatprep.subr.bf16.mxu0 0
        %4313 = vmatpush1.bf16.msra.mxu0 %v4108
        %4314 = vmatprep.subr.bf16.mxu0 0
        %4315 = vmatpush1.bf16.msra.mxu0 %v4109
        %4316 = vmatprep.subr.bf16.mxu0 0
        %4317 = vmatpush1.bf16.msra.mxu0 %v4110
        %4318 = vmatprep.subr.bf16.mxu0 0
        %4319 = vmatpush1.bf16.msra.mxu0 %v4111
        %4320 = vmatprep.mubr.bf16.mxu0 %v3622
        %4321 = vmatmul.mubr.bf16.gmra.mrb[0].mxu0 %v3618
        %v4322 = vpop.f32.mrb[0].mxu0
        %v4323 = vadd.f32 %v4283, %v4322
        %v4324 = vpop.f32.mrb[0].mxu0
        %v4325 = vpop.f32.mrb[0].mxu0
        %v4326 = vpop.f32.mrb[0].mxu0
        %4327 = vdwg.mxu0
        %4328 = vmatprep.subr.bf16.mxu0 0
        %4329 = vmatpush1.bf16.msra.mxu0 %v4112
        %4330 = vmatprep.subr.bf16.mxu0 0
        %4331 = vmatpush1.bf16.msra.mxu0 %v4113
        %4332 = vmatprep.subr.bf16.mxu0 0
        %4333 = vmatpush1.bf16.msra.mxu0 %v4114
        %4334 = vmatprep.subr.bf16.mxu0 0
        %4335 = vmatpush1.bf16.msra.mxu0 %v4115
        %4336 = vmatprep.subr.bf16.mxu0 0
        %4337 = vmatpush1.bf16.msra.mxu0 %v4116
        %4338 = vmatprep.subr.bf16.mxu0 0
        %4339 = vmatpush1.bf16.msra.mxu0 %v4117
        %4340 = vmatprep.subr.bf16.mxu0 0
        %4341 = vmatpush1.bf16.msra.mxu0 %v4118
        %4342 = vmatprep.subr.bf16.mxu0 0
        %4343 = vmatpush1.bf16.msra.mxu0 %v4119
        %4344 = vmatprep.subr.bf16.mxu0 0
        %4345 = vmatpush1.bf16.msra.mxu0 %v4120
        %4346 = vmatprep.subr.bf16.mxu0 0
        %4347 = vmatpush1.bf16.msra.mxu0 %v4121
        %4348 = vmatprep.subr.bf16.mxu0 0
        %4349 = vmatpush1.bf16.msra.mxu0 %v4122
        %4350 = vmatprep.subr.bf16.mxu0 0
        %4351 = vmatpush1.bf16.msra.mxu0 %v4123
        %4352 = vmatprep.subr.bf16.mxu0 0
        %4353 = vmatpush1.bf16.msra.mxu0 %v4124
        %4354 = vmatprep.subr.bf16.mxu0 0
        %4355 = vmatpush1.bf16.msra.mxu0 %v4125
        %4356 = vmatprep.subr.bf16.mxu0 0
        %4357 = vmatpush1.bf16.msra.mxu0 %v4126
        %4358 = vmatprep.subr.bf16.mxu0 0
        %4359 = vmatpush1.bf16.msra.mxu0 %v4127
        %4360 = vmatprep.mubr.bf16.mxu0 %v3625
        %4361 = vmatmul.mubr.bf16.gmra.mrb[0].mxu0 %v3609
        %v4362 = vpop.f32.mrb[0].mxu0
        %v4363 = vadd.f32 %v4323, %v4362
        %v4364 = vpop.f32.mrb[0].mxu0
        %v4365 = vpop.f32.mrb[0].mxu0
        %v4366 = vpop.f32.mrb[0].mxu0
        %4367 = vdwg.mxu0
        %4368 = vmatprep.subr.bf16.mxu0 0
        %4369 = vmatpush1.bf16.msra.mxu0 %v4128
        %4370 = vmatprep.subr.bf16.mxu0 0
        %4371 = vmatpush1.bf16.msra.mxu0 %v4129
        %4372 = vmatprep.subr.bf16.mxu0 0
        %4373 = vmatpush1.bf16.msra.mxu0 %v4130
        %4374 = vmatprep.subr.bf16.mxu0 0
        %4375 = vmatpush1.bf16.msra.mxu0 %v4131
        %4376 = vmatprep.subr.bf16.mxu0 0
        %4377 = vmatpush1.bf16.msra.mxu0 %v4132
        %4378 = vmatprep.subr.bf16.mxu0 0
        %4379 = vmatpush1.bf16.msra.mxu0 %v4133
        %4380 = vmatprep.subr.bf16.mxu0 0
        %4381 = vmatpush1.bf16.msra.mxu0 %v4134
        %4382 = vmatprep.subr.bf16.mxu0 0
        %4383 = vmatpush1.bf16.msra.mxu0 %v4135
        %4384 = vmatprep.subr.bf16.mxu0 0
        %4385 = vmatpush1.bf16.msra.mxu0 0
        %4386 = vmatprep.subr.bf16.mxu0 0
        %4387 = vmatpush1.bf16.msra.mxu0 0
        %4388 = vmatprep.subr.bf16.mxu0 0
        %4389 = vmatpush1.bf16.msra.mxu0 0
        %4390 = vmatprep.subr.bf16.mxu0 0
        %4391 = vmatpush1.bf16.msra.mxu0 0
        %4392 = vmatprep.subr.bf16.mxu0 0
        %4393 = vmatpush1.bf16.msra.mxu0 0
        %4394 = vmatprep.subr.bf16.mxu0 0
        %4395 = vmatpush1.bf16.msra.mxu0 0
        %4396 = vmatprep.subr.bf16.mxu0 0
        %4397 = vmatpush1.bf16.msra.mxu0 0
        %4398 = vmatprep.subr.bf16.mxu0 0
        %4399 = vmatpush1.bf16.msra.mxu0 0
        %4400 = vmatprep.mubr.bf16.mxu0 0
        %4401 = vmatmul.mubr.bf16.gmra.mrb[0].mxu0 %v3629
        %v4402 = vpop.f32.mrb[0].mxu0
        %v4403 = vadd.f32 %v4363, %v4402
        %v4404 = vpop.f32.mrb[0].mxu0
        %v4405 = vpop.f32.mrb[0].mxu0
        %v4406 = vpop.f32.mrb[0].mxu0
        %4407 = vdwg.mxu0
        %vm4408 = vcmp.gt.f32.partialorder %v4403, 0.0
        %v4409 = vmul.f32 %v4403, 0.02
        %v4410 = vsel %vm4408, %v4403, %v4409
        %4411 = vst [vmem:[%s378] sm:$0x1] %v4410
        %s4412 = sand.u32 %s269, 1
        %s4413 = scalar_lea.sflag [#allocation3], %s4412
        %s4414 = sand.u32 %s269, 1
        %s4415 = scalar_lea.vmem [#allocation2], %s4414
        // Predicated region
        $region65: #{discriminator_x_forward.1} parent=63 // pred_check
          %p4416 = pneg %p279
        $region66: #{discriminator_x_forward.1} parent=63 // pred_check_branch
          %4418 = sbr.rel (%p4416) target = $region68
        $region67: #{discriminator_x_forward.1} parent=63 // pred_region
          %s4420 = ssub.s32 16, 16
          %4421 = vsyncadd %s4413, %s4420
          %s4422 = smul.addr %s25, 16
          %s4423 = scalar_lea.hbm %s11, %s4422
          %s4425 = sshll.u32 %s4415, 4
          %s4426 = int_to_ptr.vmem [resolvable:$true] %s4425
          %4428 = dma.vmem_to_hbm [thread:$0]  %s4426, 16, %s4423, %s4413
        $region68: #{discriminator_x_forward.1} parent=63 // pred_fallthru
          _
      $region64: #{discriminator_x_forward.1} parent=5 // pred_fallthru
        _
      %p4429 = scmp.le.s32.totalorder 2, %s20
      // Predicated region
      $region69: #{discriminator_x_forward.1} parent=5 // pred_check
        %p4430 = pneg %p4429
      $region70: #{discriminator_x_forward.1} parent=5 // pred_check_branch
        %4432 = sbr.rel (%p4430) target = $region72
      $region71: #{discriminator_x_forward.1} parent=5 // pred_region
        %s4433 = ssub.s32 %s20, 2
        // Predicated region
        $region73: #{discriminator_x_forward.1} parent=71 // pred_check
          %p4434 = pneg %p285
        $region74: #{discriminator_x_forward.1} parent=71 // pred_check_branch
          %4436 = sbr.rel (%p4434) target = $region76
        $region75: #{discriminator_x_forward.1} parent=71 // pred_region
          %s4437 = sand.u32 %s270, 1
          %s4438 = scalar_lea.sflag [#allocation3], %s4437
          %s4439 = sand.u32 %s270, 1
          %s4440 = scalar_lea.vmem [#allocation2], %s4439
          %4441 = dma.done %s4438, 16
        $region76: #{discriminator_x_forward.1} parent=71 // pred_fallthru
          _
      $region72: #{discriminator_x_forward.1} parent=5 // pred_fallthru
        _
    $region6: #{discriminator_x_forward.1} parent=1 // loop_footer
      %s24 = sadd.s32 1, %s20
    $region7: #{discriminator_x_forward.1} parent=1 // loop_footer_branch
      %19 = sbr.rel target = $region3
    $region8: #{discriminator_x_forward.1} parent=1 // loop_exit
      _
    %4442 = vsyncpa [#allocation3], 1
    %s4443 = scalar_lea.sflag [#allocation3], 1
    %4444 = vsyncpa %s4443, 1

</llo_original>
